<compile_context>
chip_gen: v7x
topology: tpu7x:2x2x1
jax: 0.10.0
libtpu: 0.0.40
codegen_flags: <defaults>
</compile_context>

<pallas_src>
import jax
import jax.numpy as jnp
from jax.experimental import pallas as pl
from jax.experimental.pallas import tpu as pltpu

# ----------------- scaled-down configuration (real-model analogue in comments) -----------------
BSZ = 2
SEQ = 8
HIDDEN = 32                     # bert hidden_size (768)
N_HEADS = 4                     # 12
HEAD_DIM = HIDDEN // N_HEADS    # 64
NUM_LABELS = 3
PROMPT_LEN = 4                  # args.prompt_len (12)
NUM_AUX = 3                     # number of aux images per sample
NUM_HS = 13                     # CLIP hidden_states (embeddings + 12 layers)
VIS_SEQ = 4                     # CLIP visual tokens (50)
VIS_HID = 16                    # CLIP hidden (768)
IMG = 16
SV = VIS_SEQ * VIS_HID
IN_FEAT = NUM_HS * SV // PROMPT_LEN   # analogue of 41600
EC_MID = 64                     # analogue of 1000
N_KV = 12                       # encoder_conv out = 12 * 2 * HIDDEN
VOCAB = 64
HEAD_ID = 60                    # tokenizer id of '<s>'
TAIL_ID = 61                    # tokenizer id of '<o>'


# ================================ image / prompt kernel ================================
def image_prompt_kernel(img_ref, cw_ref, cb_ref, w1_ref, b1_ref, w2_ref, b2_ref, o_ref):
    # One stream (main or aux) per grid step.
    # img_ref: (1, B, 3*IMG*IMG) f32,  cw: (3*IMG*IMG, NUM_HS*SV) bf16
    # w1: (IN_FEAT, EC_MID) bf16,      w2: (EC_MID, 2*(2*HIDDEN)) bf16 (narrowed)
    _, B, _ = img_ref.shape
    x = img_ref[0]                                                   # (B, 3*IMG*IMG) f32

    # CLIP stand-in: single fused linear + tanh producing all 13 hidden states.
    h1 = jnp.tanh(jnp.dot(x.astype(jnp.bfloat16), cw_ref[...],
                          preferred_element_type=jnp.float32) + cb_ref[...])   # (B, NUM_HS*SV)

    # torch: cat(hidden_states, dim=1).view(bsz, prompt_len, -1)
    # (B, NUM_HS*SV) -> (B*PROMPT_LEN, IN_FEAT) via static lane slices + sublane concat
    # (lane-safe; avoids an unaligned lane->sublane reshape inside the kernel).
    rows = [h1[b:b + 1, p * IN_FEAT:(p + 1) * IN_FEAT]
            for b in range(B) for p in range(PROMPT_LEN)]
    h1r = jnp.concatenate(rows, axis=0)                              # (B*P, IN_FEAT)

    # encoder_conv: Linear -> Tanh -> Linear (second matmul narrowed to blocks {0, 6}).
    # TODO(synk): at the real analogue scale (41600x1000 / 1000x18432 weights) this must become
    #             a K/N-tiled accumulator pipeline (reduction axis last, raised vmem_limit_bytes).
    h2 = jnp.tanh(jnp.dot(h1r.astype(jnp.bfloat16), w1_ref[...],
                          preferred_element_type=jnp.float32) + b1_ref[...])   # (B*P, EC_MID)
    out = jnp.dot(h2.astype(jnp.bfloat16), w2_ref[...],
                  preferred_element_type=jnp.float32) + b2_ref[...]            # (B*P, 4*HIDDEN)
    o_ref[0] = out.astype(o_ref.dtype)


def pallas_image_prompt(all_imgs, clip_w, clip_b, ec_w1, ec_b1, ec_w2n, ec_b2n):
    """main + aux image streams -> narrowed encoder_conv prompt, ONE fused pallas call."""
    n_streams, B, d_img = all_imgs.shape
    M = B * PROMPT_LEN
    N = ec_w2n.shape[1]
    return pl.pallas_call(
        image_prompt_kernel,
        out_shape=jax.ShapeDtypeStruct((n_streams, M, N), jnp.bfloat16),
        grid=(n_streams,),
        in_specs=[
            pl.BlockSpec((1, B, d_img), lambda s: (s, 0, 0)),
            pl.BlockSpec(clip_w.shape, lambda s: (0, 0)),
            pl.BlockSpec(clip_b.shape, lambda s: (0, 0)),
            pl.BlockSpec(ec_w1.shape, lambda s: (0, 0)),
            pl.BlockSpec(ec_b1.shape, lambda s: (0, 0)),
            pl.BlockSpec(ec_w2n.shape, lambda s: (0, 0)),
            pl.BlockSpec(ec_b2n.shape, lambda s: (0, 0)),
        ],
        out_specs=pl.BlockSpec((1, M, N), lambda s: (s, 0, 0)),
        compiler_params=pltpu.CompilerParams(dimension_semantics=("parallel",)),
    )(all_imgs, clip_w, clip_b, ec_w1, ec_b1, ec_w2n, ec_b2n)


# =========================== fusion attention + classifier kernel ===========================
def fusion_attn_cls_kernel(ht_ref, x_ref, wqkv_ref, bqkv_ref, wo_ref, bo_ref,
                           pk_ref, pv_ref, bias_ref, clsw_ref, clsb_ref,
                           logits_ref, fout_acc):
    # grid = (B, nH): b parallel, heads = reduction into fout_acc.
    # ht_ref:   (2*B,) int32 in SMEM (scalar prefetch): [<s>_0, <o>_0, <s>_1, <o>_1, ...]
    # x_ref:    (1, S, H) bf16       wqkv: (1, H, 3*hd) bf16   bqkv: (1, 1, 3*hd) f32
    # wo:       (1, hd, H) bf16      bo: (1, H) f32
    # pk/pv:    (1, 1, Pkv, hd) bf16 bias: (1, 1, Pkv+S) f32 (precomputed additive mask bias)
    # clsw:     (2H, NUM_LABELS) bf16, clsb: (1, NUM_LABELS) f32
    b = pl.program_id(0)
    h = pl.program_id(1)
    _, _, Pkv, hd = pk_ref.shape
    _, S, H = x_ref.shape
    scale = 1.0 / (hd ** 0.5)

    x_bf = x_ref[0]                                                  # (S, H) bf16

    # per-head QKV projection; the per-head weight slice arrives via BlockSpec DMA.
    qkv = jnp.dot(x_bf, wqkv_ref[0], preferred_element_type=jnp.float32) + bqkv_ref[0]   # (S, 3hd)
    q = qkv[:, 0 * hd:1 * hd].astype(jnp.bfloat16)
    k = qkv[:, 1 * hd:2 * hd].astype(jnp.bfloat16)
    v = qkv[:, 2 * hd:3 * hd].astype(jnp.bfloat16)

    pk = pk_ref[...].reshape(Pkv, hd)                                # bf16
    pv = pv_ref[...].reshape(Pkv, hd)

    bias = bias_ref[0]                                               # (1, Pkv+S) f32
    bias_p = bias[:, :Pkv]
    bias_n = bias[:, Pkv:]

    # joint softmax over [prompt KV | new KV] without concatenating K/V.
    sp = jnp.einsum('qd,kd->qk', q, pk, preferred_element_type=jnp.float32) * scale + bias_p
    sn = jnp.einsum('qd,kd->qk', q, k, preferred_element_type=jnp.float32) * scale + bias_n
    m = jnp.maximum(jnp.max(sp, axis=-1, keepdims=True),
                    jnp.max(sn, axis=-1, keepdims=True))
    ep = jnp.exp(sp - m)
    en = jnp.exp(sn - m)
    inv = pl.reciprocal(jnp.sum(ep, axis=-1, keepdims=True)
                        + jnp.sum(en, axis=-1, keepdims=True), approx=True)   # EUP slot
    ctx = (jnp.einsum('qk,kd->qd', ep.astype(jnp.bfloat16), pv,
                      preferred_element_type=jnp.float32)
           + jnp.einsum('qk,kd->qd', en.astype(jnp.bfloat16), v,
                        preferred_element_type=jnp.float32)) * inv            # (S, hd) f32

    # init accumulator (residual + output bias) on the first head of each batch row.
    @pl.when(h == 0)
    def _():
        fout_acc[...] = x_bf.astype(jnp.float32) + bo_ref[...]

    # accumulate this head's slice of the output projection (no in-kernel ctx concat).
    fout_acc[...] += jnp.dot(ctx.astype(jnp.bfloat16), wo_ref[0],
                             preferred_element_type=jnp.float32)

    # entity gather (<s>/<o> rows via SMEM scalars) + relation classifier on the last head.
    @pl.when(h == pl.num_programs(1) - 1)
    def _():
        head_row = fout_acc[pl.ds(ht_ref[2 * b + 0], 1), :]          # (1, H)
        tail_row = fout_acc[pl.ds(ht_ref[2 * b + 1], 1), :]
        entity = jnp.concatenate([head_row, tail_row], axis=1)       # (1, 2H)
        # TODO(synk): nn.Dropout(0.5) before the classifier is eval-mode identity here.
        logits_ref[0] = jnp.dot(entity.astype(jnp.bfloat16), clsw_ref[...],
                                preferred_element_type=jnp.float32) + clsb_ref[...]


def pallas_fusion_attention_classify(x_bf16, params, pk, pv, bias, ht_flat):
    """Fusion attention layer + entity gather + classifier. grid=(B parallel, heads arbitrary)."""
    B, S, H = x_bf16.shape
    _, nH, Pkv, hd = pk.shape
    grid_spec = pltpu.PrefetchScalarGridSpec(
        num_scalar_prefetch=1,
        grid=(B, nH),
        in_specs=[
            pl.BlockSpec((1, S, H), lambda b, h, ht: (b, 0, 0)),            # x (bf16)
            pl.BlockSpec((1, H, 3 * hd), lambda b, h, ht: (h, 0, 0)),       # wqkv
            pl.BlockSpec((1, 1, 3 * hd), lambda b, h, ht: (h, 0, 0)),       # bqkv
            pl.BlockSpec((1, hd, H), lambda b, h, ht: (h, 0, 0)),           # wo
            pl.BlockSpec((1, H), lambda b, h, ht: (0, 0)),                  # bo
            pl.BlockSpec((1, 1, Pkv, hd), lambda b, h, ht: (b, h, 0, 0)),   # prompt K
            pl.BlockSpec((1, 1, Pkv, hd), lambda b, h, ht: (b, h, 0, 0)),   # prompt V
            pl.BlockSpec((1, 1, Pkv + S), lambda b, h, ht: (b, 0, 0)),      # mask bias
            pl.BlockSpec((2 * H, NUM_LABELS), lambda b, h, ht: (0, 0)),     # cls_w
            pl.BlockSpec((1, NUM_LABELS), lambda b, h, ht: (0, 0)),         # cls_b
        ],
        out_specs=pl.BlockSpec((1, 1, NUM_LABELS), lambda b, h, ht: (b, 0, 0)),
        scratch_shapes=[pltpu.VMEM((S, H), jnp.float32)],
    )
    out = pl.pallas_call(
        fusion_attn_cls_kernel,
        out_shape=jax.ShapeDtypeStruct((B, 1, NUM_LABELS), jnp.float32),
        grid_spec=grid_spec,
        compiler_params=pltpu.CompilerParams(
            dimension_semantics=("parallel", "arbitrary")),
    )(ht_flat, x_bf16, params["wqkv"], params["bqkv"], params["wo"], params["bo"],
      pk, pv, bias, params["cls_w"], params["cls_b"])
    return out.reshape(B, NUM_LABELS)


# ----------------------------------- model glue -----------------------------------
def init_params(key):
    ks = jax.random.split(key, 10)
    s = 0.05
    p = {}
    # TODO(synk): stand-in for pretrained CLIP ViT-B/32 vision encoder; all 13 hidden states
    #             produced by ONE fused lane-dense projection.
    p["clip_w"] = (s * jax.random.normal(ks[0], (3 * IMG * IMG, NUM_HS * SV), jnp.float32)
                   ).astype(jnp.bfloat16)
    p["clip_b"] = s * jax.random.normal(ks[1], (1, NUM_HS * SV), jnp.float32)
    # TODO(synk): stand-in for pretrained BertModel text encoder (embedding lookup only).
    p["embed"] = s * jax.random.normal(ks[2], (VOCAB, HIDDEN), jnp.float32)
    # encoder_conv: Linear(IN_FEAT, EC_MID) -> Tanh -> Linear(EC_MID, 12*2*HIDDEN)
    p["ec_w1"] = (s * jax.random.normal(ks[3], (IN_FEAT, EC_MID), jnp.float32)).astype(jnp.bfloat16)
    p["ec_b1"] = jnp.zeros((1, EC_MID), jnp.float32)
    p["ec_w2"] = (s * jax.random.normal(ks[4], (EC_MID, N_KV * 2 * HIDDEN), jnp.float32)
                  ).astype(jnp.bfloat16)
    p["ec_b2"] = jnp.zeros((1, N_KV * 2 * HIDDEN), jnp.float32)
    # fusion attention: per-head Q/K/V projection (nH, H, 3*hd) and output projection (nH, hd, H)
    p["wqkv"] = (s * jax.random.normal(ks[5], (N_HEADS, HIDDEN, 3 * HEAD_DIM), jnp.float32)
                 ).astype(jnp.bfloat16)
    p["bqkv"] = jnp.zeros((N_HEADS, 1, 3 * HEAD_DIM), jnp.float32)
    p["wo"] = (s * jax.random.normal(ks[6], (N_HEADS, HEAD_DIM, HIDDEN), jnp.float32)
               ).astype(jnp.bfloat16)
    p["bo"] = jnp.zeros((1, HIDDEN), jnp.float32)
    # classifier: Linear(2*HIDDEN, NUM_LABELS)
    p["cls_w"] = (s * jax.random.normal(ks[7], (2 * HIDDEN, NUM_LABELS), jnp.float32)
                  ).astype(jnp.bfloat16)
    p["cls_b"] = jnp.zeros((1, NUM_LABELS), jnp.float32)
    return p


def get_visual_prompt(prompt_kv, bsz):
    """guids[0] (key, value) from the narrowed encoder_conv output, already bf16.

    prompt_kv: (1+NUM_AUX, B*PROMPT_LEN, 2*(2*HIDDEN)) where the two column blocks are
    split block 0 (used by aux streams) and split block 6 (used by the main stream).
    """
    kv = prompt_kv.reshape(1 + NUM_AUX, bsz, PROMPT_LEN, 2, 2 * HIDDEN)
    main_kv = kv[0, :, :, 1]                                     # split block 6 of main (B, P, 2H)
    aux_kv = [kv[1 + i, :, :, 0] for i in range(NUM_AUX)]        # split block 0 of each aux
    key_val = jnp.concatenate([main_kv] + aux_kv, axis=1)        # (B, (1+NUM_AUX)*P, 2H)
    key = key_val[..., :HIDDEN].reshape(bsz, N_HEADS, -1, HEAD_DIM)
    value = key_val[..., HIDDEN:].reshape(bsz, N_HEADS, -1, HEAD_DIM)
    # TODO(synk): guids[1..5] / image_guids / aux_image_guids feed only the untranslated loss branch.
    return key, value


@jax.jit
def forward(params, input_ids, attention_mask, images, aux_imgs):
    bsz = input_ids.shape[0]

    # ---- image path: CLIP stand-in + encoder_conv fused, all (main + aux) streams, ONE call ----
    aux_t = jnp.transpose(aux_imgs, (1, 0, 2, 3, 4))             # aux_imgs.permute([1,0,2,3,4])
    all_imgs = jnp.concatenate([images[None], aux_t], axis=0)    # (1+NUM_AUX, B, 3, IMG, IMG)
    all_imgs = all_imgs.reshape(1 + NUM_AUX, bsz, 3 * IMG * IMG)

    # only split blocks 0 (aux) and 6 (main) feed the single translated fusion layer -> narrow ec_w2
    c0, c6 = 0 * 2 * HIDDEN, 6 * 2 * HIDDEN
    w2n = jnp.concatenate([params["ec_w2"][:, c0:c0 + 2 * HIDDEN],
                           params["ec_w2"][:, c6:c6 + 2 * HIDDEN]], axis=1)
    b2n = jnp.concatenate([params["ec_b2"][:, c0:c0 + 2 * HIDDEN],
                           params["ec_b2"][:, c6:c6 + 2 * HIDDEN]], axis=1)

    # TODO(synk): ImageModel runs under torch.no_grad in the reference; forward-only fusion here.
    prompt_kv = pallas_image_prompt(all_imgs, params["clip_w"], params["clip_b"],
                                    params["ec_w1"], params["ec_b1"], w2n, b2n)

    key0, val0 = get_visual_prompt(prompt_kv, bsz)               # (B, nH, Pkv, hd) bf16
    pkv_len = key0.shape[2]
    image_atts = jnp.ones((bsz, pkv_len), jnp.float32)

    # TODO(synk): BERT 'text' mode encoder not translated; deterministic embedding lookup stand-in.
    text_last_hidden_state = params["embed"][input_ids]          # (B, S, H) f32

    # additive attention-mask bias, computed once in the jitted wrapper (hoisted out of the kernel)
    mask = jnp.concatenate([image_atts, attention_mask.astype(jnp.float32)], axis=1)
    bias = ((mask - 1.0) * 1e9)[:, None, :]                      # (B, 1, Pkv+S)

    # entity positions of '<s>' / '<o>' per row (scalar-prefetched into SMEM by the kernel).
    # NOTE: argmax on the equality mask silently returns 0 if the token is missing.
    head_idx = jnp.argmax(input_ids == HEAD_ID, axis=1).astype(jnp.int32)
    tail_idx = jnp.argmax(input_ids == TAIL_ID, axis=1).astype(jnp.int32)
    ht_flat = jnp.stack([head_idx, tail_idx], axis=1).reshape(-1)          # (2*B,) int32

    # TODO(synk): 12-layer BERT 'fusion' encoder (6 past_key_value layers, LayerNorm/FFN) reduced
    #             to one fused Pallas attention layer consuming guids[0].
    logits = pallas_fusion_attention_classify(
        text_last_hidden_state.astype(jnp.bfloat16), params, key0, val0, bias, ht_flat)

    # TODO(synk): labels branch (contrastive + matching losses, torch.multinomial negatives)
    #             not translated; labels=None path returns logits.
    return logits


if __name__ == "__main__":
    key = jax.random.PRNGKey(0)
    kp, k1, k2, k3 = jax.random.split(key, 4)
    params = init_params(kp)

    input_ids = jax.random.randint(k1, (BSZ, SEQ), 0, VOCAB - 4)
    input_ids = input_ids.at[:, 1].set(HEAD_ID).at[:, 4].set(TAIL_ID)   # one '<s>' and one '<o>' per row
    attention_mask = jnp.ones((BSZ, SEQ), jnp.float32)
    images = jax.random.normal(k2, (BSZ, 3, IMG, IMG), jnp.float32)              # NCHW
    aux_imgs = jax.random.normal(k3, (BSZ, NUM_AUX, 3, IMG, IMG), jnp.float32)   # N,A,C,H,W

    logits = forward(params, input_ids, attention_mask, images, aux_imgs)
    logits = jax.block_until_ready(logits)
    assert logits.shape == (BSZ, NUM_LABELS)
    assert bool(jnp.all(jnp.isfinite(logits)))
    print("KERNEL_OK")
</pallas_src>

<mosaic_0001>
module attributes {stable_mosaic.version = 11 : i64} {
  func.func @image_prompt_kernel(%arg0: i32, %arg1: memref<1x2x768xf32, #tpu.memory_space<vmem>>, %arg2: memref<768x832xbf16, #tpu.memory_space<vmem>>, %arg3: memref<1x832xf32, #tpu.memory_space<vmem>>, %arg4: memref<208x64xbf16, #tpu.memory_space<vmem>>, %arg5: memref<1x64xf32, #tpu.memory_space<vmem>>, %arg6: memref<64x128xbf16, #tpu.memory_space<vmem>>, %arg7: memref<1x128xf32, #tpu.memory_space<vmem>>, %arg8: memref<1x8x128xbf16, #tpu.memory_space<vmem>>) attributes {dimension_semantics = [#tpu.dimension_semantics<parallel>], iteration_bounds = array<i64: 4>, scalar_prefetch = 0 : i64, scratch_operands = 0 : i64, tpu.core_type = #tpu.core_type<tc>, window_params = [{transform_indices = @transform_0, window_bounds = array<i64: 1, 2, 768>}, {pipeline_mode = #tpu.pipeline_mode<synchronous>, transform_indices = @transform_1, window_bounds = array<i64: 768, 832>}, {pipeline_mode = #tpu.pipeline_mode<synchronous>, transform_indices = @transform_2, window_bounds = array<i64: 1, 832>}, {pipeline_mode = #tpu.pipeline_mode<synchronous>, transform_indices = @transform_3, window_bounds = array<i64: 208, 64>}, {pipeline_mode = #tpu.pipeline_mode<synchronous>, transform_indices = @transform_4, window_bounds = array<i64: 1, 64>}, {pipeline_mode = #tpu.pipeline_mode<synchronous>, transform_indices = @transform_5, window_bounds = array<i64: 64, 128>}, {pipeline_mode = #tpu.pipeline_mode<synchronous>, transform_indices = @transform_6, window_bounds = array<i64: 1, 128>}, {transform_indices = @transform_7, window_bounds = array<i64: 1, 8, 128>}]} {
    %c0 = arith.constant 0 : index
    %c0_0 = arith.constant 0 : index
    %c0_1 = arith.constant 0 : index
    %0 = vector.load %arg1[%c0, %c0_0, %c0_1] : memref<1x2x768xf32, #tpu.memory_space<vmem>>, vector<1x2x768xf32>
    %1 = vector.shape_cast %0 : vector<1x2x768xf32> to vector<2x768xf32>
    %2 = arith.truncf %1 : vector<2x768xf32> to vector<2x768xbf16>
    %c0_2 = arith.constant 0 : index
    %c0_3 = arith.constant 0 : index
    %3 = vector.load %arg2[%c0_2, %c0_3] : memref<768x832xbf16, #tpu.memory_space<vmem>>, vector<768x832xbf16>
    %cst = arith.constant dense<0.000000e+00> : vector<2x832xf32>
    %4 = tpu.matmul %2, %3, %cst {dimension_numbers = #tpu.dot_dimension_numbers<[1], [0], [0], [1], [0, 0, 1, 1], [], []>} : vector<2x768xbf16>, vector<768x832xbf16>, vector<2x832xf32> -> vector<2x832xf32>
    %c0_4 = arith.constant 0 : index
    %c0_5 = arith.constant 0 : index
    %5 = vector.load %arg3[%c0_4, %c0_5] : memref<1x832xf32, #tpu.memory_space<vmem>>, vector<1x832xf32>
    %6 = vector.broadcast %5 : vector<1x832xf32> to vector<2x832xf32>
    %7 = arith.addf %4, %6 : vector<2x832xf32>
    %8 = math.tanh %7 : vector<2x832xf32>
    %9 = vector.extract_strided_slice %8 {offsets = [0, 0], sizes = [1, 208], strides = [1, 1]} : vector<2x832xf32> to vector<1x208xf32>
    %10 = vector.extract_strided_slice %8 {offsets = [0, 208], sizes = [1, 208], strides = [1, 1]} : vector<2x832xf32> to vector<1x208xf32>
    %11 = vector.extract_strided_slice %8 {offsets = [0, 416], sizes = [1, 208], strides = [1, 1]} : vector<2x832xf32> to vector<1x208xf32>
    %12 = vector.extract_strided_slice %8 {offsets = [0, 624], sizes = [1, 208], strides = [1, 1]} : vector<2x832xf32> to vector<1x208xf32>
    %13 = vector.extract_strided_slice %8 {offsets = [1, 0], sizes = [1, 208], strides = [1, 1]} : vector<2x832xf32> to vector<1x208xf32>
    %14 = vector.extract_strided_slice %8 {offsets = [1, 208], sizes = [1, 208], strides = [1, 1]} : vector<2x832xf32> to vector<1x208xf32>
    %15 = vector.extract_strided_slice %8 {offsets = [1, 416], sizes = [1, 208], strides = [1, 1]} : vector<2x832xf32> to vector<1x208xf32>
    %16 = vector.extract_strided_slice %8 {offsets = [1, 624], sizes = [1, 208], strides = [1, 1]} : vector<2x832xf32> to vector<1x208xf32>
    %17 = tpu.concatenate %9, %10, %11, %12, %13, %14, %15, %16 in 0 : vector<1x208xf32>, vector<1x208xf32>, vector<1x208xf32>, vector<1x208xf32>, vector<1x208xf32>, vector<1x208xf32>, vector<1x208xf32>, vector<1x208xf32> -> vector<8x208xf32>
    %18 = arith.truncf %17 : vector<8x208xf32> to vector<8x208xbf16>
    %c0_6 = arith.constant 0 : index
    %c0_7 = arith.constant 0 : index
    %19 = vector.load %arg4[%c0_6, %c0_7] : memref<208x64xbf16, #tpu.memory_space<vmem>>, vector<208x64xbf16>
    %cst_8 = arith.constant dense<0.000000e+00> : vector<8x64xf32>
    %20 = tpu.matmul %18, %19, %cst_8 {dimension_numbers = #tpu.dot_dimension_numbers<[1], [0], [0], [1], [0, 0, 1, 1], [], []>} : vector<8x208xbf16>, vector<208x64xbf16>, vector<8x64xf32> -> vector<8x64xf32>
    %c0_9 = arith.constant 0 : index
    %c0_10 = arith.constant 0 : index
    %21 = vector.load %arg5[%c0_9, %c0_10] : memref<1x64xf32, #tpu.memory_space<vmem>>, vector<1x64xf32>
    %22 = vector.broadcast %21 : vector<1x64xf32> to vector<8x64xf32>
    %23 = arith.addf %20, %22 : vector<8x64xf32>
    %24 = math.tanh %23 : vector<8x64xf32>
    %25 = arith.truncf %24 : vector<8x64xf32> to vector<8x64xbf16>
    %c0_11 = arith.constant 0 : index
    %c0_12 = arith.constant 0 : index
    %26 = vector.load %arg6[%c0_11, %c0_12] : memref<64x128xbf16, #tpu.memory_space<vmem>>, vector<64x128xbf16>
    %cst_13 = arith.constant dense<0.000000e+00> : vector<8x128xf32>
    %27 = tpu.matmul %25, %26, %cst_13 {dimension_numbers = #tpu.dot_dimension_numbers<[1], [0], [0], [1], [0, 0, 1, 1], [], []>} : vector<8x64xbf16>, vector<64x128xbf16>, vector<8x128xf32> -> vector<8x128xf32>
    %c0_14 = arith.constant 0 : index
    %c0_15 = arith.constant 0 : index
    %28 = vector.load %arg7[%c0_14, %c0_15] : memref<1x128xf32, #tpu.memory_space<vmem>>, vector<1x128xf32>
    %29 = vector.broadcast %28 : vector<1x128xf32> to vector<8x128xf32>
    %30 = arith.addf %27, %29 : vector<8x128xf32>
    %31 = arith.truncf %30 : vector<8x128xf32> to vector<8x128xbf16>
    %c0_16 = arith.constant 0 : index
    %c0_17 = arith.constant 0 : index
    %c0_18 = arith.constant 0 : index
    %32 = vector.load %arg8[%c0_16, %c0_17, %c0_18] : memref<1x8x128xbf16, #tpu.memory_space<vmem>>, vector<1x8x128xbf16>
    %33 = vector.shape_cast %32 : vector<1x8x128xbf16> to vector<8x128xbf16>
    %34 = vector.shape_cast %31 : vector<8x128xbf16> to vector<1x8x128xbf16>
    tpu.vector_store %arg8[%c0_16, %c0_17, %c0_18], %34 {strides = array<i32>} : memref<1x8x128xbf16, #tpu.memory_space<vmem>>, vector<1x8x128xbf16>,
    return
  }
  func.func @transform_0(%arg0: i32) -> (i32, i32, i32) {
    %c0_i32 = arith.constant 0 : i32
    %c0_i32_0 = arith.constant 0 : i32
    %c0_i32_1 = arith.constant 0 : i32
    return %arg0, %c0_i32, %c0_i32_0 : i32, i32, i32
  }
  func.func @transform_1(%arg0: i32) -> (i32, i32) {
    %c0_i32 = arith.constant 0 : i32
    %c0_i32_0 = arith.constant 0 : i32
    %c0_i32_1 = arith.constant 0 : i32
    return %c0_i32, %c0_i32_0 : i32, i32
  }
  func.func @transform_2(%arg0: i32) -> (i32, i32) {
    %c0_i32 = arith.constant 0 : i32
    %c0_i32_0 = arith.constant 0 : i32
    %c0_i32_1 = arith.constant 0 : i32
    return %c0_i32, %c0_i32_0 : i32, i32
  }
  func.func @transform_3(%arg0: i32) -> (i32, i32) {
    %c0_i32 = arith.constant 0 : i32
    %c0_i32_0 = arith.constant 0 : i32
    %c0_i32_1 = arith.constant 0 : i32
    return %c0_i32, %c0_i32_0 : i32, i32
  }
  func.func @transform_4(%arg0: i32) -> (i32, i32) {
    %c0_i32 = arith.constant 0 : i32
    %c0_i32_0 = arith.constant 0 : i32
    %c0_i32_1 = arith.constant 0 : i32
    return %c0_i32, %c0_i32_0 : i32, i32
  }
  func.func @transform_5(%arg0: i32) -> (i32, i32) {
    %c0_i32 = arith.constant 0 : i32
    %c0_i32_0 = arith.constant 0 : i32
    %c0_i32_1 = arith.constant 0 : i32
    return %c0_i32, %c0_i32_0 : i32, i32
  }
  func.func @transform_6(%arg0: i32) -> (i32, i32) {
    %c0_i32 = arith.constant 0 : i32
    %c0_i32_0 = arith.constant 0 : i32
    %c0_i32_1 = arith.constant 0 : i32
    return %c0_i32, %c0_i32_0 : i32, i32
  }
  func.func @transform_7(%arg0: i32) -> (i32, i32, i32) {
    %c0_i32 = arith.constant 0 : i32
    %c0_i32_0 = arith.constant 0 : i32
    %c0_i32_1 = arith.constant 0 : i32
    return %arg0, %c0_i32, %c0_i32_0 : i32, i32, i32
  }
}

module attributes {stable_mosaic.version = 11 : i64} {
  func.func @fusion_attn_cls_kernel(%arg0: i32, %arg1: i32, %arg2: memref<4xi32, #tpu.memory_space<smem>>, %arg3: memref<1x8x32xbf16, #tpu.memory_space<vmem>>, %arg4: memref<1x32x24xbf16, #tpu.memory_space<vmem>>, %arg5: memref<1x1x24xf32, #tpu.memory_space<vmem>>, %arg6: memref<1x8x32xbf16, #tpu.memory_space<vmem>>, %arg7: memref<1x32xf32, #tpu.memory_space<vmem>>, %arg8: memref<1x1x16x8xbf16, #tpu.memory_space<vmem>>, %arg9: memref<1x1x16x8xbf16, #tpu.memory_space<vmem>>, %arg10: memref<1x1x24xf32, #tpu.memory_space<vmem>>, %arg11: memref<64x3xbf16, #tpu.memory_space<vmem>>, %arg12: memref<1x3xf32, #tpu.memory_space<vmem>>, %arg13: memref<1x1x3xf32, #tpu.memory_space<vmem>>, %arg14: memref<8x32xf32, #tpu.memory_space<vmem>>) attributes {dimension_semantics = [#tpu.dimension_semantics<parallel>, #tpu.dimension_semantics<arbitrary>], iteration_bounds = array<i64: 2, 4>, scalar_prefetch = 1 : i64, scratch_operands = 1 : i64, tpu.core_type = #tpu.core_type<tc>, window_params = [{transform_indices = @transform_0, window_bounds = array<i64: 1, 8, 32>}, {transform_indices = @transform_1, window_bounds = array<i64: 1, 32, 24>}, {transform_indices = @transform_2, window_bounds = array<i64: 1, 1, 24>}, {transform_indices = @transform_3, window_bounds = array<i64: 1, 8, 32>}, {pipeline_mode = #tpu.pipeline_mode<synchronous>, transform_indices = @transform_4, window_bounds = array<i64: 1, 32>}, {transform_indices = @transform_5, window_bounds = array<i64: 1, 1, 16, 8>}, {transform_indices = @transform_6, window_bounds = array<i64: 1, 1, 16, 8>}, {transform_indices = @transform_7, window_bounds = array<i64: 1, 1, 24>}, {pipeline_mode = #tpu.pipeline_mode<synchronous>, transform_indices = @transform_8, window_bounds = array<i64: 64, 3>}, {pipeline_mode = #tpu.pipeline_mode<synchronous>, transform_indices = @transform_9, window_bounds = array<i64: 1, 3>}, {transform_indices = @transform_10, window_bounds = array<i64: 1, 1, 3>}]} {
    %c0 = arith.constant 0 : index
    %c0_0 = arith.constant 0 : index
    %c0_1 = arith.constant 0 : index
    %0 = vector.load %arg3[%c0, %c0_0, %c0_1] : memref<1x8x32xbf16, #tpu.memory_space<vmem>>, vector<1x8x32xbf16>
    %1 = vector.shape_cast %0 : vector<1x8x32xbf16> to vector<8x32xbf16>
    %c0_2 = arith.constant 0 : index
    %c0_3 = arith.constant 0 : index
    %c0_4 = arith.constant 0 : index
    %2 = vector.load %arg4[%c0_2, %c0_3, %c0_4] : memref<1x32x24xbf16, #tpu.memory_space<vmem>>, vector<1x32x24xbf16>
    %3 = vector.shape_cast %2 : vector<1x32x24xbf16> to vector<32x24xbf16>
    %cst = arith.constant dense<0.000000e+00> : vector<8x24xf32>
    %4 = tpu.matmul %1, %3, %cst {dimension_numbers = #tpu.dot_dimension_numbers<[1], [0], [0], [1], [0, 0, 1, 1], [], []>} : vector<8x32xbf16>, vector<32x24xbf16>, vector<8x24xf32> -> vector<8x24xf32>
    %c0_5 = arith.constant 0 : index
    %c0_6 = arith.constant 0 : index
    %c0_7 = arith.constant 0 : index
    %5 = vector.load %arg5[%c0_5, %c0_6, %c0_7] : memref<1x1x24xf32, #tpu.memory_space<vmem>>, vector<1x1x24xf32>
    %6 = vector.shape_cast %5 : vector<1x1x24xf32> to vector<1x24xf32>
    %7 = vector.broadcast %6 : vector<1x24xf32> to vector<8x24xf32>
    %8 = arith.addf %4, %7 : vector<8x24xf32>
    %9 = vector.extract_strided_slice %8 {offsets = [0, 0], sizes = [8, 8], strides = [1, 1]} : vector<8x24xf32> to vector<8x8xf32>
    %10 = arith.truncf %9 : vector<8x8xf32> to vector<8x8xbf16>
    %11 = vector.extract_strided_slice %8 {offsets = [0, 8], sizes = [8, 8], strides = [1, 1]} : vector<8x24xf32> to vector<8x8xf32>
    %12 = arith.truncf %11 : vector<8x8xf32> to vector<8x8xbf16>
    %13 = vector.extract_strided_slice %8 {offsets = [0, 16], sizes = [8, 8], strides = [1, 1]} : vector<8x24xf32> to vector<8x8xf32>
    %14 = arith.truncf %13 : vector<8x8xf32> to vector<8x8xbf16>
    %c0_8 = arith.constant 0 : index
    %c0_9 = arith.constant 0 : index
    %c0_10 = arith.constant 0 : index
    %c0_11 = arith.constant 0 : index
    %15 = vector.load %arg8[%c0_8, %c0_9, %c0_10, %c0_11] : memref<1x1x16x8xbf16, #tpu.memory_space<vmem>>, vector<1x1x16x8xbf16>
    %16 = vector.shape_cast %15 : vector<1x1x16x8xbf16> to vector<16x8xbf16>
    %c0_12 = arith.constant 0 : index
    %c0_13 = arith.constant 0 : index
    %c0_14 = arith.constant 0 : index
    %c0_15 = arith.constant 0 : index
    %17 = vector.load %arg9[%c0_12, %c0_13, %c0_14, %c0_15] : memref<1x1x16x8xbf16, #tpu.memory_space<vmem>>, vector<1x1x16x8xbf16>
    %18 = vector.shape_cast %17 : vector<1x1x16x8xbf16> to vector<16x8xbf16>
    %c0_16 = arith.constant 0 : index
    %c0_17 = arith.constant 0 : index
    %c0_18 = arith.constant 0 : index
    %19 = vector.load %arg10[%c0_16, %c0_17, %c0_18] : memref<1x1x24xf32, #tpu.memory_space<vmem>>, vector<1x1x24xf32>
    %20 = vector.shape_cast %19 : vector<1x1x24xf32> to vector<1x24xf32>
    %21 = vector.extract_strided_slice %20 {offsets = [0, 0], sizes = [1, 16], strides = [1, 1]} : vector<1x24xf32> to vector<1x16xf32>
    %22 = vector.extract_strided_slice %20 {offsets = [0, 16], sizes = [1, 8], strides = [1, 1]} : vector<1x24xf32> to vector<1x8xf32>
    "tpu.trace_start"() <{level = 10 : i32, message = "qd,kd->qk"}> : () -> ()
    %cst_19 = arith.constant dense<0.000000e+00> : vector<8x16xf32>
    %23 = tpu.matmul %10, %16, %cst_19 {dimension_numbers = #tpu.dot_dimension_numbers<[1], [1], [0], [0], [0, 0, 1, 0], [], []>} : vector<8x8xbf16>, vector<16x8xbf16>, vector<8x16xf32> -> vector<8x16xf32>
    "tpu.trace_stop"() : () -> ()
    %cst_20 = arith.constant 0.353553385 : f32
    %24 = vector.broadcast %cst_20 : f32 to vector<8x16xf32>
    %25 = arith.mulf %23, %24 : vector<8x16xf32>
    %26 = vector.broadcast %21 : vector<1x16xf32> to vector<8x16xf32>
    %27 = arith.addf %25, %26 : vector<8x16xf32>
    "tpu.trace_start"() <{level = 10 : i32, message = "qd,kd->qk"}> : () -> ()
    %cst_21 = arith.constant dense<0.000000e+00> : vector<8x8xf32>
    %28 = tpu.matmul %10, %12, %cst_21 {dimension_numbers = #tpu.dot_dimension_numbers<[1], [1], [0], [0], [0, 0, 1, 0], [], []>} : vector<8x8xbf16>, vector<8x8xbf16>, vector<8x8xf32> -> vector<8x8xf32>
    "tpu.trace_stop"() : () -> ()
    %cst_22 = arith.constant 0.353553385 : f32
    %29 = vector.broadcast %cst_22 : f32 to vector<8x8xf32>
    %30 = arith.mulf %28, %29 : vector<8x8xf32>
    %31 = vector.broadcast %22 : vector<1x8xf32> to vector<8x8xf32>
    %32 = arith.addf %30, %31 : vector<8x8xf32>
    %cst_23 = arith.constant dense<0xFF800000> : vector<8xf32>
    %33 = vector.multi_reduction <maximumf>, %27, %cst_23 [1] : vector<8x16xf32> to vector<8xf32>
    %34 = vector.shape_cast %33 : vector<8xf32> to vector<8x1xf32>
    %cst_24 = arith.constant dense<0xFF800000> : vector<8xf32>
    %35 = vector.multi_reduction <maximumf>, %32, %cst_24 [1] : vector<8x8xf32> to vector<8xf32>
    %36 = vector.shape_cast %35 : vector<8xf32> to vector<8x1xf32>
    %37 = arith.maximumf %34, %36 : vector<8x1xf32>
    %38 = vector.broadcast %37 : vector<8x1xf32> to vector<8x16xf32>
    %39 = arith.subf %27, %38 : vector<8x16xf32>
    %40 = math.exp %39 : vector<8x16xf32>
    %41 = vector.broadcast %37 : vector<8x1xf32> to vector<8x8xf32>
    %42 = arith.subf %32, %41 : vector<8x8xf32>
    %43 = math.exp %42 : vector<8x8xf32>
    %cst_25 = arith.constant dense<0.000000e+00> : vector<8xf32>
    %44 = vector.multi_reduction <add>, %40, %cst_25 [1] : vector<8x16xf32> to vector<8xf32>
    %45 = vector.shape_cast %44 : vector<8xf32> to vector<8x1xf32>
    %cst_26 = arith.constant dense<0.000000e+00> : vector<8xf32>
    %46 = vector.multi_reduction <add>, %43, %cst_26 [1] : vector<8x8xf32> to vector<8xf32>
    %47 = vector.shape_cast %46 : vector<8xf32> to vector<8x1xf32>
    %48 = arith.addf %45, %47 : vector<8x1xf32>
    %49 = tpu.reciprocal %48 {approx = true} : vector<8x1xf32> -> vector<8x1xf32>
    %50 = arith.truncf %40 : vector<8x16xf32> to vector<8x16xbf16>
    "tpu.trace_start"() <{level = 10 : i32, message = "qk,kd->qd"}> : () -> ()
    %cst_27 = arith.constant dense<0.000000e+00> : vector<8x8xf32>
    %51 = tpu.matmul %50, %18, %cst_27 {dimension_numbers = #tpu.dot_dimension_numbers<[1], [0], [0], [1], [0, 0, 1, 1], [], []>} : vector<8x16xbf16>, vector<16x8xbf16>, vector<8x8xf32> -> vector<8x8xf32>
    "tpu.trace_stop"() : () -> ()
    %52 = arith.truncf %43 : vector<8x8xf32> to vector<8x8xbf16>
    "tpu.trace_start"() <{level = 10 : i32, message = "qk,kd->qd"}> : () -> ()
    %cst_28 = arith.constant dense<0.000000e+00> : vector<8x8xf32>
    %53 = tpu.matmul %52, %14, %cst_28 {dimension_numbers = #tpu.dot_dimension_numbers<[1], [0], [0], [1], [0, 0, 1, 1], [], []>} : vector<8x8xbf16>, vector<8x8xbf16>, vector<8x8xf32> -> vector<8x8xf32>
    "tpu.trace_stop"() : () -> ()
    %54 = arith.addf %51, %53 : vector<8x8xf32>
    %55 = vector.broadcast %49 : vector<8x1xf32> to vector<8x8xf32>
    %56 = arith.mulf %54, %55 : vector<8x8xf32>
    %c0_i32 = arith.constant 0 : i32
    %57 = arith.cmpi eq, %arg1, %c0_i32 : i32
    %58 = arith.extui %57 : i1 to i32
    %c0_i32_29 = arith.constant 0 : i32
    %59 = arith.cmpi ne, %58, %c0_i32_29 : i32
    scf.if %59 {
      %70 = arith.extf %1 : vector<8x32xbf16> to vector<8x32xf32>
      %c0_39 = arith.constant 0 : index
      %c0_40 = arith.constant 0 : index
      %71 = vector.load %arg7[%c0_39, %c0_40] : memref<1x32xf32, #tpu.memory_space<vmem>>, vector<1x32xf32>
      %72 = vector.broadcast %71 : vector<1x32xf32> to vector<8x32xf32>
      %73 = arith.addf %70, %72 : vector<8x32xf32>
      %c0_41 = arith.constant 0 : index
      %c0_42 = arith.constant 0 : index
      %74 = vector.load %arg14[%c0_41, %c0_42] : memref<8x32xf32, #tpu.memory_space<vmem>>, vector<8x32xf32>
      tpu.vector_store %arg14[%c0_41, %c0_42], %73 {strides = array<i32>} : memref<8x32xf32, #tpu.memory_space<vmem>>, vector<8x32xf32>,
    } else {
    }
    %c0_30 = arith.constant 0 : index
    %c0_31 = arith.constant 0 : index
    %60 = vector.load %arg14[%c0_30, %c0_31] : memref<8x32xf32, #tpu.memory_space<vmem>>, vector<8x32xf32>
    %61 = arith.truncf %56 : vector<8x8xf32> to vector<8x8xbf16>
    %c0_32 = arith.constant 0 : index
    %c0_33 = arith.constant 0 : index
    %c0_34 = arith.constant 0 : index
    %62 = vector.load %arg6[%c0_32, %c0_33, %c0_34] : memref<1x8x32xbf16, #tpu.memory_space<vmem>>, vector<1x8x32xbf16>
    %63 = vector.shape_cast %62 : vector<1x8x32xbf16> to vector<8x32xbf16>
    %cst_35 = arith.constant dense<0.000000e+00> : vector<8x32xf32>
    %64 = tpu.matmul %61, %63, %cst_35 {dimension_numbers = #tpu.dot_dimension_numbers<[1], [0], [0], [1], [0, 0, 1, 1], [], []>} : vector<8x8xbf16>, vector<8x32xbf16>, vector<8x32xf32> -> vector<8x32xf32>
    %65 = arith.addf %60, %64 : vector<8x32xf32>
    %c0_36 = arith.constant 0 : index
    %c0_37 = arith.constant 0 : index
    %66 = vector.load %arg14[%c0_36, %c0_37] : memref<8x32xf32, #tpu.memory_space<vmem>>, vector<8x32xf32>
    tpu.vector_store %arg14[%c0_36, %c0_37], %65 {strides = array<i32>} : memref<8x32xf32, #tpu.memory_space<vmem>>, vector<8x32xf32>,
    %c3_i32 = arith.constant 3 : i32
    %67 = arith.cmpi eq, %arg1, %c3_i32 : i32
    %68 = arith.extui %67 : i1 to i32
    %c0_i32_38 = arith.constant 0 : i32
    %69 = arith.cmpi ne, %68, %c0_i32_38 : i32
    scf.if %69 {
      %c2_i32 = arith.constant 2 : i32
      %70 = arith.muli %c2_i32, %arg0 : i32
      %c0_i32_39 = arith.constant 0 : i32
      %71 = arith.addi %70, %c0_i32_39 : i32
      %72 = arith.index_cast %71 : i32 to index
      %73 = memref.load %arg2[%72] : memref<4xi32, #tpu.memory_space<smem>>
      %74 = arith.index_cast %73 : i32 to index
      %c0_40 = arith.constant 0 : index
      %75 = vector.load %arg14[%74, %c0_40] : memref<8x32xf32, #tpu.memory_space<vmem>>, vector<1x32xf32>
      %c2_i32_41 = arith.constant 2 : i32
      %76 = arith.muli %c2_i32_41, %arg0 : i32
      %c1_i32 = arith.constant 1 : i32
      %77 = arith.addi %76, %c1_i32 : i32
      %78 = arith.index_cast %77 : i32 to index
      %79 = memref.load %arg2[%78] : memref<4xi32, #tpu.memory_space<smem>>
      %80 = arith.index_cast %79 : i32 to index
      %c0_42 = arith.constant 0 : index
      %81 = vector.load %arg14[%80, %c0_42] : memref<8x32xf32, #tpu.memory_space<vmem>>, vector<1x32xf32>
      %82 = tpu.concatenate %75, %81 in 1 : vector<1x32xf32>, vector<1x32xf32> -> vector<1x64xf32>
      %83 = arith.truncf %82 : vector<1x64xf32> to vector<1x64xbf16>
      %c0_43 = arith.constant 0 : index
      %c0_44 = arith.constant 0 : index
      %84 = vector.load %arg11[%c0_43, %c0_44] : memref<64x3xbf16, #tpu.memory_space<vmem>>, vector<64x3xbf16>
      %cst_45 = arith.constant dense<0.000000e+00> : vector<1x3xf32>
      %85 = tpu.matmul %83, %84, %cst_45 {dimension_numbers = #tpu.dot_dimension_numbers<[1], [0], [0], [1], [0, 0, 1, 1], [], []>} : vector<1x64xbf16>, vector<64x3xbf16>, vector<1x3xf32> -> vector<1x3xf32>
      %c0_46 = arith.constant 0 : index
      %c0_47 = arith.constant 0 : index
      %86 = vector.load %arg12[%c0_46, %c0_47] : memref<1x3xf32, #tpu.memory_space<vmem>>, vector<1x3xf32>
      %87 = arith.addf %85, %86 : vector<1x3xf32>
      %c0_48 = arith.constant 0 : index
      %c0_49 = arith.constant 0 : index
      %c0_50 = arith.constant 0 : index
      %88 = vector.load %arg13[%c0_48, %c0_49, %c0_50] : memref<1x1x3xf32, #tpu.memory_space<vmem>>, vector<1x1x3xf32>
      %89 = vector.shape_cast %88 : vector<1x1x3xf32> to vector<1x3xf32>
      %90 = vector.shape_cast %87 : vector<1x3xf32> to vector<1x1x3xf32>
      tpu.vector_store %arg13[%c0_48, %c0_49, %c0_50], %90 {strides = array<i32>} : memref<1x1x3xf32, #tpu.memory_space<vmem>>, vector<1x1x3xf32>,
    } else {
    }
    return
  }
  func.func @transform_0(%arg0: i32, %arg1: i32, %arg2: memref<4xi32, #tpu.memory_space<smem>>) -> (i32, i32, i32) {
    %c0_i32 = arith.constant 0 : i32
    %c0_i32_0 = arith.constant 0 : i32
    %c0_i32_1 = arith.constant 0 : i32
    return %arg0, %c0_i32, %c0_i32_0 : i32, i32, i32
  }
  func.func @transform_1(%arg0: i32, %arg1: i32, %arg2: memref<4xi32, #tpu.memory_space<smem>>) -> (i32, i32, i32) {
    %c0_i32 = arith.constant 0 : i32
    %c0_i32_0 = arith.constant 0 : i32
    %c0_i32_1 = arith.constant 0 : i32
    return %arg1, %c0_i32, %c0_i32_0 : i32, i32, i32
  }
  func.func @transform_2(%arg0: i32, %arg1: i32, %arg2: memref<4xi32, #tpu.memory_space<smem>>) -> (i32, i32, i32) {
    %c0_i32 = arith.constant 0 : i32
    %c0_i32_0 = arith.constant 0 : i32
    %c0_i32_1 = arith.constant 0 : i32
    return %arg1, %c0_i32, %c0_i32_0 : i32, i32, i32
  }
  func.func @transform_3(%arg0: i32, %arg1: i32, %arg2: memref<4xi32, #tpu.memory_space<smem>>) -> (i32, i32, i32) {
    %c0_i32 = arith.constant 0 : i32
    %c0_i32_0 = arith.constant 0 : i32
    %c0_i32_1 = arith.constant 0 : i32
    return %arg1, %c0_i32, %c0_i32_0 : i32, i32, i32
  }
  func.func @transform_4(%arg0: i32, %arg1: i32, %arg2: memref<4xi32, #tpu.memory_space<smem>>) -> (i32, i32) {
    %c0_i32 = arith.constant 0 : i32
    %c0_i32_0 = arith.constant 0 : i32
    %c0_i32_1 = arith.constant 0 : i32
    return %c0_i32, %c0_i32_0 : i32, i32
  }
  func.func @transform_5(%arg0: i32, %arg1: i32, %arg2: memref<4xi32, #tpu.memory_space<smem>>) -> (i32, i32, i32, i32) {
    %c0_i32 = arith.constant 0 : i32
    %c0_i32_0 = arith.constant 0 : i32
    %c0_i32_1 = arith.constant 0 : i32
    return %arg0, %arg1, %c0_i32, %c0_i32_0 : i32, i32, i32, i32
  }
  func.func @transform_6(%arg0: i32, %arg1: i32, %arg2: memref<4xi32, #tpu.memory_space<smem>>) -> (i32, i32, i32, i32) {
    %c0_i32 = arith.constant 0 : i32
    %c0_i32_0 = arith.constant 0 : i32
    %c0_i32_1 = arith.constant 0 : i32
    return %arg0, %arg1, %c0_i32, %c0_i32_0 : i32, i32, i32, i32
  }
  func.func @transform_7(%arg0: i32, %arg1: i32, %arg2: memref<4xi32, #tpu.memory_space<smem>>) -> (i32, i32, i32) {
    %c0_i32 = arith.constant 0 : i32
    %c0_i32_0 = arith.constant 0 : i32
    %c0_i32_1 = arith.constant 0 : i32
    return %arg0, %c0_i32, %c0_i32_0 : i32, i32, i32
  }
  func.func @transform_8(%arg0: i32, %arg1: i32, %arg2: memref<4xi32, #tpu.memory_space<smem>>) -> (i32, i32) {
    %c0_i32 = arith.constant 0 : i32
    %c0_i32_0 = arith.constant 0 : i32
    %c0_i32_1 = arith.constant 0 : i32
    return %c0_i32, %c0_i32_0 : i32, i32
  }
  func.func @transform_9(%arg0: i32, %arg1: i32, %arg2: memref<4xi32, #tpu.memory_space<smem>>) -> (i32, i32) {
    %c0_i32 = arith.constant 0 : i32
    %c0_i32_0 = arith.constant 0 : i32
    %c0_i32_1 = arith.constant 0 : i32
    return %c0_i32, %c0_i32_0 : i32, i32
  }
  func.func @transform_10(%arg0: i32, %arg1: i32, %arg2: memref<4xi32, #tpu.memory_space<smem>>) -> (i32, i32, i32) {
    %c0_i32 = arith.constant 0 : i32
    %c0_i32_0 = arith.constant 0 : i32
    %c0_i32_1 = arith.constant 0 : i32
    return %arg0, %c0_i32, %c0_i32_0 : i32, i32, i32
  }
}

</mosaic_0001>

<llo_original>
// kernel: forward.3
$region0: #{forward.3}
  #allocation0 [shape = 'u32[]', space=smem, size = 0x4, offset = 0x4, fixed_abs, tag = 'smem constant byte address 0x4 - core index']
  #allocation1 [shape = 'u32[144,128]{1,0:T(1,128)}', space=vmem, size = 0x12000, scoped, tag = 'internal scratch']
  #allocation2 [shape = 'f32[8,32]{1,0:T(8,128)}', space=vmem, size = 0x1000, scoped, tag = 'scratch operand']
  #allocation3 [shape = 's32[1]{0}', space=sflag, size = 0x4, scoped, tag = 'scoped memory for forward.3']
  #allocation4 [shape = 'u8[512]{0}', space=smem, size = 0x200, scoped, tag = 'prefetched SMEM operand 0']
  %s0 = inlined_call_operand.vmem [shape: s32[4], index: 0, kind: input, shape index: {}]
  %s1 = inlined_call_operand.vmem [shape: bf16[2,8,32], index: 1, kind: input, shape index: {}]
  %s2 = inlined_call_operand.vmem [shape: bf16[4,32,24], index: 2, kind: input, shape index: {}]
  %s3 = inlined_call_operand.vmem [shape: f32[4,1,24], index: 3, kind: input, shape index: {}]
  %s4 = inlined_call_operand.vmem [shape: bf16[4,8,32], index: 4, kind: input, shape index: {}]
  %s5 = inlined_call_operand.vmem [shape: f32[1,32], index: 5, kind: input, shape index: {}]
  %s6 = inlined_call_operand.vmem [shape: bf16[2,4,16,8], index: 6, kind: input, shape index: {}]
  %s7 = inlined_call_operand.vmem [shape: bf16[2,4,16,8], index: 7, kind: input, shape index: {}]
  %s8 = inlined_call_operand.vmem [shape: f32[2,1,24], index: 8, kind: input, shape index: {}]
  %s9 = inlined_call_operand.vmem [shape: bf16[64,3], index: 9, kind: input, shape index: {}]
  %s10 = inlined_call_operand.vmem [shape: f32[1,3], index: 10, kind: input, shape index: {}]
  %s11 = inlined_call_operand.hbm [shape: f32[2,1,3], index: 11, kind: output, shape index: {}]
  %s12 = sld [smem:[#allocation0]]
  $region81: #{forward.3} parent=0
    _
  %s14 = ssub.s32 1, %s12
  %s15 = scalar_select 0, %s14, %s12
  %s16 = sshll.u32 %s0, 4
  %s17 = int_to_ptr.vmem [resolvable:$true] %s16
  %19 = dma.vmem_to_smem %s17, 16, [#allocation4], [#allocation3]
  %20 = dma.done [#allocation3], 16
  %21 = sfence
  $region1: #{forward.3} parent=0
    #allocation5 [shape = 'u8[1024]{0}', space=vmem, size = 0x400, scoped, tag = 'output window, operand 0']
    #allocation6 [shape = 's32[2]{0}', space=sflag, size = 0x8, scoped, tag = 'scoped memory for forward.3']
    %22 = vsyncpa [#allocation6], 0
    %s23 = scalar_lea.sflag [#allocation6], 1
    %24 = vsyncpa %s23, 0
    loop: start=0, step=1, limit=10
    $region2: #{forward.3} parent=1 // loop_pre_header
      _
    $region3: #{forward.3} parent=1 // loop_header
      %s26 = sphi 0, %s30
      %p27 = scmp.ge.s32.totalorder %s26, 10
      %s33 = sphi 0, %s45
      %s34 = sphi 0, %s41
      %s35 = sphi 0, %s33
      %s36 = sphi 0, %s34
      %s37 = sphi 0, %s35
      %s38 = sphi 0, %s36
      %s48 = sphi 0, %s50
      %s51 = sphi 0, %s48
      %s52 = sphi 0, %s51
      %s68 = sphi 0, %s52
      %s74 = sphi 0, %s76
      %s77 = sphi 0, %s74
      %s78 = sphi 0, %s77
      %s94 = sphi 0, %s78
      %s100 = sphi 0, %s102
      %s103 = sphi 0, %s100
      %s104 = sphi 0, %s103
      %s120 = sphi 0, %s104
      %s126 = sphi 0, %s128
      %s129 = sphi 0, %s126
      %s130 = sphi 0, %s129
      %s146 = sphi 0, %s130
      %s150 = sphi 0, %s150
      %s152 = sphi 0, %s150
      %s153 = sphi 0, %s152
      %s167 = sphi 0, %s153
      %s175 = sphi 0, %s177
      %s178 = sphi 0, %s175
      %s179 = sphi 0, %s178
      %s195 = sphi 0, %s179
      %s203 = sphi 0, %s205
      %s206 = sphi 0, %s203
      %s207 = sphi 0, %s206
      %s223 = sphi 0, %s207
      %s229 = sphi 0, %s231
      %s232 = sphi 0, %s229
      %s233 = sphi 0, %s232
      %s249 = sphi 0, %s233
      %s253 = sphi 0, %s253
      %s255 = sphi 0, %s253
      %s256 = sphi 0, %s255
      %s270 = sphi 0, %s256
      %s274 = sphi 0, %s274
      %s276 = sphi 0, %s274
      %s277 = sphi 0, %s276
      %s291 = sphi 0, %s277
      %s297 = sphi 0, %s299
      %s300 = sphi 0, %s297
      %s301 = sphi 0, %s300
      %s317 = sphi 0, %s301
    $region4: #{forward.3} parent=1 // loop_header_branch
      %29 = sbr.rel (%p27) target = $region8
    $region5: #{forward.3} parent=1 // loop_body
      %s31 = ssub.s32 %s26, 1
      %s32 = ssub.s32 %s26, 2
      %s39 = sadd.s32 1, %s34
      %p40 = scmp.ge.s32.totalorder %s39, 4
      %s41 = scalar_select %p40, 0, %s39
      %s42 = sadd.s32 1, %s33
      %s43 = scalar_select %p40, %s42, %s33
      %p44 = scmp.ge.s32.totalorder %s43, 2
      %s45 = scalar_select %p44, 0, %s43
      %s46 = ssub.s32 %s33, %s45
      %p47 = scmp.eq.s32.totalorder %s46, 0
      %s49 = sadd.s32 %s48, 1
      %s50 = scalar_select %p47, %s48, %s49
      %p53 = pneg %p47
      %p54 = scmp.eq.s32.totalorder %s26, 7
      %p55 = por %p53, %p54
      %p56 = scmp.ne.s32.totalorder %s48, %s51
      %p57 = scmp.eq.s32.totalorder %s26, 0
      %p58 = por %p56, %p57
      %p59 = scmp.ne.s32.totalorder %s48, %s51
      %p60 = scmp.eq.s32.totalorder %s31, 7
      %p61 = por %p59, %p60
      %p62 = scmp.ne.s32.totalorder %s51, %s52
      %p63 = scmp.eq.s32.totalorder %s31, 0
      %p64 = por %p62, %p63
      %p65 = scmp.ne.s32.totalorder %s51, %s52
      %p66 = scmp.eq.s32.totalorder %s32, 7
      %p67 = por %p65, %p66
      %p69 = scmp.ne.s32.totalorder %s52, %s68
      %p70 = scmp.eq.s32.totalorder %s32, 0
      %p71 = por %p69, %p70
      %s72 = ssub.s32 %s34, %s41
      %p73 = scmp.eq.s32.totalorder %s72, 0
      %s75 = sadd.s32 %s74, 1
      %s76 = scalar_select %p73, %s74, %s75
      %p79 = pneg %p73
      %p80 = scmp.eq.s32.totalorder %s26, 7
      %p81 = por %p79, %p80
      %p82 = scmp.ne.s32.totalorder %s74, %s77
      %p83 = scmp.eq.s32.totalorder %s26, 0
      %p84 = por %p82, %p83
      %p85 = scmp.ne.s32.totalorder %s74, %s77
      %p86 = scmp.eq.s32.totalorder %s31, 7
      %p87 = por %p85, %p86
      %p88 = scmp.ne.s32.totalorder %s77, %s78
      %p89 = scmp.eq.s32.totalorder %s31, 0
      %p90 = por %p88, %p89
      %p91 = scmp.ne.s32.totalorder %s77, %s78
      %p92 = scmp.eq.s32.totalorder %s32, 7
      %p93 = por %p91, %p92
      %p95 = scmp.ne.s32.totalorder %s78, %s94
      %p96 = scmp.eq.s32.totalorder %s32, 0
      %p97 = por %p95, %p96
      %s98 = ssub.s32 %s34, %s41
      %p99 = scmp.eq.s32.totalorder %s98, 0
      %s101 = sadd.s32 %s100, 1
      %s102 = scalar_select %p99, %s100, %s101
      %p105 = pneg %p99
      %p106 = scmp.eq.s32.totalorder %s26, 7
      %p107 = por %p105, %p106
      %p108 = scmp.ne.s32.totalorder %s100, %s103
      %p109 = scmp.eq.s32.totalorder %s26, 0
      %p110 = por %p108, %p109
      %p111 = scmp.ne.s32.totalorder %s100, %s103
      %p112 = scmp.eq.s32.totalorder %s31, 7
      %p113 = por %p111, %p112
      %p114 = scmp.ne.s32.totalorder %s103, %s104
      %p115 = scmp.eq.s32.totalorder %s31, 0
      %p116 = por %p114, %p115
      %p117 = scmp.ne.s32.totalorder %s103, %s104
      %p118 = scmp.eq.s32.totalorder %s32, 7
      %p119 = por %p117, %p118
      %p121 = scmp.ne.s32.totalorder %s104, %s120
      %p122 = scmp.eq.s32.totalorder %s32, 0
      %p123 = por %p121, %p122
      %s124 = ssub.s32 %s34, %s41
      %p125 = scmp.eq.s32.totalorder %s124, 0
      %s127 = sadd.s32 %s126, 1
      %s128 = scalar_select %p125, %s126, %s127
      %p131 = pneg %p125
      %p132 = scmp.eq.s32.totalorder %s26, 7
      %p133 = por %p131, %p132
      %p134 = scmp.ne.s32.totalorder %s126, %s129
      %p135 = scmp.eq.s32.totalorder %s26, 0
      %p136 = por %p134, %p135
      %p137 = scmp.ne.s32.totalorder %s126, %s129
      %p138 = scmp.eq.s32.totalorder %s31, 7
      %p139 = por %p137, %p138
      %p140 = scmp.ne.s32.totalorder %s129, %s130
      %p141 = scmp.eq.s32.totalorder %s31, 0
      %p142 = por %p140, %p141
      %p143 = scmp.ne.s32.totalorder %s129, %s130
      %p144 = scmp.eq.s32.totalorder %s32, 7
      %p145 = por %p143, %p144
      %p147 = scmp.ne.s32.totalorder %s130, %s146
      %p148 = scmp.eq.s32.totalorder %s32, 0
      %p149 = por %p147, %p148
      %s151 = sadd.s32 %s150, 1
      %p154 = scmp.eq.s32.totalorder %s26, 7
      %p155 = scmp.ne.s32.totalorder %s150, %s152
      %p156 = scmp.eq.s32.totalorder %s26, 0
      %p157 = por %p155, %p156
      %p158 = scmp.ne.s32.totalorder %s150, %s152
      %p159 = scmp.eq.s32.totalorder %s31, 7
      %p160 = por %p158, %p159
      %p161 = scmp.ne.s32.totalorder %s152, %s153
      %p162 = scmp.eq.s32.totalorder %s31, 0
      %p163 = por %p161, %p162
      %p164 = scmp.ne.s32.totalorder %s152, %s153
      %p165 = scmp.eq.s32.totalorder %s32, 7
      %p166 = por %p164, %p165
      %p168 = scmp.ne.s32.totalorder %s153, %s167
      %p169 = scmp.eq.s32.totalorder %s32, 0
      %p170 = por %p168, %p169
      %s171 = ssub.s32 %s33, %s45
      %s172 = ssub.s32 %s34, %s41
      %s173 = sor.u32 %s171, %s172
      %p174 = scmp.eq.s32.totalorder %s173, 0
      %s176 = sadd.s32 %s175, 1
      %s177 = scalar_select %p174, %s175, %s176
      %p180 = pneg %p174
      %p181 = scmp.eq.s32.totalorder %s26, 7
      %p182 = por %p180, %p181
      %p183 = scmp.ne.s32.totalorder %s175, %s178
      %p184 = scmp.eq.s32.totalorder %s26, 0
      %p185 = por %p183, %p184
      %p186 = scmp.ne.s32.totalorder %s175, %s178
      %p187 = scmp.eq.s32.totalorder %s31, 7
      %p188 = por %p186, %p187
      %p189 = scmp.ne.s32.totalorder %s178, %s179
      %p190 = scmp.eq.s32.totalorder %s31, 0
      %p191 = por %p189, %p190
      %p192 = scmp.ne.s32.totalorder %s178, %s179
      %p193 = scmp.eq.s32.totalorder %s32, 7
      %p194 = por %p192, %p193
      %p196 = scmp.ne.s32.totalorder %s179, %s195
      %p197 = scmp.eq.s32.totalorder %s32, 0
      %p198 = por %p196, %p197
      %s199 = ssub.s32 %s33, %s45
      %s200 = ssub.s32 %s34, %s41
      %s201 = sor.u32 %s199, %s200
      %p202 = scmp.eq.s32.totalorder %s201, 0
      %s204 = sadd.s32 %s203, 1
      %s205 = scalar_select %p202, %s203, %s204
      %p208 = pneg %p202
      %p209 = scmp.eq.s32.totalorder %s26, 7
      %p210 = por %p208, %p209
      %p211 = scmp.ne.s32.totalorder %s203, %s206
      %p212 = scmp.eq.s32.totalorder %s26, 0
      %p213 = por %p211, %p212
      %p214 = scmp.ne.s32.totalorder %s203, %s206
      %p215 = scmp.eq.s32.totalorder %s31, 7
      %p216 = por %p214, %p215
      %p217 = scmp.ne.s32.totalorder %s206, %s207
      %p218 = scmp.eq.s32.totalorder %s31, 0
      %p219 = por %p217, %p218
      %p220 = scmp.ne.s32.totalorder %s206, %s207
      %p221 = scmp.eq.s32.totalorder %s32, 7
      %p222 = por %p220, %p221
      %p224 = scmp.ne.s32.totalorder %s207, %s223
      %p225 = scmp.eq.s32.totalorder %s32, 0
      %p226 = por %p224, %p225
      %s227 = ssub.s32 %s33, %s45
      %p228 = scmp.eq.s32.totalorder %s227, 0
      %s230 = sadd.s32 %s229, 1
      %s231 = scalar_select %p228, %s229, %s230
      %p234 = pneg %p228
      %p235 = scmp.eq.s32.totalorder %s26, 7
      %p236 = por %p234, %p235
      %p237 = scmp.ne.s32.totalorder %s229, %s232
      %p238 = scmp.eq.s32.totalorder %s26, 0
      %p239 = por %p237, %p238
      %p240 = scmp.ne.s32.totalorder %s229, %s232
      %p241 = scmp.eq.s32.totalorder %s31, 7
      %p242 = por %p240, %p241
      %p243 = scmp.ne.s32.totalorder %s232, %s233
      %p244 = scmp.eq.s32.totalorder %s31, 0
      %p245 = por %p243, %p244
      %p246 = scmp.ne.s32.totalorder %s232, %s233
      %p247 = scmp.eq.s32.totalorder %s32, 7
      %p248 = por %p246, %p247
      %p250 = scmp.ne.s32.totalorder %s233, %s249
      %p251 = scmp.eq.s32.totalorder %s32, 0
      %p252 = por %p250, %p251
      %s254 = sadd.s32 %s253, 1
      %p257 = scmp.eq.s32.totalorder %s26, 7
      %p258 = scmp.ne.s32.totalorder %s253, %s255
      %p259 = scmp.eq.s32.totalorder %s26, 0
      %p260 = por %p258, %p259
      %p261 = scmp.ne.s32.totalorder %s253, %s255
      %p262 = scmp.eq.s32.totalorder %s31, 7
      %p263 = por %p261, %p262
      %p264 = scmp.ne.s32.totalorder %s255, %s256
      %p265 = scmp.eq.s32.totalorder %s31, 0
      %p266 = por %p264, %p265
      %p267 = scmp.ne.s32.totalorder %s255, %s256
      %p268 = scmp.eq.s32.totalorder %s32, 7
      %p269 = por %p267, %p268
      %p271 = scmp.ne.s32.totalorder %s256, %s270
      %p272 = scmp.eq.s32.totalorder %s32, 0
      %p273 = por %p271, %p272
      %s275 = sadd.s32 %s274, 1
      %p278 = scmp.eq.s32.totalorder %s26, 7
      %p279 = scmp.ne.s32.totalorder %s274, %s276
      %p280 = scmp.eq.s32.totalorder %s26, 0
      %p281 = por %p279, %p280
      %p282 = scmp.ne.s32.totalorder %s274, %s276
      %p283 = scmp.eq.s32.totalorder %s31, 7
      %p284 = por %p282, %p283
      %p285 = scmp.ne.s32.totalorder %s276, %s277
      %p286 = scmp.eq.s32.totalorder %s31, 0
      %p287 = por %p285, %p286
      %p288 = scmp.ne.s32.totalorder %s276, %s277
      %p289 = scmp.eq.s32.totalorder %s32, 7
      %p290 = por %p288, %p289
      %p292 = scmp.ne.s32.totalorder %s277, %s291
      %p293 = scmp.eq.s32.totalorder %s32, 0
      %p294 = por %p292, %p293
      %s295 = ssub.s32 %s33, %s45
      %p296 = scmp.eq.s32.totalorder %s295, 0
      %s298 = sadd.s32 %s297, 1
      %s299 = scalar_select %p296, %s297, %s298
      %p302 = pneg %p296
      %p303 = scmp.eq.s32.totalorder %s26, 7
      %p304 = por %p302, %p303
      %p305 = scmp.ne.s32.totalorder %s297, %s300
      %p306 = scmp.eq.s32.totalorder %s26, 0
      %p307 = por %p305, %p306
      %p308 = scmp.ne.s32.totalorder %s297, %s300
      %p309 = scmp.eq.s32.totalorder %s31, 7
      %p310 = por %p308, %p309
      %p311 = scmp.ne.s32.totalorder %s300, %s301
      %p312 = scmp.eq.s32.totalorder %s31, 0
      %p313 = por %p311, %p312
      %p314 = scmp.ne.s32.totalorder %s300, %s301
      %p315 = scmp.eq.s32.totalorder %s32, 7
      %p316 = por %p314, %p315
      %p318 = scmp.ne.s32.totalorder %s301, %s317
      %p319 = scmp.eq.s32.totalorder %s32, 0
      %p320 = por %p318, %p319
      %p321 = scmp.le.s32.totalorder 1, %s26
      %p322 = scmp.lt.s32.totalorder %s26, 9
      %p323 = pnand %p321, %p322
      %p324 = pneg %p323
      // Predicated region
      $region9: #{forward.3} parent=5 // pred_check
        _
      $region10: #{forward.3} parent=5 // pred_check_branch
        %326 = sbr.rel (%p323) target = $region12
      $region11: #{forward.3} parent=5 // pred_region
        %s327 = ssub.s32 %s26, 1
        // Predicated region
        $region13: #{forward.3} parent=11 // pred_check
          %p328 = pneg %p163
        $region14: #{forward.3} parent=11 // pred_check_branch
          %330 = sbr.rel (%p328) target = $region16
        $region15: #{forward.3} parent=11 // pred_region
          _
        $region16: #{forward.3} parent=11 // pred_fallthru
          _
        // Predicated region
        $region17: #{forward.3} parent=11 // pred_check
          %p331 = pneg %p266
        $region18: #{forward.3} parent=11 // pred_check_branch
          %333 = sbr.rel (%p331) target = $region20
        $region19: #{forward.3} parent=11 // pred_region
          _
        $region20: #{forward.3} parent=11 // pred_fallthru
          _
        // Predicated region
        $region21: #{forward.3} parent=11 // pred_check
          %p334 = pneg %p287
        $region22: #{forward.3} parent=11 // pred_check_branch
          %336 = sbr.rel (%p334) target = $region24
        $region23: #{forward.3} parent=11 // pred_region
          _
        $region24: #{forward.3} parent=11 // pred_fallthru
          _
      $region12: #{forward.3} parent=5 // pred_fallthru
        _
      %p337 = scmp.lt.s32.totalorder %s26, 8
      // Predicated region
      $region25: #{forward.3} parent=5 // pred_check
        %p338 = pneg %p337
      $region26: #{forward.3} parent=5 // pred_check_branch
        %340 = sbr.rel (%p338) target = $region28
      $region27: #{forward.3} parent=5 // pred_region
        // Predicated region
        $region29: #{forward.3} parent=27 // pred_check
          %p341 = pneg %p58
        $region30: #{forward.3} parent=27 // pred_check_branch
          %343 = sbr.rel (%p341) target = $region32
        $region31: #{forward.3} parent=27 // pred_region
          %p344 = scmp.lt.s32.totalorder %s33, 1
          %s345 = scalar_select %p344, %s33, 1
          %s346 = smul.addr %s345, 4
          %s347 = scalar_lea.vmem %s1, %s346
        $region32: #{forward.3} parent=27 // pred_fallthru
          _
        // Predicated region
        $region33: #{forward.3} parent=27 // pred_check
          %p348 = pneg %p84
        $region34: #{forward.3} parent=27 // pred_check_branch
          %350 = sbr.rel (%p348) target = $region36
        $region35: #{forward.3} parent=27 // pred_region
          %p351 = scmp.lt.s32.totalorder %s34, 3
          %s352 = scalar_select %p351, %s34, 3
          %s353 = smul.addr %s352, 4
          %s354 = smul.addr %s353, 4
          %s355 = scalar_lea.vmem %s2, %s354
        $region36: #{forward.3} parent=27 // pred_fallthru
          _
        // Predicated region
        $region37: #{forward.3} parent=27 // pred_check
          %p356 = pneg %p110
        $region38: #{forward.3} parent=27 // pred_check_branch
          %358 = sbr.rel (%p356) target = $region40
        $region39: #{forward.3} parent=27 // pred_region
          %p359 = scmp.lt.s32.totalorder %s34, 3
          %s360 = scalar_select %p359, %s34, 3
          %s361 = scalar_lea.vmem %s3, %s360
        $region40: #{forward.3} parent=27 // pred_fallthru
          _
        // Predicated region
        $region41: #{forward.3} parent=27 // pred_check
          %p362 = pneg %p136
        $region42: #{forward.3} parent=27 // pred_check_branch
          %364 = sbr.rel (%p362) target = $region44
        $region43: #{forward.3} parent=27 // pred_region
          %p365 = scmp.lt.s32.totalorder %s34, 3
          %s366 = scalar_select %p365, %s34, 3
          %s367 = smul.addr %s366, 4
          %s368 = scalar_lea.vmem %s4, %s367
        $region44: #{forward.3} parent=27 // pred_fallthru
          _
        // Predicated region
        $region45: #{forward.3} parent=27 // pred_check
          %p369 = pneg %p185
        $region46: #{forward.3} parent=27 // pred_check_branch
          %371 = sbr.rel (%p369) target = $region48
        $region47: #{forward.3} parent=27 // pred_region
          %p372 = scmp.lt.s32.totalorder %s33, 1
          %s373 = scalar_select %p372, %s33, 1
          %p374 = scmp.lt.s32.totalorder %s34, 3
          %s375 = scalar_select %p374, %s34, 3
          %s376 = smul.addr %s375, 2
          %s377 = smul.addr %s373, 8
          %s378 = sadd.s32 %s376, %s377
          %s379 = smul.addr %s378, 4
          %s380 = scalar_lea.vmem %s6, %s379
        $region48: #{forward.3} parent=27 // pred_fallthru
          _
        // Predicated region
        $region49: #{forward.3} parent=27 // pred_check
          %p381 = pneg %p213
        $region50: #{forward.3} parent=27 // pred_check_branch
          %383 = sbr.rel (%p381) target = $region52
        $region51: #{forward.3} parent=27 // pred_region
          %p384 = scmp.lt.s32.totalorder %s33, 1
          %s385 = scalar_select %p384, %s33, 1
          %p386 = scmp.lt.s32.totalorder %s34, 3
          %s387 = scalar_select %p386, %s34, 3
          %s388 = smul.addr %s387, 2
          %s389 = smul.addr %s385, 8
          %s390 = sadd.s32 %s388, %s389
          %s391 = smul.addr %s390, 4
          %s392 = scalar_lea.vmem %s7, %s391
        $region52: #{forward.3} parent=27 // pred_fallthru
          _
        // Predicated region
        $region53: #{forward.3} parent=27 // pred_check
          %p393 = pneg %p239
        $region54: #{forward.3} parent=27 // pred_check_branch
          %395 = sbr.rel (%p393) target = $region56
        $region55: #{forward.3} parent=27 // pred_region
          %p396 = scmp.lt.s32.totalorder %s33, 1
          %s397 = scalar_select %p396, %s33, 1
          %s398 = scalar_lea.vmem %s8, %s397
        $region56: #{forward.3} parent=27 // pred_fallthru
          _
      $region28: #{forward.3} parent=5 // pred_fallthru
        _
      %p399 = scmp.le.s32.totalorder 1, %s26
      %p400 = scmp.lt.s32.totalorder %s26, 9
      %p401 = pnand %p399, %p400
      %p402 = pneg %p401
      // Predicated region
      $region57: #{forward.3} parent=5 // pred_check
        _
      $region58: #{forward.3} parent=5 // pred_check_branch
        %404 = sbr.rel (%p401) target = $region60
      $region59: #{forward.3} parent=5 // pred_region
        %s405 = ssub.s32 %s26, 1
        %p406 = scmp.lt.s32.totalorder %s35, 1
        %s407 = scalar_select %p406, %s35, 1
        %s408 = smul.addr %s407, 4
        %s409 = scalar_lea.vmem %s1, %s408
        %p410 = pneg %p64
        %p411 = pneg %p61
        %p412 = scmp.lt.s32.totalorder %s36, 3
        %s413 = scalar_select %p412, %s36, 3
        %s414 = smul.addr %s413, 4
        %s415 = smul.addr %s414, 4
        %s416 = scalar_lea.vmem %s2, %s415
        %p417 = pneg %p90
        %p418 = pneg %p87
        %p419 = scmp.lt.s32.totalorder %s36, 3
        %s420 = scalar_select %p419, %s36, 3
        %s421 = scalar_lea.vmem %s3, %s420
        %p422 = pneg %p116
        %p423 = pneg %p113
        %p424 = scmp.lt.s32.totalorder %s36, 3
        %s425 = scalar_select %p424, %s36, 3
        %s426 = smul.addr %s425, 4
        %s427 = scalar_lea.vmem %s4, %s426
        %p428 = pneg %p142
        %p429 = pneg %p139
        %p430 = pneg %p163
        %p431 = pneg %p160
        %p432 = scmp.lt.s32.totalorder %s35, 1
        %s433 = scalar_select %p432, %s35, 1
        %p434 = scmp.lt.s32.totalorder %s36, 3
        %s435 = scalar_select %p434, %s36, 3
        %s436 = smul.addr %s435, 2
        %s437 = smul.addr %s433, 8
        %s438 = sadd.s32 %s436, %s437
        %s439 = smul.addr %s438, 4
        %s440 = scalar_lea.vmem %s6, %s439
        %p441 = pneg %p191
        %p442 = pneg %p188
        %p443 = scmp.lt.s32.totalorder %s35, 1
        %s444 = scalar_select %p443, %s35, 1
        %p445 = scmp.lt.s32.totalorder %s36, 3
        %s446 = scalar_select %p445, %s36, 3
        %s447 = smul.addr %s446, 2
        %s448 = smul.addr %s444, 8
        %s449 = sadd.s32 %s447, %s448
        %s450 = smul.addr %s449, 4
        %s451 = scalar_lea.vmem %s7, %s450
        %p452 = pneg %p219
        %p453 = pneg %p216
        %p454 = scmp.lt.s32.totalorder %s35, 1
        %s455 = scalar_select %p454, %s35, 1
        %s456 = scalar_lea.vmem %s8, %s455
        %p457 = pneg %p245
        %p458 = pneg %p242
        %p459 = pneg %p266
        %p460 = pneg %p263
        %p461 = pneg %p287
        %p462 = pneg %p284
        %p463 = pneg %p313
        %p464 = pneg %p310
        %s465 = sand.u32 %s300, 1
        %s466 = scalar_lea.sflag [#allocation6], %s465
        %s467 = sand.u32 %s300, 1
        %s468 = scalar_lea.vmem [#allocation5], %s467
        %p469 = scmp.lt.s32.totalorder %s35, 1
        %s470 = scalar_select %p469, %s35, 1
        %s471 = smul.addr %s470, 4
        %s472 = scalar_lea.vmem %s1, %s471
        %p473 = scmp.lt.s32.totalorder %s36, 3
        %s474 = scalar_select %p473, %s36, 3
        %s475 = smul.addr %s474, 4
        %s476 = smul.addr %s475, 4
        %s477 = scalar_lea.vmem %s2, %s476
        %p478 = scmp.lt.s32.totalorder %s36, 3
        %s479 = scalar_select %p478, %s36, 3
        %s480 = scalar_lea.vmem %s3, %s479
        %p481 = scmp.lt.s32.totalorder %s36, 3
        %s482 = scalar_select %p481, %s36, 3
        %s483 = smul.addr %s482, 4
        %s484 = scalar_lea.vmem %s4, %s483
        %p485 = scmp.lt.s32.totalorder %s35, 1
        %s486 = scalar_select %p485, %s35, 1
        %p487 = scmp.lt.s32.totalorder %s36, 3
        %s488 = scalar_select %p487, %s36, 3
        %s489 = smul.addr %s488, 2
        %s490 = smul.addr %s486, 8
        %s491 = sadd.s32 %s489, %s490
        %s492 = smul.addr %s491, 4
        %s493 = scalar_lea.vmem %s6, %s492
        %p494 = scmp.lt.s32.totalorder %s35, 1
        %s495 = scalar_select %p494, %s35, 1
        %p496 = scmp.lt.s32.totalorder %s36, 3
        %s497 = scalar_select %p496, %s36, 3
        %s498 = smul.addr %s497, 2
        %s499 = smul.addr %s495, 8
        %s500 = sadd.s32 %s498, %s499
        %s501 = smul.addr %s500, 4
        %s502 = scalar_lea.vmem %s7, %s501
        %p503 = scmp.lt.s32.totalorder %s35, 1
        %s504 = scalar_select %p503, %s35, 1
        %s505 = scalar_lea.vmem %s8, %s504
        %v507 = vld [vmem:[%s472] sm:$0xf]
        %v508 = vld [vmem:[%s477] sm:$0xf]
        %v509 = vld [vmem:[%s477 + $0x4] sm:$0xf]
        %v510 = vld [vmem:[%s477 + $0x8] sm:$0xf]
        %v511 = vld [vmem:[%s477 + $0xc] sm:$0xf]
        %v512 = vld [vmem:[%s480] sm:$0x1]
        %v514 = vlaneseq
        %v515 = vshrl.u32 %v514, 7
        %v516 = vsub.s32 0, %v515
        %v517 = vrot.slane %v512, %v516
        %v523 = vunpack.c.l.b16 %v508
        %v524 = vunpack.c.l.b16 %v509
        %v525 = vunpack.c.l.b16 %v510
        %v526 = vunpack.c.l.b16 %v511
        %v527 = vpack.c.b16 %v524, %v523
        %v528 = vpack.c.b16 %v526, %v525
        %vm531 = vcmask 261120
        %v533 = vsel %vm531, %v507, 0
        %535 = vmatprep.subr.bf16.mxu0 0
        %536 = vmatpush1.bf16.msra.mxu0 %v527
        %537 = vmatprep.subr.bf16.mxu0 0
        %538 = vmatpush1.bf16.msra.mxu0 %v528
        %539 = vmatprep.subr.bf16.mxu0 0
        %540 = vmatpush1.bf16.msra.mxu0 0
        %541 = vmatprep.subr.bf16.mxu0 0
        %542 = vmatpush1.bf16.msra.mxu0 0
        %543 = vmatprep.subr.bf16.mxu0 0
        %544 = vmatpush1.bf16.msra.mxu0 0
        %545 = vmatprep.subr.bf16.mxu0 0
        %546 = vmatpush1.bf16.msra.mxu0 0
        %547 = vmatprep.subr.bf16.mxu0 0
        %548 = vmatpush1.bf16.msra.mxu0 0
        %549 = vmatprep.subr.bf16.mxu0 0
        %550 = vmatpush1.bf16.msra.mxu0 0
        %551 = vmatprep.subr.bf16.mxu0 0
        %552 = vmatpush1.bf16.msra.mxu0 0
        %553 = vmatprep.subr.bf16.mxu0 0
        %554 = vmatpush1.bf16.msra.mxu0 0
        %555 = vmatprep.subr.bf16.mxu0 0
        %556 = vmatpush1.bf16.msra.mxu0 0
        %557 = vmatprep.subr.bf16.mxu0 0
        %558 = vmatpush1.bf16.msra.mxu0 0
        %559 = vmatprep.subr.bf16.mxu0 0
        %560 = vmatpush1.bf16.msra.mxu0 0
        %561 = vmatprep.subr.bf16.mxu0 0
        %562 = vmatpush1.bf16.msra.mxu0 0
        %563 = vmatprep.subr.bf16.mxu0 0
        %564 = vmatpush1.bf16.msra.mxu0 0
        %565 = vmatprep.subr.bf16.mxu0 0
        %566 = vmatpush1.bf16.msra.mxu0 0
        %567 = vmatprep.mubr.bf16.mxu0 0
        %568 = vmatmul.mubr.bf16.gmra.mrb[0].mxu0 %v533
        %v569 = vpop.f32.mrb[0].mxu0
        %v570 = vadd.f32 %v517, %v569
        %v571 = vpop.f32.mrb[0].mxu0
        %v572 = vpop.f32.mrb[0].mxu0
        %v573 = vpop.f32.mrb[0].mxu0
        %574 = vdwg.mxu0
        %v575 = vpack.c.bf16 %v570, %v570
        %v576 = vld [vmem:[%s493] sm:$0xf]
        %v577 = vld [vmem:[%s493 + $0x4] sm:$0xf]
        %v578 = vld [vmem:[%s502] sm:$0xf]
        %v579 = vld [vmem:[%s502 + $0x4] sm:$0xf]
        %v580 = vld [vmem:[%s505] sm:$0x1]
        %v583 = vunpack.c.l.b16 %v576
        %v584 = vunpack.c.l.b16 %v577
        %v585 = vpack.c.b16 %v584, %v583
        %vm586 = vcmask 64512
        %v588 = vsel %vm586, %v575, 0
        %v591 = vsel %vm586, %v585, 0
        %593 = vmatprep.subr.bf16.mxu0 0
        %594 = vmatpush1.bf16.xpose.msra.mxu0 %v591
        %595 = vmatprep.subr.bf16.mxu0 0
        %596 = vmatpush1.bf16.xpose.msra.mxu0 0
        %597 = vmatprep.subr.bf16.mxu0 0
        %598 = vmatpush1.bf16.xpose.msra.mxu0 0
        %599 = vmatprep.subr.bf16.mxu0 0
        %600 = vmatpush1.bf16.xpose.msra.mxu0 0
        %601 = vmatprep.subr.bf16.mxu0 0
        %602 = vmatpush1.bf16.xpose.msra.mxu0 0
        %603 = vmatprep.subr.bf16.mxu0 0
        %604 = vmatpush1.bf16.xpose.msra.mxu0 0
        %605 = vmatprep.subr.bf16.mxu0 0
        %606 = vmatpush1.bf16.xpose.msra.mxu0 0
        %607 = vmatprep.subr.bf16.mxu0 0
        %608 = vmatpush1.bf16.xpose.msra.mxu0 0
        %609 = vmatprep.subr.bf16.mxu0 0
        %610 = vmatpush1.bf16.xpose.msra.mxu0 0
        %611 = vmatprep.subr.bf16.mxu0 0
        %612 = vmatpush1.bf16.xpose.msra.mxu0 0
        %613 = vmatprep.subr.bf16.mxu0 0
        %614 = vmatpush1.bf16.xpose.msra.mxu0 0
        %615 = vmatprep.subr.bf16.mxu0 0
        %616 = vmatpush1.bf16.xpose.msra.mxu0 0
        %617 = vmatprep.subr.bf16.mxu0 0
        %618 = vmatpush1.bf16.xpose.msra.mxu0 0
        %619 = vmatprep.subr.bf16.mxu0 0
        %620 = vmatpush1.bf16.xpose.msra.mxu0 0
        %621 = vmatprep.subr.bf16.mxu0 0
        %622 = vmatpush1.bf16.xpose.msra.mxu0 0
        %623 = vmatprep.subr.bf16.mxu0 0
        %624 = vmatpush1.bf16.xpose.msra.mxu0 0
        %625 = vmatprep.mubr.bf16.mxu0 0
        %626 = vmatmul.mubr.bf16.gmra.mrb[0].mxu0 %v588
        %v627 = vpop.f32.mrb[0].mxu0
        %v628 = vadd.f32 0.0, %v627
        %v629 = vpop.f32.mrb[0].mxu0
        %v630 = vpop.f32.mrb[0].mxu0
        %v631 = vpop.f32.mrb[0].mxu0
        %632 = vdwg.mxu0
        %v633 = vmul.f32 %v628, 0.35355338
        %v635 = vlaneseq
        %v636 = vshrl.u32 %v635, 7
        %v637 = vsub.s32 0, %v636
        %v638 = vrot.slane %v580, %v637
        %v640 = vadd.f32 %v633, %v638
        %642 = vrot.lane.b32.xlu0 %v575, 120
        %v643 = vpop.permute.xlu0 %642
        %v645 = vsel %vm586, %v643, 0
        %647 = vmatprep.subr.bf16.mxu0 0
        %648 = vmatpush1.bf16.xpose.msra.mxu0 %v645
        %649 = vmatprep.subr.bf16.mxu0 0
        %650 = vmatpush1.bf16.xpose.msra.mxu0 0
        %651 = vmatprep.subr.bf16.mxu0 0
        %652 = vmatpush1.bf16.xpose.msra.mxu0 0
        %653 = vmatprep.subr.bf16.mxu0 0
        %654 = vmatpush1.bf16.xpose.msra.mxu0 0
        %655 = vmatprep.subr.bf16.mxu0 0
        %656 = vmatpush1.bf16.xpose.msra.mxu0 0
        %657 = vmatprep.subr.bf16.mxu0 0
        %658 = vmatpush1.bf16.xpose.msra.mxu0 0
        %659 = vmatprep.subr.bf16.mxu0 0
        %660 = vmatpush1.bf16.xpose.msra.mxu0 0
        %661 = vmatprep.subr.bf16.mxu0 0
        %662 = vmatpush1.bf16.xpose.msra.mxu0 0
        %663 = vmatprep.subr.bf16.mxu0 0
        %664 = vmatpush1.bf16.xpose.msra.mxu0 0
        %665 = vmatprep.subr.bf16.mxu0 0
        %666 = vmatpush1.bf16.xpose.msra.mxu0 0
        %667 = vmatprep.subr.bf16.mxu0 0
        %668 = vmatpush1.bf16.xpose.msra.mxu0 0
        %669 = vmatprep.subr.bf16.mxu0 0
        %670 = vmatpush1.bf16.xpose.msra.mxu0 0
        %671 = vmatprep.subr.bf16.mxu0 0
        %672 = vmatpush1.bf16.xpose.msra.mxu0 0
        %673 = vmatprep.subr.bf16.mxu0 0
        %674 = vmatpush1.bf16.xpose.msra.mxu0 0
        %675 = vmatprep.subr.bf16.mxu0 0
        %676 = vmatpush1.bf16.xpose.msra.mxu0 0
        %677 = vmatprep.subr.bf16.mxu0 0
        %678 = vmatpush1.bf16.xpose.msra.mxu0 0
        %679 = vmatprep.mubr.bf16.mxu0 0
        %680 = vmatmul.mubr.bf16.gmra.mrb[0].mxu0 %v588
        %v681 = vpop.f32.mrb[0].mxu0
        %v682 = vadd.f32 0.0, %v681
        %v683 = vpop.f32.mrb[0].mxu0
        %v684 = vpop.f32.mrb[0].mxu0
        %v685 = vpop.f32.mrb[0].mxu0
        %686 = vdwg.mxu0
        %v687 = vmul.f32 %v682, 0.35355338
        %688 = vrot.lane.b32.xlu0 %v638, 112
        %v689 = vpop.permute.xlu0 %688
        %v691 = vadd.f32 %v687, %v689
        %vm692 = vcmask 130048
        %v693 = vsel %vm692, %v640, -inf
        %694 = vmax.xlane.f32.xlu0 %v693
        %v695 = vpop.xlane.xlu0 %694
        %v696 = vsel %vm586, %v691, -inf
        %697 = vmax.xlane.f32.xlu0 %v696
        %v698 = vpop.xlane.xlu0 %697
        %v699 = vmax.f32 %v695, %v698
        %v700 = vsub.f32 %v640, %v699
        %v701 = vmul.f32 %v700, 1.442695
        %v702 = vpow.pop %v701
        %v703 = vsub.f32 %v691, %v699
        %v704 = vmul.f32 %v703, 1.442695
        %v705 = vpow.pop %v704
        %v706 = vsel %vm692, %v702, 0.0
        %707 = vadd.xlane.f32.xlu0 %v706
        %v708 = vpop.xlane.xlu0 %707
        %v709 = vsel %vm586, %v705, 0.0
        %710 = vadd.xlane.f32.xlu0 %v709
        %v711 = vpop.xlane.xlu0 %710
        %v712 = vadd.f32 %v708, %v711
        %v713 = vrcp.pop %v712
        %v714 = vpack.c.bf16 %v702, %v702
        %v715 = vpack.c.bf16 %v705, %v705
        %716 = vrot.lane.b32.xlu0 %v575, 112
        %v717 = vpop.permute.xlu0 %716
        %v719 = vsel %vm586, %v715, 0
        %vm721 = vcmask 1043456
        %v723 = vsel %vm721, %v717, 0
        %725 = vmatprep.subr.bf16.mxu0 0
        %726 = vmatpush1.bf16.msra.mxu0 %v723
        %727 = vmatprep.subr.bf16.mxu0 0
        %728 = vmatpush1.bf16.msra.mxu0 0
        %729 = vmatprep.subr.bf16.mxu0 0
        %730 = vmatpush1.bf16.msra.mxu0 0
        %731 = vmatprep.subr.bf16.mxu0 0
        %732 = vmatpush1.bf16.msra.mxu0 0
        %733 = vmatprep.subr.bf16.mxu0 0
        %734 = vmatpush1.bf16.msra.mxu0 0
        %735 = vmatprep.subr.bf16.mxu0 0
        %736 = vmatpush1.bf16.msra.mxu0 0
        %737 = vmatprep.subr.bf16.mxu0 0
        %738 = vmatpush1.bf16.msra.mxu0 0
        %739 = vmatprep.subr.bf16.mxu0 0
        %740 = vmatpush1.bf16.msra.mxu0 0
        %741 = vmatprep.subr.bf16.mxu0 0
        %742 = vmatpush1.bf16.msra.mxu0 0
        %743 = vmatprep.subr.bf16.mxu0 0
        %744 = vmatpush1.bf16.msra.mxu0 0
        %745 = vmatprep.subr.bf16.mxu0 0
        %746 = vmatpush1.bf16.msra.mxu0 0
        %747 = vmatprep.subr.bf16.mxu0 0
        %748 = vmatpush1.bf16.msra.mxu0 0
        %749 = vmatprep.subr.bf16.mxu0 0
        %750 = vmatpush1.bf16.msra.mxu0 0
        %751 = vmatprep.subr.bf16.mxu0 0
        %752 = vmatpush1.bf16.msra.mxu0 0
        %753 = vmatprep.subr.bf16.mxu0 0
        %754 = vmatpush1.bf16.msra.mxu0 0
        %755 = vmatprep.subr.bf16.mxu0 0
        %756 = vmatpush1.bf16.msra.mxu0 0
        %757 = vmatprep.mubr.bf16.mxu0 0
        %758 = vmatmul.mubr.bf16.gmra.mrb[0].mxu0 %v719
        %v759 = vpop.f32.mrb[0].mxu0
        %v760 = vadd.f32 0.0, %v759
        %v761 = vpop.f32.mrb[0].mxu0
        %v762 = vpop.f32.mrb[0].mxu0
        %v763 = vpop.f32.mrb[0].mxu0
        %764 = vdwg.mxu0
        %v767 = vunpack.c.l.b16 %v578
        %v768 = vunpack.c.l.b16 %v579
        %v769 = vpack.c.b16 %v768, %v767
        %v772 = vsel %vm692, %v714, 0
        %774 = vmatprep.subr.bf16.mxu0 0
        %775 = vmatpush1.bf16.msra.mxu0 %v769
        %776 = vmatprep.subr.bf16.mxu0 0
        %777 = vmatpush1.bf16.msra.mxu0 0
        %778 = vmatprep.subr.bf16.mxu0 0
        %779 = vmatpush1.bf16.msra.mxu0 0
        %780 = vmatprep.subr.bf16.mxu0 0
        %781 = vmatpush1.bf16.msra.mxu0 0
        %782 = vmatprep.subr.bf16.mxu0 0
        %783 = vmatpush1.bf16.msra.mxu0 0
        %784 = vmatprep.subr.bf16.mxu0 0
        %785 = vmatpush1.bf16.msra.mxu0 0
        %786 = vmatprep.subr.bf16.mxu0 0
        %787 = vmatpush1.bf16.msra.mxu0 0
        %788 = vmatprep.subr.bf16.mxu0 0
        %789 = vmatpush1.bf16.msra.mxu0 0
        %790 = vmatprep.subr.bf16.mxu0 0
        %791 = vmatpush1.bf16.msra.mxu0 0
        %792 = vmatprep.subr.bf16.mxu0 0
        %793 = vmatpush1.bf16.msra.mxu0 0
        %794 = vmatprep.subr.bf16.mxu0 0
        %795 = vmatpush1.bf16.msra.mxu0 0
        %796 = vmatprep.subr.bf16.mxu0 0
        %797 = vmatpush1.bf16.msra.mxu0 0
        %798 = vmatprep.subr.bf16.mxu0 0
        %799 = vmatpush1.bf16.msra.mxu0 0
        %800 = vmatprep.subr.bf16.mxu0 0
        %801 = vmatpush1.bf16.msra.mxu0 0
        %802 = vmatprep.subr.bf16.mxu0 0
        %803 = vmatpush1.bf16.msra.mxu0 0
        %804 = vmatprep.subr.bf16.mxu0 0
        %805 = vmatpush1.bf16.msra.mxu0 0
        %806 = vmatprep.mubr.bf16.mxu0 0
        %807 = vmatmul.mubr.bf16.gmra.mrb[0].mxu0 %v772
        %v808 = vpop.f32.mrb[0].mxu0
        %v809 = vadd.f32 %v760, %v808
        %v810 = vpop.f32.mrb[0].mxu0
        %v811 = vpop.f32.mrb[0].mxu0
        %v812 = vpop.f32.mrb[0].mxu0
        %813 = vdwg.mxu0
        %v814 = vmul.f32 %v809, %v713
        %p815 = scmp.eq.s32.totalorder %s36, 0
        // Predicated region
        $region61: #{forward.3} parent=59 // pred_check
          %p816 = pneg %p815
        $region62: #{forward.3} parent=59 // pred_check_branch
          %818 = sbr.rel (%p816) target = $region64
        $region63: #{forward.3} parent=59 // pred_region
          %v819 = vunpack.c.l.bf16 %v507
          %v820 = vld [vmem:[%s5] sm:$0x1]
          %v822 = vlaneseq
          %v823 = vshrl.u32 %v822, 7
          %v824 = vsub.s32 0, %v823
          %v825 = vrot.slane %v820, %v824
          %v827 = vadd.f32 %v819, %v825
          %828 = vst.msk [vmem:[#allocation2] sm:$0xff] %vm531, %v827
        $region64: #{forward.3} parent=59 // pred_fallthru
          _
        %v829 = vld [vmem:[#allocation2] sm:$0xff]
        %v830 = vpack.c.bf16 %v814, %v814
        %v831 = vld [vmem:[%s484] sm:$0xf]
        %v833 = vsel %vm586, %v830, 0
        %v836 = vsel %vm721, %v831, 0
        %838 = vmatprep.subr.bf16.mxu0 0
        %839 = vmatpush1.bf16.msra.mxu0 %v836
        %840 = vmatprep.subr.bf16.mxu0 0
        %841 = vmatpush1.bf16.msra.mxu0 0
        %842 = vmatprep.subr.bf16.mxu0 0
        %843 = vmatpush1.bf16.msra.mxu0 0
        %844 = vmatprep.subr.bf16.mxu0 0
        %845 = vmatpush1.bf16.msra.mxu0 0
        %846 = vmatprep.subr.bf16.mxu0 0
        %847 = vmatpush1.bf16.msra.mxu0 0
        %848 = vmatprep.subr.bf16.mxu0 0
        %849 = vmatpush1.bf16.msra.mxu0 0
        %850 = vmatprep.subr.bf16.mxu0 0
        %851 = vmatpush1.bf16.msra.mxu0 0
        %852 = vmatprep.subr.bf16.mxu0 0
        %853 = vmatpush1.bf16.msra.mxu0 0
        %854 = vmatprep.subr.bf16.mxu0 0
        %855 = vmatpush1.bf16.msra.mxu0 0
        %856 = vmatprep.subr.bf16.mxu0 0
        %857 = vmatpush1.bf16.msra.mxu0 0
        %858 = vmatprep.subr.bf16.mxu0 0
        %859 = vmatpush1.bf16.msra.mxu0 0
        %860 = vmatprep.subr.bf16.mxu0 0
        %861 = vmatpush1.bf16.msra.mxu0 0
        %862 = vmatprep.subr.bf16.mxu0 0
        %863 = vmatpush1.bf16.msra.mxu0 0
        %864 = vmatprep.subr.bf16.mxu0 0
        %865 = vmatpush1.bf16.msra.mxu0 0
        %866 = vmatprep.subr.bf16.mxu0 0
        %867 = vmatpush1.bf16.msra.mxu0 0
        %868 = vmatprep.subr.bf16.mxu0 0
        %869 = vmatpush1.bf16.msra.mxu0 0
        %870 = vmatprep.mubr.bf16.mxu0 0
        %871 = vmatmul.mubr.bf16.gmra.mrb[0].mxu0 %v833
        %v872 = vpop.f32.mrb[0].mxu0
        %v873 = vadd.f32 0.0, %v872
        %v874 = vpop.f32.mrb[0].mxu0
        %v875 = vpop.f32.mrb[0].mxu0
        %v876 = vpop.f32.mrb[0].mxu0
        %877 = vdwg.mxu0
        %v878 = vadd.f32 %v829, %v873
        %879 = vst.msk [vmem:[#allocation2] sm:$0xff] %vm531, %v878
        %p880 = scmp.eq.s32.totalorder %s36, 3
        // Predicated region
        $region65: #{forward.3} parent=59 // pred_check
          %p881 = pneg %p880
        $region66: #{forward.3} parent=59 // pred_check_branch
          %883 = sbr.rel (%p881) target = $region68
        $region67: #{forward.3} parent=59 // pred_region
          %s884 = smul.u32 %s35, 2
          %s885 = sld [smem:[#allocation4 + %s884]]
          %s886 = scalar_lea.vmem [#allocation2], %s885
          %v887 = vld [vmem:[%s886] sm:$0x1]
          %s888 = sadd.s32 %s884, 1
          %s889 = sld [smem:[#allocation4 + %s888]]
          %s890 = scalar_lea.vmem [#allocation2], %s889
          %v891 = vld [vmem:[%s890] sm:$0x1]
          %893 = vrot.lane.b32.xlu0 %v891, 32
          %v894 = vpop.permute.xlu0 %893
          %v896 = vsel %vm531, %v887, %v894
          %v897 = vpack.c.bf16 %v896, %v896
          %v898 = vld [vmem:[%s9] sm:$0xf]
          %v899 = vld [vmem:[%s9 + $0x4] sm:$0xf]
          %v900 = vld [vmem:[%s9 + $0x8] sm:$0xf]
          %v901 = vld [vmem:[%s9 + $0xc] sm:$0xf]
          %v902 = vld [vmem:[%s9 + $0x10] sm:$0xf]
          %v903 = vld [vmem:[%s9 + $0x14] sm:$0xf]
          %v904 = vld [vmem:[%s9 + $0x18] sm:$0xf]
          %v905 = vld [vmem:[%s9 + $0x1c] sm:$0xf]
          %v906 = vld [vmem:[%s10] sm:$0x1]
          %v915 = vunpack.c.l.b16 %v898
          %v916 = vunpack.c.l.b16 %v899
          %v917 = vunpack.c.l.b16 %v900
          %v918 = vunpack.c.l.b16 %v901
          %v919 = vunpack.c.l.b16 %v902
          %v920 = vunpack.c.l.b16 %v903
          %v921 = vunpack.c.l.b16 %v904
          %v922 = vunpack.c.l.b16 %v905
          %v923 = vpack.c.b16 %v916, %v915
          %v924 = vpack.c.b16 %v918, %v917
          %v925 = vpack.c.b16 %v920, %v919
          %v926 = vpack.c.b16 %v922, %v921
          %vm931 = vcmask 523264
          %v933 = vsel %vm931, %v897, 0
          %935 = vmatprep.subr.bf16.mxu0 0
          %936 = vmatpush1.bf16.msra.mxu0 %v923
          %937 = vmatprep.subr.bf16.mxu0 0
          %938 = vmatpush1.bf16.msra.mxu0 %v924
          %939 = vmatprep.subr.bf16.mxu0 0
          %940 = vmatpush1.bf16.msra.mxu0 %v925
          %941 = vmatprep.subr.bf16.mxu0 0
          %942 = vmatpush1.bf16.msra.mxu0 %v926
          %943 = vmatprep.subr.bf16.mxu0 0
          %944 = vmatpush1.bf16.msra.mxu0 0
          %945 = vmatprep.subr.bf16.mxu0 0
          %946 = vmatpush1.bf16.msra.mxu0 0
          %947 = vmatprep.subr.bf16.mxu0 0
          %948 = vmatpush1.bf16.msra.mxu0 0
          %949 = vmatprep.subr.bf16.mxu0 0
          %950 = vmatpush1.bf16.msra.mxu0 0
          %951 = vmatprep.subr.bf16.mxu0 0
          %952 = vmatpush1.bf16.msra.mxu0 0
          %953 = vmatprep.subr.bf16.mxu0 0
          %954 = vmatpush1.bf16.msra.mxu0 0
          %955 = vmatprep.subr.bf16.mxu0 0
          %956 = vmatpush1.bf16.msra.mxu0 0
          %957 = vmatprep.subr.bf16.mxu0 0
          %958 = vmatpush1.bf16.msra.mxu0 0
          %959 = vmatprep.subr.bf16.mxu0 0
          %960 = vmatpush1.bf16.msra.mxu0 0
          %961 = vmatprep.subr.bf16.mxu0 0
          %962 = vmatpush1.bf16.msra.mxu0 0
          %963 = vmatprep.subr.bf16.mxu0 0
          %964 = vmatpush1.bf16.msra.mxu0 0
          %965 = vmatprep.subr.bf16.mxu0 0
          %966 = vmatpush1.bf16.msra.mxu0 0
          %967 = vmatprep.mubr.bf16.mxu0 0
          %968 = vmatmul.mubr.bf16.gmra.mrb[0].mxu0 %v933
          %v969 = vpop.f32.mrb[0].mxu0
          %v970 = vadd.f32 %v906, %v969
          %v971 = vpop.f32.mrb[0].mxu0
          %v972 = vpop.f32.mrb[0].mxu0
          %v973 = vpop.f32.mrb[0].mxu0
          %974 = vdwg.mxu0
          %vm975 = vcmask 16384
          %976 = vst.msk [vmem:[%s468] sm:$0x1] %vm975, %v970
        $region68: #{forward.3} parent=59 // pred_fallthru
          _
        %s977 = sand.u32 %s300, 1
        %s978 = scalar_lea.sflag [#allocation6], %s977
        %s979 = sand.u32 %s300, 1
        %s980 = scalar_lea.vmem [#allocation5], %s979
        // Predicated region
        $region69: #{forward.3} parent=59 // pred_check
          %p981 = pneg %p310
        $region70: #{forward.3} parent=59 // pred_check_branch
          %983 = sbr.rel (%p981) target = $region72
        $region71: #{forward.3} parent=59 // pred_region
          %s985 = ssub.s32 16, 16
          %986 = vsyncadd %s978, %s985
          %s987 = smul.addr %s35, 16
          %s988 = scalar_lea.hbm %s11, %s987
          %s990 = sshll.u32 %s980, 4
          %s991 = int_to_ptr.vmem [resolvable:$true] %s990
          %993 = dma.vmem_to_hbm [thread:$0]  %s991, 16, %s988, %s978
        $region72: #{forward.3} parent=59 // pred_fallthru
          _
      $region60: #{forward.3} parent=5 // pred_fallthru
        _
      %p994 = scmp.le.s32.totalorder 2, %s26
      // Predicated region
      $region73: #{forward.3} parent=5 // pred_check
        %p995 = pneg %p994
      $region74: #{forward.3} parent=5 // pred_check_branch
        %997 = sbr.rel (%p995) target = $region76
      $region75: #{forward.3} parent=5 // pred_region
        %s998 = ssub.s32 %s26, 2
        // Predicated region
        $region77: #{forward.3} parent=75 // pred_check
          %p999 = pneg %p316
        $region78: #{forward.3} parent=75 // pred_check_branch
          %1001 = sbr.rel (%p999) target = $region80
        $region79: #{forward.3} parent=75 // pred_region
          %s1002 = sand.u32 %s301, 1
          %s1003 = scalar_lea.sflag [#allocation6], %s1002
          %s1004 = sand.u32 %s301, 1
          %s1005 = scalar_lea.vmem [#allocation5], %s1004
          %1006 = dma.done %s1003, 16
        $region80: #{forward.3} parent=75 // pred_fallthru
          _
      $region76: #{forward.3} parent=5 // pred_fallthru
        _
    $region6: #{forward.3} parent=1 // loop_footer
      %s30 = sadd.s32 1, %s26
    $region7: #{forward.3} parent=1 // loop_footer_branch
      %25 = sbr.rel target = $region3
    $region8: #{forward.3} parent=1 // loop_exit
      _
    %1007 = vsyncpa [#allocation6], 1
    %s1008 = scalar_lea.sflag [#allocation6], 1
    %1009 = vsyncpa %s1008, 1

// kernel: forward.2
$region0: #{forward.2}
  #allocation0 [shape = 'u32[]', space=smem, size = 0x4, offset = 0x4, fixed_abs, tag = 'smem constant byte address 0x4 - core index']
  #allocation1 [shape = 'u32[144,128]{1,0:T(1,128)}', space=vmem, size = 0x12000, scoped, tag = 'internal scratch']
  %s0 = inlined_call_operand.vmem [shape: f32[4,2,768], index: 0, kind: input, shape index: {}]
  %s1 = inlined_call_operand.vmem [shape: bf16[768,832], index: 1, kind: input, shape index: {}]
  %s2 = inlined_call_operand.vmem [shape: f32[1,832], index: 2, kind: input, shape index: {}]
  %s3 = inlined_call_operand.vmem [shape: bf16[208,64], index: 3, kind: input, shape index: {}]
  %s4 = inlined_call_operand.vmem [shape: f32[1,64], index: 4, kind: input, shape index: {}]
  %s5 = inlined_call_operand.vmem [shape: bf16[64,128], index: 5, kind: input, shape index: {}]
  %s6 = inlined_call_operand.vmem [shape: f32[1,128], index: 6, kind: input, shape index: {}]
  %s7 = inlined_call_operand.vmem [shape: bf16[4,8,128], index: 7, kind: output, shape index: {}]
  %s8 = sld [smem:[#allocation0]]
  $region61: #{forward.2} parent=0
    _
  %s10 = ssub.s32 1, %s8
  %s11 = scalar_select 0, %s10, %s8
  loop: start=0, step=1, limit=6
  $region2: #{forward.2} parent=0 // loop_pre_header
    _
  $region3: #{forward.2} parent=0 // loop_header
    %s13 = sphi 0, %s17
    %p14 = scmp.ge.s32.totalorder %s13, 6
    %s23 = sphi 0, %s25
    %s26 = sphi 0, %s23
    %s27 = sphi 0, %s26
    %s43 = sphi 0, %s27
    %s47 = sphi 0, %s47
    %s49 = sphi 0, %s47
    %s50 = sphi 0, %s49
    %s64 = sphi 0, %s50
    %s68 = sphi 0, %s68
    %s70 = sphi 0, %s68
    %s71 = sphi 0, %s70
    %s85 = sphi 0, %s71
    %s89 = sphi 0, %s89
    %s91 = sphi 0, %s89
    %s92 = sphi 0, %s91
    %s106 = sphi 0, %s92
    %s110 = sphi 0, %s110
    %s112 = sphi 0, %s110
    %s113 = sphi 0, %s112
    %s127 = sphi 0, %s113
    %s131 = sphi 0, %s131
    %s133 = sphi 0, %s131
    %s134 = sphi 0, %s133
    %s148 = sphi 0, %s134
    %s152 = sphi 0, %s152
    %s154 = sphi 0, %s152
    %s155 = sphi 0, %s154
    %s169 = sphi 0, %s155
    %s175 = sphi 0, %s177
    %s178 = sphi 0, %s175
    %s179 = sphi 0, %s178
    %s195 = sphi 0, %s179
  $region4: #{forward.2} parent=0 // loop_header_branch
    %16 = sbr.rel (%p14) target = $region8
  $region5: #{forward.2} parent=0 // loop_body
    %s18 = ssub.s32 %s13, 1
    %s19 = ssub.s32 %s13, 2
    %s20 = sadd.s32 %s13, 1
    %s21 = ssub.s32 %s13, %s20
    %p22 = scmp.eq.s32.totalorder %s21, 0
    %s24 = sadd.s32 %s23, 1
    %s25 = scalar_select %p22, %s23, %s24
    %p28 = pneg %p22
    %p29 = scmp.eq.s32.totalorder %s13, 3
    %p30 = por %p28, %p29
    %p31 = scmp.ne.s32.totalorder %s23, %s26
    %p32 = scmp.eq.s32.totalorder %s13, 0
    %p33 = por %p31, %p32
    %p34 = scmp.ne.s32.totalorder %s23, %s26
    %p35 = scmp.eq.s32.totalorder %s18, 3
    %p36 = por %p34, %p35
    %p37 = scmp.ne.s32.totalorder %s26, %s27
    %p38 = scmp.eq.s32.totalorder %s18, 0
    %p39 = por %p37, %p38
    %p40 = scmp.ne.s32.totalorder %s26, %s27
    %p41 = scmp.eq.s32.totalorder %s19, 3
    %p42 = por %p40, %p41
    %p44 = scmp.ne.s32.totalorder %s27, %s43
    %p45 = scmp.eq.s32.totalorder %s19, 0
    %p46 = por %p44, %p45
    %s48 = sadd.s32 %s47, 1
    %p51 = scmp.eq.s32.totalorder %s13, 3
    %p52 = scmp.ne.s32.totalorder %s47, %s49
    %p53 = scmp.eq.s32.totalorder %s13, 0
    %p54 = por %p52, %p53
    %p55 = scmp.ne.s32.totalorder %s47, %s49
    %p56 = scmp.eq.s32.totalorder %s18, 3
    %p57 = por %p55, %p56
    %p58 = scmp.ne.s32.totalorder %s49, %s50
    %p59 = scmp.eq.s32.totalorder %s18, 0
    %p60 = por %p58, %p59
    %p61 = scmp.ne.s32.totalorder %s49, %s50
    %p62 = scmp.eq.s32.totalorder %s19, 3
    %p63 = por %p61, %p62
    %p65 = scmp.ne.s32.totalorder %s50, %s64
    %p66 = scmp.eq.s32.totalorder %s19, 0
    %p67 = por %p65, %p66
    %s69 = sadd.s32 %s68, 1
    %p72 = scmp.eq.s32.totalorder %s13, 3
    %p73 = scmp.ne.s32.totalorder %s68, %s70
    %p74 = scmp.eq.s32.totalorder %s13, 0
    %p75 = por %p73, %p74
    %p76 = scmp.ne.s32.totalorder %s68, %s70
    %p77 = scmp.eq.s32.totalorder %s18, 3
    %p78 = por %p76, %p77
    %p79 = scmp.ne.s32.totalorder %s70, %s71
    %p80 = scmp.eq.s32.totalorder %s18, 0
    %p81 = por %p79, %p80
    %p82 = scmp.ne.s32.totalorder %s70, %s71
    %p83 = scmp.eq.s32.totalorder %s19, 3
    %p84 = por %p82, %p83
    %p86 = scmp.ne.s32.totalorder %s71, %s85
    %p87 = scmp.eq.s32.totalorder %s19, 0
    %p88 = por %p86, %p87
    %s90 = sadd.s32 %s89, 1
    %p93 = scmp.eq.s32.totalorder %s13, 3
    %p94 = scmp.ne.s32.totalorder %s89, %s91
    %p95 = scmp.eq.s32.totalorder %s13, 0
    %p96 = por %p94, %p95
    %p97 = scmp.ne.s32.totalorder %s89, %s91
    %p98 = scmp.eq.s32.totalorder %s18, 3
    %p99 = por %p97, %p98
    %p100 = scmp.ne.s32.totalorder %s91, %s92
    %p101 = scmp.eq.s32.totalorder %s18, 0
    %p102 = por %p100, %p101
    %p103 = scmp.ne.s32.totalorder %s91, %s92
    %p104 = scmp.eq.s32.totalorder %s19, 3
    %p105 = por %p103, %p104
    %p107 = scmp.ne.s32.totalorder %s92, %s106
    %p108 = scmp.eq.s32.totalorder %s19, 0
    %p109 = por %p107, %p108
    %s111 = sadd.s32 %s110, 1
    %p114 = scmp.eq.s32.totalorder %s13, 3
    %p115 = scmp.ne.s32.totalorder %s110, %s112
    %p116 = scmp.eq.s32.totalorder %s13, 0
    %p117 = por %p115, %p116
    %p118 = scmp.ne.s32.totalorder %s110, %s112
    %p119 = scmp.eq.s32.totalorder %s18, 3
    %p120 = por %p118, %p119
    %p121 = scmp.ne.s32.totalorder %s112, %s113
    %p122 = scmp.eq.s32.totalorder %s18, 0
    %p123 = por %p121, %p122
    %p124 = scmp.ne.s32.totalorder %s112, %s113
    %p125 = scmp.eq.s32.totalorder %s19, 3
    %p126 = por %p124, %p125
    %p128 = scmp.ne.s32.totalorder %s113, %s127
    %p129 = scmp.eq.s32.totalorder %s19, 0
    %p130 = por %p128, %p129
    %s132 = sadd.s32 %s131, 1
    %p135 = scmp.eq.s32.totalorder %s13, 3
    %p136 = scmp.ne.s32.totalorder %s131, %s133
    %p137 = scmp.eq.s32.totalorder %s13, 0
    %p138 = por %p136, %p137
    %p139 = scmp.ne.s32.totalorder %s131, %s133
    %p140 = scmp.eq.s32.totalorder %s18, 3
    %p141 = por %p139, %p140
    %p142 = scmp.ne.s32.totalorder %s133, %s134
    %p143 = scmp.eq.s32.totalorder %s18, 0
    %p144 = por %p142, %p143
    %p145 = scmp.ne.s32.totalorder %s133, %s134
    %p146 = scmp.eq.s32.totalorder %s19, 3
    %p147 = por %p145, %p146
    %p149 = scmp.ne.s32.totalorder %s134, %s148
    %p150 = scmp.eq.s32.totalorder %s19, 0
    %p151 = por %p149, %p150
    %s153 = sadd.s32 %s152, 1
    %p156 = scmp.eq.s32.totalorder %s13, 3
    %p157 = scmp.ne.s32.totalorder %s152, %s154
    %p158 = scmp.eq.s32.totalorder %s13, 0
    %p159 = por %p157, %p158
    %p160 = scmp.ne.s32.totalorder %s152, %s154
    %p161 = scmp.eq.s32.totalorder %s18, 3
    %p162 = por %p160, %p161
    %p163 = scmp.ne.s32.totalorder %s154, %s155
    %p164 = scmp.eq.s32.totalorder %s18, 0
    %p165 = por %p163, %p164
    %p166 = scmp.ne.s32.totalorder %s154, %s155
    %p167 = scmp.eq.s32.totalorder %s19, 3
    %p168 = por %p166, %p167
    %p170 = scmp.ne.s32.totalorder %s155, %s169
    %p171 = scmp.eq.s32.totalorder %s19, 0
    %p172 = por %p170, %p171
    %s173 = ssub.s32 %s13, %s20
    %p174 = scmp.eq.s32.totalorder %s173, 0
    %s176 = sadd.s32 %s175, 1
    %s177 = scalar_select %p174, %s175, %s176
    %p180 = pneg %p174
    %p181 = scmp.eq.s32.totalorder %s13, 3
    %p182 = por %p180, %p181
    %p183 = scmp.ne.s32.totalorder %s175, %s178
    %p184 = scmp.eq.s32.totalorder %s13, 0
    %p185 = por %p183, %p184
    %p186 = scmp.ne.s32.totalorder %s175, %s178
    %p187 = scmp.eq.s32.totalorder %s18, 3
    %p188 = por %p186, %p187
    %p189 = scmp.ne.s32.totalorder %s178, %s179
    %p190 = scmp.eq.s32.totalorder %s18, 0
    %p191 = por %p189, %p190
    %p192 = scmp.ne.s32.totalorder %s178, %s179
    %p193 = scmp.eq.s32.totalorder %s19, 3
    %p194 = por %p192, %p193
    %p196 = scmp.ne.s32.totalorder %s179, %s195
    %p197 = scmp.eq.s32.totalorder %s19, 0
    %p198 = por %p196, %p197
    %p199 = scmp.le.s32.totalorder 1, %s13
    %p200 = scmp.lt.s32.totalorder %s13, 5
    %p201 = pnand %p199, %p200
    %p202 = pneg %p201
    // Predicated region
    $region9: #{forward.2} parent=5 // pred_check
      _
    $region10: #{forward.2} parent=5 // pred_check_branch
      %204 = sbr.rel (%p201) target = $region12
    $region11: #{forward.2} parent=5 // pred_region
      %s205 = ssub.s32 %s13, 1
      // Predicated region
      $region13: #{forward.2} parent=11 // pred_check
        %p206 = pneg %p60
      $region14: #{forward.2} parent=11 // pred_check_branch
        %208 = sbr.rel (%p206) target = $region16
      $region15: #{forward.2} parent=11 // pred_region
        _
      $region16: #{forward.2} parent=11 // pred_fallthru
        _
      // Predicated region
      $region17: #{forward.2} parent=11 // pred_check
        %p209 = pneg %p81
      $region18: #{forward.2} parent=11 // pred_check_branch
        %211 = sbr.rel (%p209) target = $region20
      $region19: #{forward.2} parent=11 // pred_region
        _
      $region20: #{forward.2} parent=11 // pred_fallthru
        _
      // Predicated region
      $region21: #{forward.2} parent=11 // pred_check
        %p212 = pneg %p102
      $region22: #{forward.2} parent=11 // pred_check_branch
        %214 = sbr.rel (%p212) target = $region24
      $region23: #{forward.2} parent=11 // pred_region
        _
      $region24: #{forward.2} parent=11 // pred_fallthru
        _
      // Predicated region
      $region25: #{forward.2} parent=11 // pred_check
        %p215 = pneg %p123
      $region26: #{forward.2} parent=11 // pred_check_branch
        %217 = sbr.rel (%p215) target = $region28
      $region27: #{forward.2} parent=11 // pred_region
        _
      $region28: #{forward.2} parent=11 // pred_fallthru
        _
      // Predicated region
      $region29: #{forward.2} parent=11 // pred_check
        %p218 = pneg %p144
      $region30: #{forward.2} parent=11 // pred_check_branch
        %220 = sbr.rel (%p218) target = $region32
      $region31: #{forward.2} parent=11 // pred_region
        _
      $region32: #{forward.2} parent=11 // pred_fallthru
        _
      // Predicated region
      $region33: #{forward.2} parent=11 // pred_check
        %p221 = pneg %p165
      $region34: #{forward.2} parent=11 // pred_check_branch
        %223 = sbr.rel (%p221) target = $region36
      $region35: #{forward.2} parent=11 // pred_region
        _
      $region36: #{forward.2} parent=11 // pred_fallthru
        _
    $region12: #{forward.2} parent=5 // pred_fallthru
      _
    %p224 = scmp.lt.s32.totalorder %s13, 4
    // Predicated region
    $region37: #{forward.2} parent=5 // pred_check
      %p225 = pneg %p224
    $region38: #{forward.2} parent=5 // pred_check_branch
      %227 = sbr.rel (%p225) target = $region40
    $region39: #{forward.2} parent=5 // pred_region
      // Predicated region
      $region41: #{forward.2} parent=39 // pred_check
        %p228 = pneg %p33
      $region42: #{forward.2} parent=39 // pred_check_branch
        %230 = sbr.rel (%p228) target = $region44
      $region43: #{forward.2} parent=39 // pred_region
        %p231 = scmp.lt.s32.totalorder %s13, 3
        %s232 = scalar_select %p231, %s13, 3
        %s233 = smul.addr %s232, 6
        %s234 = smul.addr %s233, 2
        %s235 = scalar_lea.vmem %s0, %s234
      $region44: #{forward.2} parent=39 // pred_fallthru
        _
    $region40: #{forward.2} parent=5 // pred_fallthru
      _
    %p236 = scmp.le.s32.totalorder 1, %s13
    %p237 = scmp.lt.s32.totalorder %s13, 5
    %p238 = pnand %p236, %p237
    %p239 = pneg %p238
    // Predicated region
    $region45: #{forward.2} parent=5 // pred_check
      _
    $region46: #{forward.2} parent=5 // pred_check_branch
      %241 = sbr.rel (%p238) target = $region48
    $region47: #{forward.2} parent=5 // pred_region
      %s242 = ssub.s32 %s13, 1
      %p243 = scmp.lt.s32.totalorder %s18, 3
      %s244 = scalar_select %p243, %s18, 3
      %s245 = smul.addr %s244, 6
      %s246 = smul.addr %s245, 2
      %s247 = scalar_lea.vmem %s0, %s246
      %p248 = pneg %p39
      %p249 = pneg %p36
      %p250 = pneg %p60
      %p251 = pneg %p57
      %p252 = pneg %p81
      %p253 = pneg %p78
      %p254 = pneg %p102
      %p255 = pneg %p99
      %p256 = pneg %p123
      %p257 = pneg %p120
      %p258 = pneg %p144
      %p259 = pneg %p141
      %p260 = pneg %p165
      %p261 = pneg %p162
      %p262 = pneg %p191
      %p263 = pneg %p188
      %p264 = scmp.lt.s32.totalorder %s18, 3
      %s265 = scalar_select %p264, %s18, 3
      %s266 = smul.addr %s265, 4
      %s267 = scalar_lea.vmem %s7, %s266
      %p268 = scmp.lt.s32.totalorder %s18, 3
      %s269 = scalar_select %p268, %s18, 3
      %s270 = smul.addr %s269, 6
      %s271 = smul.addr %s270, 2
      %s272 = scalar_lea.vmem %s0, %s271
      %p273 = scmp.lt.s32.totalorder %s18, 3
      %s274 = scalar_select %p273, %s18, 3
      %s275 = smul.addr %s274, 4
      %s276 = scalar_lea.vmem %s7, %s275
      %v278 = vld [vmem:[%s272] sm:$0xff]
      %v279 = vld [vmem:[%s272 + $0x8] sm:$0xf]
      %v282 = vcombine.high %v278, %v278
      %v284 = vunpack.c.l.s4 1983009808
      %v285 = vunpack.c.0.s8 %v284
      %v286 = vlaneseq
      %v287 = vshrl.u32 %v286, 7
      %v288 = vsub.s32 %v285, %v287
      %v289 = vrot.slane %v278, %v288
      %v291 = vunpack.c.l.s4 1983009808
      %v292 = vunpack.c.0.s8 %v291
      %v293 = vlaneseq
      %v294 = vshrl.u32 %v293, 7
      %v295 = vsub.s32 %v292, %v294
      %v296 = vrot.slane %v282, %v295
      %v297 = vcombine.high %v289, %v289
      %v298 = vcombine.high %v296, %v296
      %v300 = vunpack.c.l.s4 1983009808
      %v301 = vunpack.c.0.s8 %v300
      %v302 = vlaneseq
      %v303 = vshrl.u32 %v302, 7
      %v304 = vsub.s32 %v301, %v303
      %v305 = vrot.slane %v279, %v304
      %v306 = vcombine.high %v305, %v305
      %v313 = vpack.c.bf16 %v289, %v289
      %v314 = vpack.c.bf16 %v297, %v297
      %v315 = vpack.c.bf16 %v296, %v296
      %v316 = vpack.c.bf16 %v298, %v298
      %v317 = vpack.c.bf16 %v305, %v305
      %v318 = vpack.c.bf16 %v306, %v306
      %v319 = vld [vmem:[%s1] sm:$0xff]
      %v320 = vld [vmem:[%s1 + $0x8] sm:$0xff]
      %v321 = vld [vmem:[%s1 + $0x10] sm:$0xff]
      %v322 = vld [vmem:[%s1 + $0x18] sm:$0xf]
      %v323 = vld [vmem:[%s1 + $0x1c] sm:$0xff]
      %v324 = vld [vmem:[%s1 + $0x24] sm:$0xff]
      %v325 = vld [vmem:[%s1 + $0x2c] sm:$0xff]
      %v326 = vld [vmem:[%s1 + $0x34] sm:$0xf]
      %v327 = vld [vmem:[%s1 + $0x38] sm:$0xff]
      %v328 = vld [vmem:[%s1 + $0x40] sm:$0xff]
      %v329 = vld [vmem:[%s1 + $0x48] sm:$0xff]
      %v330 = vld [vmem:[%s1 + $0x50] sm:$0xf]
      %v331 = vld [vmem:[%s1 + $0x54] sm:$0xff]
      %v332 = vld [vmem:[%s1 + $0x5c] sm:$0xff]
      %v333 = vld [vmem:[%s1 + $0x64] sm:$0xff]
      %v334 = vld [vmem:[%s1 + $0x6c] sm:$0xf]
      %v335 = vld [vmem:[%s1 + $0x70] sm:$0xff]
      %v336 = vld [vmem:[%s1 + $0x78] sm:$0xff]
      %v337 = vld [vmem:[%s1 + $0x80] sm:$0xff]
      %v338 = vld [vmem:[%s1 + $0x88] sm:$0xf]
      %v339 = vld [vmem:[%s1 + $0x8c] sm:$0xff]
      %v340 = vld [vmem:[%s1 + $0x94] sm:$0xff]
      %v341 = vld [vmem:[%s1 + $0x9c] sm:$0xff]
      %v342 = vld [vmem:[%s1 + $0xa4] sm:$0xf]
      %v343 = vld [vmem:[%s1 + $0xa8] sm:$0xff]
      %v344 = vld [vmem:[%s1 + $0xb0] sm:$0xff]
      %v345 = vld [vmem:[%s1 + $0xb8] sm:$0xff]
      %v346 = vld [vmem:[%s1 + $0xc0] sm:$0xf]
      %v347 = vld [vmem:[%s1 + $0xc4] sm:$0xff]
      %v348 = vld [vmem:[%s1 + $0xcc] sm:$0xff]
      %v349 = vld [vmem:[%s1 + $0xd4] sm:$0xff]
      %v350 = vld [vmem:[%s1 + $0xdc] sm:$0xf]
      %v351 = vld [vmem:[%s1 + $0xe0] sm:$0xff]
      %v352 = vld [vmem:[%s1 + $0xe8] sm:$0xff]
      %v353 = vld [vmem:[%s1 + $0xf0] sm:$0xff]
      %v354 = vld [vmem:[%s1 + $0xf8] sm:$0xf]
      %v355 = vld [vmem:[%s1 + $0xfc] sm:$0xff]
      %v356 = vld [vmem:[%s1 + $0x104] sm:$0xff]
      %v357 = vld [vmem:[%s1 + $0x10c] sm:$0xff]
      %v358 = vld [vmem:[%s1 + $0x114] sm:$0xf]
      %v359 = vld [vmem:[%s1 + $0x118] sm:$0xff]
      %v360 = vld [vmem:[%s1 + $0x120] sm:$0xff]
      %v361 = vld [vmem:[%s1 + $0x128] sm:$0xff]
      %v362 = vld [vmem:[%s1 + $0x130] sm:$0xf]
      %v363 = vld [vmem:[%s1 + $0x134] sm:$0xff]
      %v364 = vld [vmem:[%s1 + $0x13c] sm:$0xff]
      %v365 = vld [vmem:[%s1 + $0x144] sm:$0xff]
      %v366 = vld [vmem:[%s1 + $0x14c] sm:$0xf]
      %v367 = vld [vmem:[%s1 + $0x150] sm:$0xff]
      %v368 = vld [vmem:[%s1 + $0x158] sm:$0xff]
      %v369 = vld [vmem:[%s1 + $0x160] sm:$0xff]
      %v370 = vld [vmem:[%s1 + $0x168] sm:$0xf]
      %v371 = vld [vmem:[%s1 + $0x16c] sm:$0xff]
      %v372 = vld [vmem:[%s1 + $0x174] sm:$0xff]
      %v373 = vld [vmem:[%s1 + $0x17c] sm:$0xff]
      %v374 = vld [vmem:[%s1 + $0x184] sm:$0xf]
      %v375 = vld [vmem:[%s1 + $0x188] sm:$0xff]
      %v376 = vld [vmem:[%s1 + $0x190] sm:$0xff]
      %v377 = vld [vmem:[%s1 + $0x198] sm:$0xff]
      %v378 = vld [vmem:[%s1 + $0x1a0] sm:$0xf]
      %v379 = vld [vmem:[%s1 + $0x1a4] sm:$0xff]
      %v380 = vld [vmem:[%s1 + $0x1ac] sm:$0xff]
      %v381 = vld [vmem:[%s1 + $0x1b4] sm:$0xff]
      %v382 = vld [vmem:[%s1 + $0x1bc] sm:$0xf]
      %v383 = vld [vmem:[%s1 + $0x1c0] sm:$0xff]
      %v384 = vld [vmem:[%s1 + $0x1c8] sm:$0xff]
      %v385 = vld [vmem:[%s1 + $0x1d0] sm:$0xff]
      %v386 = vld [vmem:[%s1 + $0x1d8] sm:$0xf]
      %v387 = vld [vmem:[%s1 + $0x1dc] sm:$0xff]
      %v388 = vld [vmem:[%s1 + $0x1e4] sm:$0xff]
      %v389 = vld [vmem:[%s1 + $0x1ec] sm:$0xff]
      %v390 = vld [vmem:[%s1 + $0x1f4] sm:$0xf]
      %v391 = vld [vmem:[%s1 + $0x1f8] sm:$0xff]
      %v392 = vld [vmem:[%s1 + $0x200] sm:$0xff]
      %v393 = vld [vmem:[%s1 + $0x208] sm:$0xff]
      %v394 = vld [vmem:[%s1 + $0x210] sm:$0xf]
      %v395 = vld [vmem:[%s1 + $0x214] sm:$0xff]
      %v396 = vld [vmem:[%s1 + $0x21c] sm:$0xff]
      %v397 = vld [vmem:[%s1 + $0x224] sm:$0xff]
      %v398 = vld [vmem:[%s1 + $0x22c] sm:$0xf]
      %v399 = vld [vmem:[%s1 + $0x230] sm:$0xff]
      %v400 = vld [vmem:[%s1 + $0x238] sm:$0xff]
      %v401 = vld [vmem:[%s1 + $0x240] sm:$0xff]
      %v402 = vld [vmem:[%s1 + $0x248] sm:$0xf]
      %v403 = vld [vmem:[%s1 + $0x24c] sm:$0xff]
      %v404 = vld [vmem:[%s1 + $0x254] sm:$0xff]
      %v405 = vld [vmem:[%s1 + $0x25c] sm:$0xff]
      %v406 = vld [vmem:[%s1 + $0x264] sm:$0xf]
      %v407 = vld [vmem:[%s1 + $0x268] sm:$0xff]
      %v408 = vld [vmem:[%s1 + $0x270] sm:$0xff]
      %v409 = vld [vmem:[%s1 + $0x278] sm:$0xff]
      %v410 = vld [vmem:[%s1 + $0x280] sm:$0xf]
      %v411 = vld [vmem:[%s1 + $0x284] sm:$0xff]
      %v412 = vld [vmem:[%s1 + $0x28c] sm:$0xff]
      %v413 = vld [vmem:[%s1 + $0x294] sm:$0xff]
      %v414 = vld [vmem:[%s1 + $0x29c] sm:$0xf]
      %v415 = vld [vmem:[%s1 + $0x2a0] sm:$0xff]
      %v416 = vld [vmem:[%s1 + $0x2a8] sm:$0xff]
      %v417 = vld [vmem:[%s1 + $0x2b0] sm:$0xff]
      %v418 = vld [vmem:[%s1 + $0x2b8] sm:$0xf]
      %v419 = vld [vmem:[%s1 + $0x2bc] sm:$0xff]
      %v420 = vld [vmem:[%s1 + $0x2c4] sm:$0xff]
      %v421 = vld [vmem:[%s1 + $0x2cc] sm:$0xff]
      %v422 = vld [vmem:[%s1 + $0x2d4] sm:$0xf]
      %v423 = vld [vmem:[%s1 + $0x2d8] sm:$0xff]
      %v424 = vld [vmem:[%s1 + $0x2e0] sm:$0xff]
      %v425 = vld [vmem:[%s1 + $0x2e8] sm:$0xff]
      %v426 = vld [vmem:[%s1 + $0x2f0] sm:$0xf]
      %v427 = vld [vmem:[%s1 + $0x2f4] sm:$0xff]
      %v428 = vld [vmem:[%s1 + $0x2fc] sm:$0xff]
      %v429 = vld [vmem:[%s1 + $0x304] sm:$0xff]
      %v430 = vld [vmem:[%s1 + $0x30c] sm:$0xf]
      %v431 = vld [vmem:[%s1 + $0x310] sm:$0xff]
      %v432 = vld [vmem:[%s1 + $0x318] sm:$0xff]
      %v433 = vld [vmem:[%s1 + $0x320] sm:$0xff]
      %v434 = vld [vmem:[%s1 + $0x328] sm:$0xf]
      %v435 = vld [vmem:[%s1 + $0x32c] sm:$0xff]
      %v436 = vld [vmem:[%s1 + $0x334] sm:$0xff]
      %v437 = vld [vmem:[%s1 + $0x33c] sm:$0xff]
      %v438 = vld [vmem:[%s1 + $0x344] sm:$0xf]
      %v439 = vld [vmem:[%s1 + $0x348] sm:$0xff]
      %v440 = vld [vmem:[%s1 + $0x350] sm:$0xff]
      %v441 = vld [vmem:[%s1 + $0x358] sm:$0xff]
      %v442 = vld [vmem:[%s1 + $0x360] sm:$0xf]
      %v443 = vld [vmem:[%s1 + $0x364] sm:$0xff]
      %v444 = vld [vmem:[%s1 + $0x36c] sm:$0xff]
      %v445 = vld [vmem:[%s1 + $0x374] sm:$0xff]
      %v446 = vld [vmem:[%s1 + $0x37c] sm:$0xf]
      %v447 = vld [vmem:[%s1 + $0x380] sm:$0xff]
      %v448 = vld [vmem:[%s1 + $0x388] sm:$0xff]
      %v449 = vld [vmem:[%s1 + $0x390] sm:$0xff]
      %v450 = vld [vmem:[%s1 + $0x398] sm:$0xf]
      %v451 = vld [vmem:[%s1 + $0x39c] sm:$0xff]
      %v452 = vld [vmem:[%s1 + $0x3a4] sm:$0xff]
      %v453 = vld [vmem:[%s1 + $0x3ac] sm:$0xff]
      %v454 = vld [vmem:[%s1 + $0x3b4] sm:$0xf]
      %v455 = vld [vmem:[%s1 + $0x3b8] sm:$0xff]
      %v456 = vld [vmem:[%s1 + $0x3c0] sm:$0xff]
      %v457 = vld [vmem:[%s1 + $0x3c8] sm:$0xff]
      %v458 = vld [vmem:[%s1 + $0x3d0] sm:$0xf]
      %v459 = vld [vmem:[%s1 + $0x3d4] sm:$0xff]
      %v460 = vld [vmem:[%s1 + $0x3dc] sm:$0xff]
      %v461 = vld [vmem:[%s1 + $0x3e4] sm:$0xff]
      %v462 = vld [vmem:[%s1 + $0x3ec] sm:$0xf]
      %v463 = vld [vmem:[%s1 + $0x3f0] sm:$0xff]
      %v464 = vld [vmem:[%s1 + $0x3f8] sm:$0xff]
      %v465 = vld [vmem:[%s1 + $0x400] sm:$0xff]
      %v466 = vld [vmem:[%s1 + $0x408] sm:$0xf]
      %v467 = vld [vmem:[%s1 + $0x40c] sm:$0xff]
      %v468 = vld [vmem:[%s1 + $0x414] sm:$0xff]
      %v469 = vld [vmem:[%s1 + $0x41c] sm:$0xff]
      %v470 = vld [vmem:[%s1 + $0x424] sm:$0xf]
      %v471 = vld [vmem:[%s1 + $0x428] sm:$0xff]
      %v472 = vld [vmem:[%s1 + $0x430] sm:$0xff]
      %v473 = vld [vmem:[%s1 + $0x438] sm:$0xff]
      %v474 = vld [vmem:[%s1 + $0x440] sm:$0xf]
      %v475 = vld [vmem:[%s1 + $0x444] sm:$0xff]
      %v476 = vld [vmem:[%s1 + $0x44c] sm:$0xff]
      %v477 = vld [vmem:[%s1 + $0x454] sm:$0xff]
      %v478 = vld [vmem:[%s1 + $0x45c] sm:$0xf]
      %v479 = vld [vmem:[%s1 + $0x460] sm:$0xff]
      %v480 = vld [vmem:[%s1 + $0x468] sm:$0xff]
      %v481 = vld [vmem:[%s1 + $0x470] sm:$0xff]
      %v482 = vld [vmem:[%s1 + $0x478] sm:$0xf]
      %v483 = vld [vmem:[%s1 + $0x47c] sm:$0xff]
      %v484 = vld [vmem:[%s1 + $0x484] sm:$0xff]
      %v485 = vld [vmem:[%s1 + $0x48c] sm:$0xff]
      %v486 = vld [vmem:[%s1 + $0x494] sm:$0xf]
      %v487 = vld [vmem:[%s1 + $0x498] sm:$0xff]
      %v488 = vld [vmem:[%s1 + $0x4a0] sm:$0xff]
      %v489 = vld [vmem:[%s1 + $0x4a8] sm:$0xff]
      %v490 = vld [vmem:[%s1 + $0x4b0] sm:$0xf]
      %v491 = vld [vmem:[%s1 + $0x4b4] sm:$0xff]
      %v492 = vld [vmem:[%s1 + $0x4bc] sm:$0xff]
      %v493 = vld [vmem:[%s1 + $0x4c4] sm:$0xff]
      %v494 = vld [vmem:[%s1 + $0x4cc] sm:$0xf]
      %v495 = vld [vmem:[%s1 + $0x4d0] sm:$0xff]
      %v496 = vld [vmem:[%s1 + $0x4d8] sm:$0xff]
      %v497 = vld [vmem:[%s1 + $0x4e0] sm:$0xff]
      %v498 = vld [vmem:[%s1 + $0x4e8] sm:$0xf]
      %v499 = vld [vmem:[%s1 + $0x4ec] sm:$0xff]
      %v500 = vld [vmem:[%s1 + $0x4f4] sm:$0xff]
      %v501 = vld [vmem:[%s1 + $0x4fc] sm:$0xff]
      %v502 = vld [vmem:[%s1 + $0x504] sm:$0xf]
      %v503 = vld [vmem:[%s1 + $0x508] sm:$0xff]
      %v504 = vld [vmem:[%s1 + $0x510] sm:$0xff]
      %v505 = vld [vmem:[%s1 + $0x518] sm:$0xff]
      %v506 = vld [vmem:[%s1 + $0x520] sm:$0xf]
      %v507 = vld [vmem:[%s1 + $0x524] sm:$0xff]
      %v508 = vld [vmem:[%s1 + $0x52c] sm:$0xff]
      %v509 = vld [vmem:[%s1 + $0x534] sm:$0xff]
      %v510 = vld [vmem:[%s1 + $0x53c] sm:$0xf]
      %v511 = vld [vmem:[%s1 + $0x540] sm:$0xff]
      %v512 = vld [vmem:[%s1 + $0x548] sm:$0xff]
      %v513 = vld [vmem:[%s1 + $0x550] sm:$0xff]
      %v514 = vld [vmem:[%s1 + $0x558] sm:$0xf]
      %v515 = vld [vmem:[%s1 + $0x55c] sm:$0xff]
      %v516 = vld [vmem:[%s1 + $0x564] sm:$0xff]
      %v517 = vld [vmem:[%s1 + $0x56c] sm:$0xff]
      %v518 = vld [vmem:[%s1 + $0x574] sm:$0xf]
      %v519 = vld [vmem:[%s1 + $0x578] sm:$0xff]
      %v520 = vld [vmem:[%s1 + $0x580] sm:$0xff]
      %v521 = vld [vmem:[%s1 + $0x588] sm:$0xff]
      %v522 = vld [vmem:[%s1 + $0x590] sm:$0xf]
      %v523 = vld [vmem:[%s1 + $0x594] sm:$0xff]
      %v524 = vld [vmem:[%s1 + $0x59c] sm:$0xff]
      %v525 = vld [vmem:[%s1 + $0x5a4] sm:$0xff]
      %v526 = vld [vmem:[%s1 + $0x5ac] sm:$0xf]
      %v527 = vld [vmem:[%s1 + $0x5b0] sm:$0xff]
      %v528 = vld [vmem:[%s1 + $0x5b8] sm:$0xff]
      %v529 = vld [vmem:[%s1 + $0x5c0] sm:$0xff]
      %v530 = vld [vmem:[%s1 + $0x5c8] sm:$0xf]
      %v531 = vld [vmem:[%s1 + $0x5cc] sm:$0xff]
      %v532 = vld [vmem:[%s1 + $0x5d4] sm:$0xff]
      %v533 = vld [vmem:[%s1 + $0x5dc] sm:$0xff]
      %v534 = vld [vmem:[%s1 + $0x5e4] sm:$0xf]
      %v535 = vld [vmem:[%s1 + $0x5e8] sm:$0xff]
      %v536 = vld [vmem:[%s1 + $0x5f0] sm:$0xff]
      %v537 = vld [vmem:[%s1 + $0x5f8] sm:$0xff]
      %v538 = vld [vmem:[%s1 + $0x600] sm:$0xf]
      %v539 = vld [vmem:[%s1 + $0x604] sm:$0xff]
      %v540 = vld [vmem:[%s1 + $0x60c] sm:$0xff]
      %v541 = vld [vmem:[%s1 + $0x614] sm:$0xff]
      %v542 = vld [vmem:[%s1 + $0x61c] sm:$0xf]
      %v543 = vld [vmem:[%s1 + $0x620] sm:$0xff]
      %v544 = vld [vmem:[%s1 + $0x628] sm:$0xff]
      %v545 = vld [vmem:[%s1 + $0x630] sm:$0xff]
      %v546 = vld [vmem:[%s1 + $0x638] sm:$0xf]
      %v547 = vld [vmem:[%s1 + $0x63c] sm:$0xff]
      %v548 = vld [vmem:[%s1 + $0x644] sm:$0xff]
      %v549 = vld [vmem:[%s1 + $0x64c] sm:$0xff]
      %v550 = vld [vmem:[%s1 + $0x654] sm:$0xf]
      %v551 = vld [vmem:[%s1 + $0x658] sm:$0xff]
      %v552 = vld [vmem:[%s1 + $0x660] sm:$0xff]
      %v553 = vld [vmem:[%s1 + $0x668] sm:$0xff]
      %v554 = vld [vmem:[%s1 + $0x670] sm:$0xf]
      %v555 = vld [vmem:[%s1 + $0x674] sm:$0xff]
      %v556 = vld [vmem:[%s1 + $0x67c] sm:$0xff]
      %v557 = vld [vmem:[%s1 + $0x684] sm:$0xff]
      %v558 = vld [vmem:[%s1 + $0x68c] sm:$0xf]
      %v559 = vld [vmem:[%s1 + $0x690] sm:$0xff]
      %v560 = vld [vmem:[%s1 + $0x698] sm:$0xff]
      %v561 = vld [vmem:[%s1 + $0x6a0] sm:$0xff]
      %v562 = vld [vmem:[%s1 + $0x6a8] sm:$0xf]
      %v563 = vld [vmem:[%s1 + $0x6ac] sm:$0xff]
      %v564 = vld [vmem:[%s1 + $0x6b4] sm:$0xff]
      %v565 = vld [vmem:[%s1 + $0x6bc] sm:$0xff]
      %v566 = vld [vmem:[%s1 + $0x6c4] sm:$0xf]
      %v567 = vld [vmem:[%s1 + $0x6c8] sm:$0xff]
      %v568 = vld [vmem:[%s1 + $0x6d0] sm:$0xff]
      %v569 = vld [vmem:[%s1 + $0x6d8] sm:$0xff]
      %v570 = vld [vmem:[%s1 + $0x6e0] sm:$0xf]
      %v571 = vld [vmem:[%s1 + $0x6e4] sm:$0xff]
      %v572 = vld [vmem:[%s1 + $0x6ec] sm:$0xff]
      %v573 = vld [vmem:[%s1 + $0x6f4] sm:$0xff]
      %v574 = vld [vmem:[%s1 + $0x6fc] sm:$0xf]
      %v575 = vld [vmem:[%s1 + $0x700] sm:$0xff]
      %v576 = vld [vmem:[%s1 + $0x708] sm:$0xff]
      %v577 = vld [vmem:[%s1 + $0x710] sm:$0xff]
      %v578 = vld [vmem:[%s1 + $0x718] sm:$0xf]
      %v579 = vld [vmem:[%s1 + $0x71c] sm:$0xff]
      %v580 = vld [vmem:[%s1 + $0x724] sm:$0xff]
      %v581 = vld [vmem:[%s1 + $0x72c] sm:$0xff]
      %v582 = vld [vmem:[%s1 + $0x734] sm:$0xf]
      %v583 = vld [vmem:[%s1 + $0x738] sm:$0xff]
      %v584 = vld [vmem:[%s1 + $0x740] sm:$0xff]
      %v585 = vld [vmem:[%s1 + $0x748] sm:$0xff]
      %v586 = vld [vmem:[%s1 + $0x750] sm:$0xf]
      %v587 = vld [vmem:[%s1 + $0x754] sm:$0xff]
      %v588 = vld [vmem:[%s1 + $0x75c] sm:$0xff]
      %v589 = vld [vmem:[%s1 + $0x764] sm:$0xff]
      %v590 = vld [vmem:[%s1 + $0x76c] sm:$0xf]
      %v591 = vld [vmem:[%s1 + $0x770] sm:$0xff]
      %v592 = vld [vmem:[%s1 + $0x778] sm:$0xff]
      %v593 = vld [vmem:[%s1 + $0x780] sm:$0xff]
      %v594 = vld [vmem:[%s1 + $0x788] sm:$0xf]
      %v595 = vld [vmem:[%s1 + $0x78c] sm:$0xff]
      %v596 = vld [vmem:[%s1 + $0x794] sm:$0xff]
      %v597 = vld [vmem:[%s1 + $0x79c] sm:$0xff]
      %v598 = vld [vmem:[%s1 + $0x7a4] sm:$0xf]
      %v599 = vld [vmem:[%s1 + $0x7a8] sm:$0xff]
      %v600 = vld [vmem:[%s1 + $0x7b0] sm:$0xff]
      %v601 = vld [vmem:[%s1 + $0x7b8] sm:$0xff]
      %v602 = vld [vmem:[%s1 + $0x7c0] sm:$0xf]
      %v603 = vld [vmem:[%s1 + $0x7c4] sm:$0xff]
      %v604 = vld [vmem:[%s1 + $0x7cc] sm:$0xff]
      %v605 = vld [vmem:[%s1 + $0x7d4] sm:$0xff]
      %v606 = vld [vmem:[%s1 + $0x7dc] sm:$0xf]
      %v607 = vld [vmem:[%s1 + $0x7e0] sm:$0xff]
      %v608 = vld [vmem:[%s1 + $0x7e8] sm:$0xff]
      %v609 = vld [vmem:[%s1 + $0x7f0] sm:$0xff]
      %v610 = vld [vmem:[%s1 + $0x7f8] sm:$0xf]
      %v611 = vld [vmem:[%s1 + $0x7fc] sm:$0xff]
      %v612 = vld [vmem:[%s1 + $0x804] sm:$0xff]
      %v613 = vld [vmem:[%s1 + $0x80c] sm:$0xff]
      %v614 = vld [vmem:[%s1 + $0x814] sm:$0xf]
      %v615 = vld [vmem:[%s1 + $0x818] sm:$0xff]
      %v616 = vld [vmem:[%s1 + $0x820] sm:$0xff]
      %v617 = vld [vmem:[%s1 + $0x828] sm:$0xff]
      %v618 = vld [vmem:[%s1 + $0x830] sm:$0xf]
      %v619 = vld [vmem:[%s1 + $0x834] sm:$0xff]
      %v620 = vld [vmem:[%s1 + $0x83c] sm:$0xff]
      %v621 = vld [vmem:[%s1 + $0x844] sm:$0xff]
      %v622 = vld [vmem:[%s1 + $0x84c] sm:$0xf]
      %v623 = vld [vmem:[%s1 + $0x850] sm:$0xff]
      %v624 = vld [vmem:[%s1 + $0x858] sm:$0xff]
      %v625 = vld [vmem:[%s1 + $0x860] sm:$0xff]
      %v626 = vld [vmem:[%s1 + $0x868] sm:$0xf]
      %v627 = vld [vmem:[%s1 + $0x86c] sm:$0xff]
      %v628 = vld [vmem:[%s1 + $0x874] sm:$0xff]
      %v629 = vld [vmem:[%s1 + $0x87c] sm:$0xff]
      %v630 = vld [vmem:[%s1 + $0x884] sm:$0xf]
      %v631 = vld [vmem:[%s1 + $0x888] sm:$0xff]
      %v632 = vld [vmem:[%s1 + $0x890] sm:$0xff]
      %v633 = vld [vmem:[%s1 + $0x898] sm:$0xff]
      %v634 = vld [vmem:[%s1 + $0x8a0] sm:$0xf]
      %v635 = vld [vmem:[%s1 + $0x8a4] sm:$0xff]
      %v636 = vld [vmem:[%s1 + $0x8ac] sm:$0xff]
      %v637 = vld [vmem:[%s1 + $0x8b4] sm:$0xff]
      %v638 = vld [vmem:[%s1 + $0x8bc] sm:$0xf]
      %v639 = vld [vmem:[%s1 + $0x8c0] sm:$0xff]
      %v640 = vld [vmem:[%s1 + $0x8c8] sm:$0xff]
      %v641 = vld [vmem:[%s1 + $0x8d0] sm:$0xff]
      %v642 = vld [vmem:[%s1 + $0x8d8] sm:$0xf]
      %v643 = vld [vmem:[%s1 + $0x8dc] sm:$0xff]
      %v644 = vld [vmem:[%s1 + $0x8e4] sm:$0xff]
      %v645 = vld [vmem:[%s1 + $0x8ec] sm:$0xff]
      %v646 = vld [vmem:[%s1 + $0x8f4] sm:$0xf]
      %v647 = vld [vmem:[%s1 + $0x8f8] sm:$0xff]
      %v648 = vld [vmem:[%s1 + $0x900] sm:$0xff]
      %v649 = vld [vmem:[%s1 + $0x908] sm:$0xff]
      %v650 = vld [vmem:[%s1 + $0x910] sm:$0xf]
      %v651 = vld [vmem:[%s1 + $0x914] sm:$0xff]
      %v652 = vld [vmem:[%s1 + $0x91c] sm:$0xff]
      %v653 = vld [vmem:[%s1 + $0x924] sm:$0xff]
      %v654 = vld [vmem:[%s1 + $0x92c] sm:$0xf]
      %v655 = vld [vmem:[%s1 + $0x930] sm:$0xff]
      %v656 = vld [vmem:[%s1 + $0x938] sm:$0xff]
      %v657 = vld [vmem:[%s1 + $0x940] sm:$0xff]
      %v658 = vld [vmem:[%s1 + $0x948] sm:$0xf]
      %v659 = vld [vmem:[%s1 + $0x94c] sm:$0xff]
      %v660 = vld [vmem:[%s1 + $0x954] sm:$0xff]
      %v661 = vld [vmem:[%s1 + $0x95c] sm:$0xff]
      %v662 = vld [vmem:[%s1 + $0x964] sm:$0xf]
      %v663 = vld [vmem:[%s1 + $0x968] sm:$0xff]
      %v664 = vld [vmem:[%s1 + $0x970] sm:$0xff]
      %v665 = vld [vmem:[%s1 + $0x978] sm:$0xff]
      %v666 = vld [vmem:[%s1 + $0x980] sm:$0xf]
      %v667 = vld [vmem:[%s1 + $0x984] sm:$0xff]
      %v668 = vld [vmem:[%s1 + $0x98c] sm:$0xff]
      %v669 = vld [vmem:[%s1 + $0x994] sm:$0xff]
      %v670 = vld [vmem:[%s1 + $0x99c] sm:$0xf]
      %v671 = vld [vmem:[%s1 + $0x9a0] sm:$0xff]
      %v672 = vld [vmem:[%s1 + $0x9a8] sm:$0xff]
      %v673 = vld [vmem:[%s1 + $0x9b0] sm:$0xff]
      %v674 = vld [vmem:[%s1 + $0x9b8] sm:$0xf]
      %v675 = vld [vmem:[%s1 + $0x9bc] sm:$0xff]
      %v676 = vld [vmem:[%s1 + $0x9c4] sm:$0xff]
      %v677 = vld [vmem:[%s1 + $0x9cc] sm:$0xff]
      %v678 = vld [vmem:[%s1 + $0x9d4] sm:$0xf]
      %v679 = vld [vmem:[%s1 + $0x9d8] sm:$0xff]
      %v680 = vld [vmem:[%s1 + $0x9e0] sm:$0xff]
      %v681 = vld [vmem:[%s1 + $0x9e8] sm:$0xff]
      %v682 = vld [vmem:[%s1 + $0x9f0] sm:$0xf]
      %v683 = vld [vmem:[%s1 + $0x9f4] sm:$0xff]
      %v684 = vld [vmem:[%s1 + $0x9fc] sm:$0xff]
      %v685 = vld [vmem:[%s1 + $0xa04] sm:$0xff]
      %v686 = vld [vmem:[%s1 + $0xa0c] sm:$0xf]
      %v687 = vld [vmem:[%s1 + $0xa10] sm:$0xff]
      %v688 = vld [vmem:[%s1 + $0xa18] sm:$0xff]
      %v689 = vld [vmem:[%s1 + $0xa20] sm:$0xff]
      %v690 = vld [vmem:[%s1 + $0xa28] sm:$0xf]
      %v691 = vld [vmem:[%s1 + $0xa2c] sm:$0xff]
      %v692 = vld [vmem:[%s1 + $0xa34] sm:$0xff]
      %v693 = vld [vmem:[%s1 + $0xa3c] sm:$0xff]
      %v694 = vld [vmem:[%s1 + $0xa44] sm:$0xf]
      %v695 = vld [vmem:[%s1 + $0xa48] sm:$0xff]
      %v696 = vld [vmem:[%s1 + $0xa50] sm:$0xff]
      %v697 = vld [vmem:[%s1 + $0xa58] sm:$0xff]
      %v698 = vld [vmem:[%s1 + $0xa60] sm:$0xf]
      %v699 = vld [vmem:[%s1 + $0xa64] sm:$0xff]
      %v700 = vld [vmem:[%s1 + $0xa6c] sm:$0xff]
      %v701 = vld [vmem:[%s1 + $0xa74] sm:$0xff]
      %v702 = vld [vmem:[%s1 + $0xa7c] sm:$0xf]
      %v703 = vld [vmem:[%s2] sm:$0x7f]
      %v705 = vlaneseq
      %v706 = vshrl.u32 %v705, 7
      %v707 = vsub.s32 0, %v706
      %v708 = vrot.slane %v703, %v707
      %v709 = vlaneseq
      %v710 = vshrl.u32 %v709, 7
      %v711 = vsub.s32 1, %v710
      %v712 = vrot.slane %v703, %v711
      %v713 = vlaneseq
      %v714 = vshrl.u32 %v713, 7
      %v715 = vsub.s32 2, %v714
      %v716 = vrot.slane %v703, %v715
      %v717 = vlaneseq
      %v718 = vshrl.u32 %v717, 7
      %v719 = vsub.s32 3, %v718
      %v720 = vrot.slane %v703, %v719
      %v721 = vlaneseq
      %v722 = vshrl.u32 %v721, 7
      %v723 = vsub.s32 4, %v722
      %v724 = vrot.slane %v703, %v723
      %v725 = vlaneseq
      %v726 = vshrl.u32 %v725, 7
      %v727 = vsub.s32 5, %v726
      %v728 = vrot.slane %v703, %v727
      %v729 = vlaneseq
      %v730 = vshrl.u32 %v729, 7
      %v731 = vsub.s32 6, %v730
      %v732 = vrot.slane %v703, %v731
      %v1124 = vunpack.c.l.b16 %v319
      %v1125 = vunpack.c.h.b16 %v319
      %v1126 = vunpack.c.l.b16 %v320
      %v1127 = vunpack.c.h.b16 %v320
      %v1128 = vunpack.c.l.b16 %v321
      %v1129 = vunpack.c.h.b16 %v321
      %v1130 = vunpack.c.l.b16 %v322
      %v1131 = vunpack.c.l.b16 %v323
      %v1132 = vunpack.c.h.b16 %v323
      %v1133 = vunpack.c.l.b16 %v324
      %v1134 = vunpack.c.h.b16 %v324
      %v1135 = vunpack.c.l.b16 %v325
      %v1136 = vunpack.c.h.b16 %v325
      %v1137 = vunpack.c.l.b16 %v326
      %v1138 = vunpack.c.l.b16 %v327
      %v1139 = vunpack.c.h.b16 %v327
      %v1140 = vunpack.c.l.b16 %v328
      %v1141 = vunpack.c.h.b16 %v328
      %v1142 = vunpack.c.l.b16 %v329
      %v1143 = vunpack.c.h.b16 %v329
      %v1144 = vunpack.c.l.b16 %v330
      %v1145 = vunpack.c.l.b16 %v331
      %v1146 = vunpack.c.h.b16 %v331
      %v1147 = vunpack.c.l.b16 %v332
      %v1148 = vunpack.c.h.b16 %v332
      %v1149 = vunpack.c.l.b16 %v333
      %v1150 = vunpack.c.h.b16 %v333
      %v1151 = vunpack.c.l.b16 %v334
      %v1152 = vunpack.c.l.b16 %v335
      %v1153 = vunpack.c.h.b16 %v335
      %v1154 = vunpack.c.l.b16 %v336
      %v1155 = vunpack.c.h.b16 %v336
      %v1156 = vunpack.c.l.b16 %v337
      %v1157 = vunpack.c.h.b16 %v337
      %v1158 = vunpack.c.l.b16 %v338
      %v1159 = vunpack.c.l.b16 %v339
      %v1160 = vunpack.c.h.b16 %v339
      %v1161 = vunpack.c.l.b16 %v340
      %v1162 = vunpack.c.h.b16 %v340
      %v1163 = vunpack.c.l.b16 %v341
      %v1164 = vunpack.c.h.b16 %v341
      %v1165 = vunpack.c.l.b16 %v342
      %v1166 = vunpack.c.l.b16 %v343
      %v1167 = vunpack.c.h.b16 %v343
      %v1168 = vunpack.c.l.b16 %v344
      %v1169 = vunpack.c.h.b16 %v344
      %v1170 = vunpack.c.l.b16 %v345
      %v1171 = vunpack.c.h.b16 %v345
      %v1172 = vunpack.c.l.b16 %v346
      %v1173 = vunpack.c.l.b16 %v347
      %v1174 = vunpack.c.h.b16 %v347
      %v1175 = vunpack.c.l.b16 %v348
      %v1176 = vunpack.c.h.b16 %v348
      %v1177 = vunpack.c.l.b16 %v349
      %v1178 = vunpack.c.h.b16 %v349
      %v1179 = vunpack.c.l.b16 %v350
      %v1180 = vunpack.c.l.b16 %v351
      %v1181 = vunpack.c.h.b16 %v351
      %v1182 = vunpack.c.l.b16 %v352
      %v1183 = vunpack.c.h.b16 %v352
      %v1184 = vunpack.c.l.b16 %v353
      %v1185 = vunpack.c.h.b16 %v353
      %v1186 = vunpack.c.l.b16 %v354
      %v1187 = vunpack.c.l.b16 %v355
      %v1188 = vunpack.c.h.b16 %v355
      %v1189 = vunpack.c.l.b16 %v356
      %v1190 = vunpack.c.h.b16 %v356
      %v1191 = vunpack.c.l.b16 %v357
      %v1192 = vunpack.c.h.b16 %v357
      %v1193 = vunpack.c.l.b16 %v358
      %v1194 = vunpack.c.l.b16 %v359
      %v1195 = vunpack.c.h.b16 %v359
      %v1196 = vunpack.c.l.b16 %v360
      %v1197 = vunpack.c.h.b16 %v360
      %v1198 = vunpack.c.l.b16 %v361
      %v1199 = vunpack.c.h.b16 %v361
      %v1200 = vunpack.c.l.b16 %v362
      %v1201 = vunpack.c.l.b16 %v363
      %v1202 = vunpack.c.h.b16 %v363
      %v1203 = vunpack.c.l.b16 %v364
      %v1204 = vunpack.c.h.b16 %v364
      %v1205 = vunpack.c.l.b16 %v365
      %v1206 = vunpack.c.h.b16 %v365
      %v1207 = vunpack.c.l.b16 %v366
      %v1208 = vunpack.c.l.b16 %v367
      %v1209 = vunpack.c.h.b16 %v367
      %v1210 = vunpack.c.l.b16 %v368
      %v1211 = vunpack.c.h.b16 %v368
      %v1212 = vunpack.c.l.b16 %v369
      %v1213 = vunpack.c.h.b16 %v369
      %v1214 = vunpack.c.l.b16 %v370
      %v1215 = vunpack.c.l.b16 %v371
      %v1216 = vunpack.c.h.b16 %v371
      %v1217 = vunpack.c.l.b16 %v372
      %v1218 = vunpack.c.h.b16 %v372
      %v1219 = vunpack.c.l.b16 %v373
      %v1220 = vunpack.c.h.b16 %v373
      %v1221 = vunpack.c.l.b16 %v374
      %v1222 = vunpack.c.l.b16 %v375
      %v1223 = vunpack.c.h.b16 %v375
      %v1224 = vunpack.c.l.b16 %v376
      %v1225 = vunpack.c.h.b16 %v376
      %v1226 = vunpack.c.l.b16 %v377
      %v1227 = vunpack.c.h.b16 %v377
      %v1228 = vunpack.c.l.b16 %v378
      %v1229 = vunpack.c.l.b16 %v379
      %v1230 = vunpack.c.h.b16 %v379
      %v1231 = vunpack.c.l.b16 %v380
      %v1232 = vunpack.c.h.b16 %v380
      %v1233 = vunpack.c.l.b16 %v381
      %v1234 = vunpack.c.h.b16 %v381
      %v1235 = vunpack.c.l.b16 %v382
      %v1236 = vunpack.c.l.b16 %v383
      %v1237 = vunpack.c.h.b16 %v383
      %v1238 = vunpack.c.l.b16 %v384
      %v1239 = vunpack.c.h.b16 %v384
      %v1240 = vunpack.c.l.b16 %v385
      %v1241 = vunpack.c.h.b16 %v385
      %v1242 = vunpack.c.l.b16 %v386
      %v1243 = vunpack.c.l.b16 %v387
      %v1244 = vunpack.c.h.b16 %v387
      %v1245 = vunpack.c.l.b16 %v388
      %v1246 = vunpack.c.h.b16 %v388
      %v1247 = vunpack.c.l.b16 %v389
      %v1248 = vunpack.c.h.b16 %v389
      %v1249 = vunpack.c.l.b16 %v390
      %v1250 = vunpack.c.l.b16 %v391
      %v1251 = vunpack.c.h.b16 %v391
      %v1252 = vunpack.c.l.b16 %v392
      %v1253 = vunpack.c.h.b16 %v392
      %v1254 = vunpack.c.l.b16 %v393
      %v1255 = vunpack.c.h.b16 %v393
      %v1256 = vunpack.c.l.b16 %v394
      %v1257 = vunpack.c.l.b16 %v395
      %v1258 = vunpack.c.h.b16 %v395
      %v1259 = vunpack.c.l.b16 %v396
      %v1260 = vunpack.c.h.b16 %v396
      %v1261 = vunpack.c.l.b16 %v397
      %v1262 = vunpack.c.h.b16 %v397
      %v1263 = vunpack.c.l.b16 %v398
      %v1264 = vunpack.c.l.b16 %v399
      %v1265 = vunpack.c.h.b16 %v399
      %v1266 = vunpack.c.l.b16 %v400
      %v1267 = vunpack.c.h.b16 %v400
      %v1268 = vunpack.c.l.b16 %v401
      %v1269 = vunpack.c.h.b16 %v401
      %v1270 = vunpack.c.l.b16 %v402
      %v1271 = vunpack.c.l.b16 %v403
      %v1272 = vunpack.c.h.b16 %v403
      %v1273 = vunpack.c.l.b16 %v404
      %v1274 = vunpack.c.h.b16 %v404
      %v1275 = vunpack.c.l.b16 %v405
      %v1276 = vunpack.c.h.b16 %v405
      %v1277 = vunpack.c.l.b16 %v406
      %v1278 = vunpack.c.l.b16 %v407
      %v1279 = vunpack.c.h.b16 %v407
      %v1280 = vunpack.c.l.b16 %v408
      %v1281 = vunpack.c.h.b16 %v408
      %v1282 = vunpack.c.l.b16 %v409
      %v1283 = vunpack.c.h.b16 %v409
      %v1284 = vunpack.c.l.b16 %v410
      %v1285 = vunpack.c.l.b16 %v411
      %v1286 = vunpack.c.h.b16 %v411
      %v1287 = vunpack.c.l.b16 %v412
      %v1288 = vunpack.c.h.b16 %v412
      %v1289 = vunpack.c.l.b16 %v413
      %v1290 = vunpack.c.h.b16 %v413
      %v1291 = vunpack.c.l.b16 %v414
      %v1292 = vunpack.c.l.b16 %v415
      %v1293 = vunpack.c.h.b16 %v415
      %v1294 = vunpack.c.l.b16 %v416
      %v1295 = vunpack.c.h.b16 %v416
      %v1296 = vunpack.c.l.b16 %v417
      %v1297 = vunpack.c.h.b16 %v417
      %v1298 = vunpack.c.l.b16 %v418
      %v1299 = vunpack.c.l.b16 %v419
      %v1300 = vunpack.c.h.b16 %v419
      %v1301 = vunpack.c.l.b16 %v420
      %v1302 = vunpack.c.h.b16 %v420
      %v1303 = vunpack.c.l.b16 %v421
      %v1304 = vunpack.c.h.b16 %v421
      %v1305 = vunpack.c.l.b16 %v422
      %v1306 = vunpack.c.l.b16 %v423
      %v1307 = vunpack.c.h.b16 %v423
      %v1308 = vunpack.c.l.b16 %v424
      %v1309 = vunpack.c.h.b16 %v424
      %v1310 = vunpack.c.l.b16 %v425
      %v1311 = vunpack.c.h.b16 %v425
      %v1312 = vunpack.c.l.b16 %v426
      %v1313 = vunpack.c.l.b16 %v427
      %v1314 = vunpack.c.h.b16 %v427
      %v1315 = vunpack.c.l.b16 %v428
      %v1316 = vunpack.c.h.b16 %v428
      %v1317 = vunpack.c.l.b16 %v429
      %v1318 = vunpack.c.h.b16 %v429
      %v1319 = vunpack.c.l.b16 %v430
      %v1320 = vunpack.c.l.b16 %v431
      %v1321 = vunpack.c.h.b16 %v431
      %v1322 = vunpack.c.l.b16 %v432
      %v1323 = vunpack.c.h.b16 %v432
      %v1324 = vunpack.c.l.b16 %v433
      %v1325 = vunpack.c.h.b16 %v433
      %v1326 = vunpack.c.l.b16 %v434
      %v1327 = vunpack.c.l.b16 %v435
      %v1328 = vunpack.c.h.b16 %v435
      %v1329 = vunpack.c.l.b16 %v436
      %v1330 = vunpack.c.h.b16 %v436
      %v1331 = vunpack.c.l.b16 %v437
      %v1332 = vunpack.c.h.b16 %v437
      %v1333 = vunpack.c.l.b16 %v438
      %v1334 = vunpack.c.l.b16 %v439
      %v1335 = vunpack.c.h.b16 %v439
      %v1336 = vunpack.c.l.b16 %v440
      %v1337 = vunpack.c.h.b16 %v440
      %v1338 = vunpack.c.l.b16 %v441
      %v1339 = vunpack.c.h.b16 %v441
      %v1340 = vunpack.c.l.b16 %v442
      %v1341 = vunpack.c.l.b16 %v443
      %v1342 = vunpack.c.h.b16 %v443
      %v1343 = vunpack.c.l.b16 %v444
      %v1344 = vunpack.c.h.b16 %v444
      %v1345 = vunpack.c.l.b16 %v445
      %v1346 = vunpack.c.h.b16 %v445
      %v1347 = vunpack.c.l.b16 %v446
      %v1348 = vunpack.c.l.b16 %v447
      %v1349 = vunpack.c.h.b16 %v447
      %v1350 = vunpack.c.l.b16 %v448
      %v1351 = vunpack.c.h.b16 %v448
      %v1352 = vunpack.c.l.b16 %v449
      %v1353 = vunpack.c.h.b16 %v449
      %v1354 = vunpack.c.l.b16 %v450
      %v1355 = vunpack.c.l.b16 %v451
      %v1356 = vunpack.c.h.b16 %v451
      %v1357 = vunpack.c.l.b16 %v452
      %v1358 = vunpack.c.h.b16 %v452
      %v1359 = vunpack.c.l.b16 %v453
      %v1360 = vunpack.c.h.b16 %v453
      %v1361 = vunpack.c.l.b16 %v454
      %v1362 = vunpack.c.l.b16 %v455
      %v1363 = vunpack.c.h.b16 %v455
      %v1364 = vunpack.c.l.b16 %v456
      %v1365 = vunpack.c.h.b16 %v456
      %v1366 = vunpack.c.l.b16 %v457
      %v1367 = vunpack.c.h.b16 %v457
      %v1368 = vunpack.c.l.b16 %v458
      %v1369 = vunpack.c.l.b16 %v459
      %v1370 = vunpack.c.h.b16 %v459
      %v1371 = vunpack.c.l.b16 %v460
      %v1372 = vunpack.c.h.b16 %v460
      %v1373 = vunpack.c.l.b16 %v461
      %v1374 = vunpack.c.h.b16 %v461
      %v1375 = vunpack.c.l.b16 %v462
      %v1376 = vunpack.c.l.b16 %v463
      %v1377 = vunpack.c.h.b16 %v463
      %v1378 = vunpack.c.l.b16 %v464
      %v1379 = vunpack.c.h.b16 %v464
      %v1380 = vunpack.c.l.b16 %v465
      %v1381 = vunpack.c.h.b16 %v465
      %v1382 = vunpack.c.l.b16 %v466
      %v1383 = vunpack.c.l.b16 %v467
      %v1384 = vunpack.c.h.b16 %v467
      %v1385 = vunpack.c.l.b16 %v468
      %v1386 = vunpack.c.h.b16 %v468
      %v1387 = vunpack.c.l.b16 %v469
      %v1388 = vunpack.c.h.b16 %v469
      %v1389 = vunpack.c.l.b16 %v470
      %v1390 = vunpack.c.l.b16 %v471
      %v1391 = vunpack.c.h.b16 %v471
      %v1392 = vunpack.c.l.b16 %v472
      %v1393 = vunpack.c.h.b16 %v472
      %v1394 = vunpack.c.l.b16 %v473
      %v1395 = vunpack.c.h.b16 %v473
      %v1396 = vunpack.c.l.b16 %v474
      %v1397 = vunpack.c.l.b16 %v475
      %v1398 = vunpack.c.h.b16 %v475
      %v1399 = vunpack.c.l.b16 %v476
      %v1400 = vunpack.c.h.b16 %v476
      %v1401 = vunpack.c.l.b16 %v477
      %v1402 = vunpack.c.h.b16 %v477
      %v1403 = vunpack.c.l.b16 %v478
      %v1404 = vunpack.c.l.b16 %v479
      %v1405 = vunpack.c.h.b16 %v479
      %v1406 = vunpack.c.l.b16 %v480
      %v1407 = vunpack.c.h.b16 %v480
      %v1408 = vunpack.c.l.b16 %v481
      %v1409 = vunpack.c.h.b16 %v481
      %v1410 = vunpack.c.l.b16 %v482
      %v1411 = vunpack.c.l.b16 %v483
      %v1412 = vunpack.c.h.b16 %v483
      %v1413 = vunpack.c.l.b16 %v484
      %v1414 = vunpack.c.h.b16 %v484
      %v1415 = vunpack.c.l.b16 %v485
      %v1416 = vunpack.c.h.b16 %v485
      %v1417 = vunpack.c.l.b16 %v486
      %v1418 = vunpack.c.l.b16 %v487
      %v1419 = vunpack.c.h.b16 %v487
      %v1420 = vunpack.c.l.b16 %v488
      %v1421 = vunpack.c.h.b16 %v488
      %v1422 = vunpack.c.l.b16 %v489
      %v1423 = vunpack.c.h.b16 %v489
      %v1424 = vunpack.c.l.b16 %v490
      %v1425 = vunpack.c.l.b16 %v491
      %v1426 = vunpack.c.h.b16 %v491
      %v1427 = vunpack.c.l.b16 %v492
      %v1428 = vunpack.c.h.b16 %v492
      %v1429 = vunpack.c.l.b16 %v493
      %v1430 = vunpack.c.h.b16 %v493
      %v1431 = vunpack.c.l.b16 %v494
      %v1432 = vunpack.c.l.b16 %v495
      %v1433 = vunpack.c.h.b16 %v495
      %v1434 = vunpack.c.l.b16 %v496
      %v1435 = vunpack.c.h.b16 %v496
      %v1436 = vunpack.c.l.b16 %v497
      %v1437 = vunpack.c.h.b16 %v497
      %v1438 = vunpack.c.l.b16 %v498
      %v1439 = vunpack.c.l.b16 %v499
      %v1440 = vunpack.c.h.b16 %v499
      %v1441 = vunpack.c.l.b16 %v500
      %v1442 = vunpack.c.h.b16 %v500
      %v1443 = vunpack.c.l.b16 %v501
      %v1444 = vunpack.c.h.b16 %v501
      %v1445 = vunpack.c.l.b16 %v502
      %v1446 = vunpack.c.l.b16 %v503
      %v1447 = vunpack.c.h.b16 %v503
      %v1448 = vunpack.c.l.b16 %v504
      %v1449 = vunpack.c.h.b16 %v504
      %v1450 = vunpack.c.l.b16 %v505
      %v1451 = vunpack.c.h.b16 %v505
      %v1452 = vunpack.c.l.b16 %v506
      %v1453 = vunpack.c.l.b16 %v507
      %v1454 = vunpack.c.h.b16 %v507
      %v1455 = vunpack.c.l.b16 %v508
      %v1456 = vunpack.c.h.b16 %v508
      %v1457 = vunpack.c.l.b16 %v509
      %v1458 = vunpack.c.h.b16 %v509
      %v1459 = vunpack.c.l.b16 %v510
      %v1460 = vunpack.c.l.b16 %v511
      %v1461 = vunpack.c.h.b16 %v511
      %v1462 = vunpack.c.l.b16 %v512
      %v1463 = vunpack.c.h.b16 %v512
      %v1464 = vunpack.c.l.b16 %v513
      %v1465 = vunpack.c.h.b16 %v513
      %v1466 = vunpack.c.l.b16 %v514
      %v1467 = vunpack.c.l.b16 %v515
      %v1468 = vunpack.c.h.b16 %v515
      %v1469 = vunpack.c.l.b16 %v516
      %v1470 = vunpack.c.h.b16 %v516
      %v1471 = vunpack.c.l.b16 %v517
      %v1472 = vunpack.c.h.b16 %v517
      %v1473 = vunpack.c.l.b16 %v518
      %v1474 = vunpack.c.l.b16 %v519
      %v1475 = vunpack.c.h.b16 %v519
      %v1476 = vunpack.c.l.b16 %v520
      %v1477 = vunpack.c.h.b16 %v520
      %v1478 = vunpack.c.l.b16 %v521
      %v1479 = vunpack.c.h.b16 %v521
      %v1480 = vunpack.c.l.b16 %v522
      %v1481 = vunpack.c.l.b16 %v523
      %v1482 = vunpack.c.h.b16 %v523
      %v1483 = vunpack.c.l.b16 %v524
      %v1484 = vunpack.c.h.b16 %v524
      %v1485 = vunpack.c.l.b16 %v525
      %v1486 = vunpack.c.h.b16 %v525
      %v1487 = vunpack.c.l.b16 %v526
      %v1488 = vunpack.c.l.b16 %v527
      %v1489 = vunpack.c.h.b16 %v527
      %v1490 = vunpack.c.l.b16 %v528
      %v1491 = vunpack.c.h.b16 %v528
      %v1492 = vunpack.c.l.b16 %v529
      %v1493 = vunpack.c.h.b16 %v529
      %v1494 = vunpack.c.l.b16 %v530
      %v1495 = vunpack.c.l.b16 %v531
      %v1496 = vunpack.c.h.b16 %v531
      %v1497 = vunpack.c.l.b16 %v532
      %v1498 = vunpack.c.h.b16 %v532
      %v1499 = vunpack.c.l.b16 %v533
      %v1500 = vunpack.c.h.b16 %v533
      %v1501 = vunpack.c.l.b16 %v534
      %v1502 = vunpack.c.l.b16 %v535
      %v1503 = vunpack.c.h.b16 %v535
      %v1504 = vunpack.c.l.b16 %v536
      %v1505 = vunpack.c.h.b16 %v536
      %v1506 = vunpack.c.l.b16 %v537
      %v1507 = vunpack.c.h.b16 %v537
      %v1508 = vunpack.c.l.b16 %v538
      %v1509 = vunpack.c.l.b16 %v539
      %v1510 = vunpack.c.h.b16 %v539
      %v1511 = vunpack.c.l.b16 %v540
      %v1512 = vunpack.c.h.b16 %v540
      %v1513 = vunpack.c.l.b16 %v541
      %v1514 = vunpack.c.h.b16 %v541
      %v1515 = vunpack.c.l.b16 %v542
      %v1516 = vunpack.c.l.b16 %v543
      %v1517 = vunpack.c.h.b16 %v543
      %v1518 = vunpack.c.l.b16 %v544
      %v1519 = vunpack.c.h.b16 %v544
      %v1520 = vunpack.c.l.b16 %v545
      %v1521 = vunpack.c.h.b16 %v545
      %v1522 = vunpack.c.l.b16 %v546
      %v1523 = vunpack.c.l.b16 %v547
      %v1524 = vunpack.c.h.b16 %v547
      %v1525 = vunpack.c.l.b16 %v548
      %v1526 = vunpack.c.h.b16 %v548
      %v1527 = vunpack.c.l.b16 %v549
      %v1528 = vunpack.c.h.b16 %v549
      %v1529 = vunpack.c.l.b16 %v550
      %v1530 = vunpack.c.l.b16 %v551
      %v1531 = vunpack.c.h.b16 %v551
      %v1532 = vunpack.c.l.b16 %v552
      %v1533 = vunpack.c.h.b16 %v552
      %v1534 = vunpack.c.l.b16 %v553
      %v1535 = vunpack.c.h.b16 %v553
      %v1536 = vunpack.c.l.b16 %v554
      %v1537 = vunpack.c.l.b16 %v555
      %v1538 = vunpack.c.h.b16 %v555
      %v1539 = vunpack.c.l.b16 %v556
      %v1540 = vunpack.c.h.b16 %v556
      %v1541 = vunpack.c.l.b16 %v557
      %v1542 = vunpack.c.h.b16 %v557
      %v1543 = vunpack.c.l.b16 %v558
      %v1544 = vunpack.c.l.b16 %v559
      %v1545 = vunpack.c.h.b16 %v559
      %v1546 = vunpack.c.l.b16 %v560
      %v1547 = vunpack.c.h.b16 %v560
      %v1548 = vunpack.c.l.b16 %v561
      %v1549 = vunpack.c.h.b16 %v561
      %v1550 = vunpack.c.l.b16 %v562
      %v1551 = vunpack.c.l.b16 %v563
      %v1552 = vunpack.c.h.b16 %v563
      %v1553 = vunpack.c.l.b16 %v564
      %v1554 = vunpack.c.h.b16 %v564
      %v1555 = vunpack.c.l.b16 %v565
      %v1556 = vunpack.c.h.b16 %v565
      %v1557 = vunpack.c.l.b16 %v566
      %v1558 = vunpack.c.l.b16 %v567
      %v1559 = vunpack.c.h.b16 %v567
      %v1560 = vunpack.c.l.b16 %v568
      %v1561 = vunpack.c.h.b16 %v568
      %v1562 = vunpack.c.l.b16 %v569
      %v1563 = vunpack.c.h.b16 %v569
      %v1564 = vunpack.c.l.b16 %v570
      %v1565 = vunpack.c.l.b16 %v571
      %v1566 = vunpack.c.h.b16 %v571
      %v1567 = vunpack.c.l.b16 %v572
      %v1568 = vunpack.c.h.b16 %v572
      %v1569 = vunpack.c.l.b16 %v573
      %v1570 = vunpack.c.h.b16 %v573
      %v1571 = vunpack.c.l.b16 %v574
      %v1572 = vunpack.c.l.b16 %v575
      %v1573 = vunpack.c.h.b16 %v575
      %v1574 = vunpack.c.l.b16 %v576
      %v1575 = vunpack.c.h.b16 %v576
      %v1576 = vunpack.c.l.b16 %v577
      %v1577 = vunpack.c.h.b16 %v577
      %v1578 = vunpack.c.l.b16 %v578
      %v1579 = vunpack.c.l.b16 %v579
      %v1580 = vunpack.c.h.b16 %v579
      %v1581 = vunpack.c.l.b16 %v580
      %v1582 = vunpack.c.h.b16 %v580
      %v1583 = vunpack.c.l.b16 %v581
      %v1584 = vunpack.c.h.b16 %v581
      %v1585 = vunpack.c.l.b16 %v582
      %v1586 = vunpack.c.l.b16 %v583
      %v1587 = vunpack.c.h.b16 %v583
      %v1588 = vunpack.c.l.b16 %v584
      %v1589 = vunpack.c.h.b16 %v584
      %v1590 = vunpack.c.l.b16 %v585
      %v1591 = vunpack.c.h.b16 %v585
      %v1592 = vunpack.c.l.b16 %v586
      %v1593 = vunpack.c.l.b16 %v587
      %v1594 = vunpack.c.h.b16 %v587
      %v1595 = vunpack.c.l.b16 %v588
      %v1596 = vunpack.c.h.b16 %v588
      %v1597 = vunpack.c.l.b16 %v589
      %v1598 = vunpack.c.h.b16 %v589
      %v1599 = vunpack.c.l.b16 %v590
      %v1600 = vunpack.c.l.b16 %v591
      %v1601 = vunpack.c.h.b16 %v591
      %v1602 = vunpack.c.l.b16 %v592
      %v1603 = vunpack.c.h.b16 %v592
      %v1604 = vunpack.c.l.b16 %v593
      %v1605 = vunpack.c.h.b16 %v593
      %v1606 = vunpack.c.l.b16 %v594
      %v1607 = vunpack.c.l.b16 %v595
      %v1608 = vunpack.c.h.b16 %v595
      %v1609 = vunpack.c.l.b16 %v596
      %v1610 = vunpack.c.h.b16 %v596
      %v1611 = vunpack.c.l.b16 %v597
      %v1612 = vunpack.c.h.b16 %v597
      %v1613 = vunpack.c.l.b16 %v598
      %v1614 = vunpack.c.l.b16 %v599
      %v1615 = vunpack.c.h.b16 %v599
      %v1616 = vunpack.c.l.b16 %v600
      %v1617 = vunpack.c.h.b16 %v600
      %v1618 = vunpack.c.l.b16 %v601
      %v1619 = vunpack.c.h.b16 %v601
      %v1620 = vunpack.c.l.b16 %v602
      %v1621 = vunpack.c.l.b16 %v603
      %v1622 = vunpack.c.h.b16 %v603
      %v1623 = vunpack.c.l.b16 %v604
      %v1624 = vunpack.c.h.b16 %v604
      %v1625 = vunpack.c.l.b16 %v605
      %v1626 = vunpack.c.h.b16 %v605
      %v1627 = vunpack.c.l.b16 %v606
      %v1628 = vunpack.c.l.b16 %v607
      %v1629 = vunpack.c.h.b16 %v607
      %v1630 = vunpack.c.l.b16 %v608
      %v1631 = vunpack.c.h.b16 %v608
      %v1632 = vunpack.c.l.b16 %v609
      %v1633 = vunpack.c.h.b16 %v609
      %v1634 = vunpack.c.l.b16 %v610
      %v1635 = vunpack.c.l.b16 %v611
      %v1636 = vunpack.c.h.b16 %v611
      %v1637 = vunpack.c.l.b16 %v612
      %v1638 = vunpack.c.h.b16 %v612
      %v1639 = vunpack.c.l.b16 %v613
      %v1640 = vunpack.c.h.b16 %v613
      %v1641 = vunpack.c.l.b16 %v614
      %v1642 = vunpack.c.l.b16 %v615
      %v1643 = vunpack.c.h.b16 %v615
      %v1644 = vunpack.c.l.b16 %v616
      %v1645 = vunpack.c.h.b16 %v616
      %v1646 = vunpack.c.l.b16 %v617
      %v1647 = vunpack.c.h.b16 %v617
      %v1648 = vunpack.c.l.b16 %v618
      %v1649 = vunpack.c.l.b16 %v619
      %v1650 = vunpack.c.h.b16 %v619
      %v1651 = vunpack.c.l.b16 %v620
      %v1652 = vunpack.c.h.b16 %v620
      %v1653 = vunpack.c.l.b16 %v621
      %v1654 = vunpack.c.h.b16 %v621
      %v1655 = vunpack.c.l.b16 %v622
      %v1656 = vunpack.c.l.b16 %v623
      %v1657 = vunpack.c.h.b16 %v623
      %v1658 = vunpack.c.l.b16 %v624
      %v1659 = vunpack.c.h.b16 %v624
      %v1660 = vunpack.c.l.b16 %v625
      %v1661 = vunpack.c.h.b16 %v625
      %v1662 = vunpack.c.l.b16 %v626
      %v1663 = vunpack.c.l.b16 %v627
      %v1664 = vunpack.c.h.b16 %v627
      %v1665 = vunpack.c.l.b16 %v628
      %v1666 = vunpack.c.h.b16 %v628
      %v1667 = vunpack.c.l.b16 %v629
      %v1668 = vunpack.c.h.b16 %v629
      %v1669 = vunpack.c.l.b16 %v630
      %v1670 = vunpack.c.l.b16 %v631
      %v1671 = vunpack.c.h.b16 %v631
      %v1672 = vunpack.c.l.b16 %v632
      %v1673 = vunpack.c.h.b16 %v632
      %v1674 = vunpack.c.l.b16 %v633
      %v1675 = vunpack.c.h.b16 %v633
      %v1676 = vunpack.c.l.b16 %v634
      %v1677 = vunpack.c.l.b16 %v635
      %v1678 = vunpack.c.h.b16 %v635
      %v1679 = vunpack.c.l.b16 %v636
      %v1680 = vunpack.c.h.b16 %v636
      %v1681 = vunpack.c.l.b16 %v637
      %v1682 = vunpack.c.h.b16 %v637
      %v1683 = vunpack.c.l.b16 %v638
      %v1684 = vunpack.c.l.b16 %v639
      %v1685 = vunpack.c.h.b16 %v639
      %v1686 = vunpack.c.l.b16 %v640
      %v1687 = vunpack.c.h.b16 %v640
      %v1688 = vunpack.c.l.b16 %v641
      %v1689 = vunpack.c.h.b16 %v641
      %v1690 = vunpack.c.l.b16 %v642
      %v1691 = vunpack.c.l.b16 %v643
      %v1692 = vunpack.c.h.b16 %v643
      %v1693 = vunpack.c.l.b16 %v644
      %v1694 = vunpack.c.h.b16 %v644
      %v1695 = vunpack.c.l.b16 %v645
      %v1696 = vunpack.c.h.b16 %v645
      %v1697 = vunpack.c.l.b16 %v646
      %v1698 = vunpack.c.l.b16 %v647
      %v1699 = vunpack.c.h.b16 %v647
      %v1700 = vunpack.c.l.b16 %v648
      %v1701 = vunpack.c.h.b16 %v648
      %v1702 = vunpack.c.l.b16 %v649
      %v1703 = vunpack.c.h.b16 %v649
      %v1704 = vunpack.c.l.b16 %v650
      %v1705 = vunpack.c.l.b16 %v651
      %v1706 = vunpack.c.h.b16 %v651
      %v1707 = vunpack.c.l.b16 %v652
      %v1708 = vunpack.c.h.b16 %v652
      %v1709 = vunpack.c.l.b16 %v653
      %v1710 = vunpack.c.h.b16 %v653
      %v1711 = vunpack.c.l.b16 %v654
      %v1712 = vunpack.c.l.b16 %v655
      %v1713 = vunpack.c.h.b16 %v655
      %v1714 = vunpack.c.l.b16 %v656
      %v1715 = vunpack.c.h.b16 %v656
      %v1716 = vunpack.c.l.b16 %v657
      %v1717 = vunpack.c.h.b16 %v657
      %v1718 = vunpack.c.l.b16 %v658
      %v1719 = vunpack.c.l.b16 %v659
      %v1720 = vunpack.c.h.b16 %v659
      %v1721 = vunpack.c.l.b16 %v660
      %v1722 = vunpack.c.h.b16 %v660
      %v1723 = vunpack.c.l.b16 %v661
      %v1724 = vunpack.c.h.b16 %v661
      %v1725 = vunpack.c.l.b16 %v662
      %v1726 = vunpack.c.l.b16 %v663
      %v1727 = vunpack.c.h.b16 %v663
      %v1728 = vunpack.c.l.b16 %v664
      %v1729 = vunpack.c.h.b16 %v664
      %v1730 = vunpack.c.l.b16 %v665
      %v1731 = vunpack.c.h.b16 %v665
      %v1732 = vunpack.c.l.b16 %v666
      %v1733 = vunpack.c.l.b16 %v667
      %v1734 = vunpack.c.h.b16 %v667
      %v1735 = vunpack.c.l.b16 %v668
      %v1736 = vunpack.c.h.b16 %v668
      %v1737 = vunpack.c.l.b16 %v669
      %v1738 = vunpack.c.h.b16 %v669
      %v1739 = vunpack.c.l.b16 %v670
      %v1740 = vunpack.c.l.b16 %v671
      %v1741 = vunpack.c.h.b16 %v671
      %v1742 = vunpack.c.l.b16 %v672
      %v1743 = vunpack.c.h.b16 %v672
      %v1744 = vunpack.c.l.b16 %v673
      %v1745 = vunpack.c.h.b16 %v673
      %v1746 = vunpack.c.l.b16 %v674
      %v1747 = vunpack.c.l.b16 %v675
      %v1748 = vunpack.c.h.b16 %v675
      %v1749 = vunpack.c.l.b16 %v676
      %v1750 = vunpack.c.h.b16 %v676
      %v1751 = vunpack.c.l.b16 %v677
      %v1752 = vunpack.c.h.b16 %v677
      %v1753 = vunpack.c.l.b16 %v678
      %v1754 = vunpack.c.l.b16 %v679
      %v1755 = vunpack.c.h.b16 %v679
      %v1756 = vunpack.c.l.b16 %v680
      %v1757 = vunpack.c.h.b16 %v680
      %v1758 = vunpack.c.l.b16 %v681
      %v1759 = vunpack.c.h.b16 %v681
      %v1760 = vunpack.c.l.b16 %v682
      %v1761 = vunpack.c.l.b16 %v683
      %v1762 = vunpack.c.h.b16 %v683
      %v1763 = vunpack.c.l.b16 %v684
      %v1764 = vunpack.c.h.b16 %v684
      %v1765 = vunpack.c.l.b16 %v685
      %v1766 = vunpack.c.h.b16 %v685
      %v1767 = vunpack.c.l.b16 %v686
      %v1768 = vunpack.c.l.b16 %v687
      %v1769 = vunpack.c.h.b16 %v687
      %v1770 = vunpack.c.l.b16 %v688
      %v1771 = vunpack.c.h.b16 %v688
      %v1772 = vunpack.c.l.b16 %v689
      %v1773 = vunpack.c.h.b16 %v689
      %v1774 = vunpack.c.l.b16 %v690
      %v1775 = vunpack.c.l.b16 %v691
      %v1776 = vunpack.c.h.b16 %v691
      %v1777 = vunpack.c.l.b16 %v692
      %v1778 = vunpack.c.h.b16 %v692
      %v1779 = vunpack.c.l.b16 %v693
      %v1780 = vunpack.c.h.b16 %v693
      %v1781 = vunpack.c.l.b16 %v694
      %v1782 = vunpack.c.l.b16 %v695
      %v1783 = vunpack.c.h.b16 %v695
      %v1784 = vunpack.c.l.b16 %v696
      %v1785 = vunpack.c.h.b16 %v696
      %v1786 = vunpack.c.l.b16 %v697
      %v1787 = vunpack.c.h.b16 %v697
      %v1788 = vunpack.c.l.b16 %v698
      %v1789 = vunpack.c.l.b16 %v699
      %v1790 = vunpack.c.h.b16 %v699
      %v1791 = vunpack.c.l.b16 %v700
      %v1792 = vunpack.c.h.b16 %v700
      %v1793 = vunpack.c.l.b16 %v701
      %v1794 = vunpack.c.h.b16 %v701
      %v1795 = vunpack.c.l.b16 %v702
      %v1796 = vpack.c.b16 %v1131, %v1124
      %v1797 = vpack.c.b16 %v1132, %v1125
      %v1798 = vpack.c.b16 %v1133, %v1126
      %v1799 = vpack.c.b16 %v1134, %v1127
      %v1800 = vpack.c.b16 %v1135, %v1128
      %v1801 = vpack.c.b16 %v1136, %v1129
      %v1802 = vpack.c.b16 %v1137, %v1130
      %v1803 = vpack.c.b16 %v1145, %v1138
      %v1804 = vpack.c.b16 %v1146, %v1139
      %v1805 = vpack.c.b16 %v1147, %v1140
      %v1806 = vpack.c.b16 %v1148, %v1141
      %v1807 = vpack.c.b16 %v1149, %v1142
      %v1808 = vpack.c.b16 %v1150, %v1143
      %v1809 = vpack.c.b16 %v1151, %v1144
      %v1810 = vpack.c.b16 %v1159, %v1152
      %v1811 = vpack.c.b16 %v1160, %v1153
      %v1812 = vpack.c.b16 %v1161, %v1154
      %v1813 = vpack.c.b16 %v1162, %v1155
      %v1814 = vpack.c.b16 %v1163, %v1156
      %v1815 = vpack.c.b16 %v1164, %v1157
      %v1816 = vpack.c.b16 %v1165, %v1158
      %v1817 = vpack.c.b16 %v1173, %v1166
      %v1818 = vpack.c.b16 %v1174, %v1167
      %v1819 = vpack.c.b16 %v1175, %v1168
      %v1820 = vpack.c.b16 %v1176, %v1169
      %v1821 = vpack.c.b16 %v1177, %v1170
      %v1822 = vpack.c.b16 %v1178, %v1171
      %v1823 = vpack.c.b16 %v1179, %v1172
      %v1824 = vpack.c.b16 %v1187, %v1180
      %v1825 = vpack.c.b16 %v1188, %v1181
      %v1826 = vpack.c.b16 %v1189, %v1182
      %v1827 = vpack.c.b16 %v1190, %v1183
      %v1828 = vpack.c.b16 %v1191, %v1184
      %v1829 = vpack.c.b16 %v1192, %v1185
      %v1830 = vpack.c.b16 %v1193, %v1186
      %v1831 = vpack.c.b16 %v1201, %v1194
      %v1832 = vpack.c.b16 %v1202, %v1195
      %v1833 = vpack.c.b16 %v1203, %v1196
      %v1834 = vpack.c.b16 %v1204, %v1197
      %v1835 = vpack.c.b16 %v1205, %v1198
      %v1836 = vpack.c.b16 %v1206, %v1199
      %v1837 = vpack.c.b16 %v1207, %v1200
      %v1838 = vpack.c.b16 %v1215, %v1208
      %v1839 = vpack.c.b16 %v1216, %v1209
      %v1840 = vpack.c.b16 %v1217, %v1210
      %v1841 = vpack.c.b16 %v1218, %v1211
      %v1842 = vpack.c.b16 %v1219, %v1212
      %v1843 = vpack.c.b16 %v1220, %v1213
      %v1844 = vpack.c.b16 %v1221, %v1214
      %v1845 = vpack.c.b16 %v1229, %v1222
      %v1846 = vpack.c.b16 %v1230, %v1223
      %v1847 = vpack.c.b16 %v1231, %v1224
      %v1848 = vpack.c.b16 %v1232, %v1225
      %v1849 = vpack.c.b16 %v1233, %v1226
      %v1850 = vpack.c.b16 %v1234, %v1227
      %v1851 = vpack.c.b16 %v1235, %v1228
      %v1852 = vpack.c.b16 %v1243, %v1236
      %v1853 = vpack.c.b16 %v1244, %v1237
      %v1854 = vpack.c.b16 %v1245, %v1238
      %v1855 = vpack.c.b16 %v1246, %v1239
      %v1856 = vpack.c.b16 %v1247, %v1240
      %v1857 = vpack.c.b16 %v1248, %v1241
      %v1858 = vpack.c.b16 %v1249, %v1242
      %v1859 = vpack.c.b16 %v1257, %v1250
      %v1860 = vpack.c.b16 %v1258, %v1251
      %v1861 = vpack.c.b16 %v1259, %v1252
      %v1862 = vpack.c.b16 %v1260, %v1253
      %v1863 = vpack.c.b16 %v1261, %v1254
      %v1864 = vpack.c.b16 %v1262, %v1255
      %v1865 = vpack.c.b16 %v1263, %v1256
      %v1866 = vpack.c.b16 %v1271, %v1264
      %v1867 = vpack.c.b16 %v1272, %v1265
      %v1868 = vpack.c.b16 %v1273, %v1266
      %v1869 = vpack.c.b16 %v1274, %v1267
      %v1870 = vpack.c.b16 %v1275, %v1268
      %v1871 = vpack.c.b16 %v1276, %v1269
      %v1872 = vpack.c.b16 %v1277, %v1270
      %v1873 = vpack.c.b16 %v1285, %v1278
      %v1874 = vpack.c.b16 %v1286, %v1279
      %v1875 = vpack.c.b16 %v1287, %v1280
      %v1876 = vpack.c.b16 %v1288, %v1281
      %v1877 = vpack.c.b16 %v1289, %v1282
      %v1878 = vpack.c.b16 %v1290, %v1283
      %v1879 = vpack.c.b16 %v1291, %v1284
      %v1880 = vpack.c.b16 %v1299, %v1292
      %v1881 = vpack.c.b16 %v1300, %v1293
      %v1882 = vpack.c.b16 %v1301, %v1294
      %v1883 = vpack.c.b16 %v1302, %v1295
      %v1884 = vpack.c.b16 %v1303, %v1296
      %v1885 = vpack.c.b16 %v1304, %v1297
      %v1886 = vpack.c.b16 %v1305, %v1298
      %v1887 = vpack.c.b16 %v1313, %v1306
      %v1888 = vpack.c.b16 %v1314, %v1307
      %v1889 = vpack.c.b16 %v1315, %v1308
      %v1890 = vpack.c.b16 %v1316, %v1309
      %v1891 = vpack.c.b16 %v1317, %v1310
      %v1892 = vpack.c.b16 %v1318, %v1311
      %v1893 = vpack.c.b16 %v1319, %v1312
      %v1894 = vpack.c.b16 %v1327, %v1320
      %v1895 = vpack.c.b16 %v1328, %v1321
      %v1896 = vpack.c.b16 %v1329, %v1322
      %v1897 = vpack.c.b16 %v1330, %v1323
      %v1898 = vpack.c.b16 %v1331, %v1324
      %v1899 = vpack.c.b16 %v1332, %v1325
      %v1900 = vpack.c.b16 %v1333, %v1326
      %v1901 = vpack.c.b16 %v1341, %v1334
      %v1902 = vpack.c.b16 %v1342, %v1335
      %v1903 = vpack.c.b16 %v1343, %v1336
      %v1904 = vpack.c.b16 %v1344, %v1337
      %v1905 = vpack.c.b16 %v1345, %v1338
      %v1906 = vpack.c.b16 %v1346, %v1339
      %v1907 = vpack.c.b16 %v1347, %v1340
      %v1908 = vpack.c.b16 %v1355, %v1348
      %v1909 = vpack.c.b16 %v1356, %v1349
      %v1910 = vpack.c.b16 %v1357, %v1350
      %v1911 = vpack.c.b16 %v1358, %v1351
      %v1912 = vpack.c.b16 %v1359, %v1352
      %v1913 = vpack.c.b16 %v1360, %v1353
      %v1914 = vpack.c.b16 %v1361, %v1354
      %v1915 = vpack.c.b16 %v1369, %v1362
      %v1916 = vpack.c.b16 %v1370, %v1363
      %v1917 = vpack.c.b16 %v1371, %v1364
      %v1918 = vpack.c.b16 %v1372, %v1365
      %v1919 = vpack.c.b16 %v1373, %v1366
      %v1920 = vpack.c.b16 %v1374, %v1367
      %v1921 = vpack.c.b16 %v1375, %v1368
      %v1922 = vpack.c.b16 %v1383, %v1376
      %v1923 = vpack.c.b16 %v1384, %v1377
      %v1924 = vpack.c.b16 %v1385, %v1378
      %v1925 = vpack.c.b16 %v1386, %v1379
      %v1926 = vpack.c.b16 %v1387, %v1380
      %v1927 = vpack.c.b16 %v1388, %v1381
      %v1928 = vpack.c.b16 %v1389, %v1382
      %v1929 = vpack.c.b16 %v1397, %v1390
      %v1930 = vpack.c.b16 %v1398, %v1391
      %v1931 = vpack.c.b16 %v1399, %v1392
      %v1932 = vpack.c.b16 %v1400, %v1393
      %v1933 = vpack.c.b16 %v1401, %v1394
      %v1934 = vpack.c.b16 %v1402, %v1395
      %v1935 = vpack.c.b16 %v1403, %v1396
      %v1936 = vpack.c.b16 %v1411, %v1404
      %v1937 = vpack.c.b16 %v1412, %v1405
      %v1938 = vpack.c.b16 %v1413, %v1406
      %v1939 = vpack.c.b16 %v1414, %v1407
      %v1940 = vpack.c.b16 %v1415, %v1408
      %v1941 = vpack.c.b16 %v1416, %v1409
      %v1942 = vpack.c.b16 %v1417, %v1410
      %v1943 = vpack.c.b16 %v1425, %v1418
      %v1944 = vpack.c.b16 %v1426, %v1419
      %v1945 = vpack.c.b16 %v1427, %v1420
      %v1946 = vpack.c.b16 %v1428, %v1421
      %v1947 = vpack.c.b16 %v1429, %v1422
      %v1948 = vpack.c.b16 %v1430, %v1423
      %v1949 = vpack.c.b16 %v1431, %v1424
      %v1950 = vpack.c.b16 %v1439, %v1432
      %v1951 = vpack.c.b16 %v1440, %v1433
      %v1952 = vpack.c.b16 %v1441, %v1434
      %v1953 = vpack.c.b16 %v1442, %v1435
      %v1954 = vpack.c.b16 %v1443, %v1436
      %v1955 = vpack.c.b16 %v1444, %v1437
      %v1956 = vpack.c.b16 %v1445, %v1438
      %v1957 = vpack.c.b16 %v1453, %v1446
      %v1958 = vpack.c.b16 %v1454, %v1447
      %v1959 = vpack.c.b16 %v1455, %v1448
      %v1960 = vpack.c.b16 %v1456, %v1449
      %v1961 = vpack.c.b16 %v1457, %v1450
      %v1962 = vpack.c.b16 %v1458, %v1451
      %v1963 = vpack.c.b16 %v1459, %v1452
      %v1964 = vpack.c.b16 %v1467, %v1460
      %v1965 = vpack.c.b16 %v1468, %v1461
      %v1966 = vpack.c.b16 %v1469, %v1462
      %v1967 = vpack.c.b16 %v1470, %v1463
      %v1968 = vpack.c.b16 %v1471, %v1464
      %v1969 = vpack.c.b16 %v1472, %v1465
      %v1970 = vpack.c.b16 %v1473, %v1466
      %v1971 = vpack.c.b16 %v1481, %v1474
      %v1972 = vpack.c.b16 %v1482, %v1475
      %v1973 = vpack.c.b16 %v1483, %v1476
      %v1974 = vpack.c.b16 %v1484, %v1477
      %v1975 = vpack.c.b16 %v1485, %v1478
      %v1976 = vpack.c.b16 %v1486, %v1479
      %v1977 = vpack.c.b16 %v1487, %v1480
      %v1978 = vpack.c.b16 %v1495, %v1488
      %v1979 = vpack.c.b16 %v1496, %v1489
      %v1980 = vpack.c.b16 %v1497, %v1490
      %v1981 = vpack.c.b16 %v1498, %v1491
      %v1982 = vpack.c.b16 %v1499, %v1492
      %v1983 = vpack.c.b16 %v1500, %v1493
      %v1984 = vpack.c.b16 %v1501, %v1494
      %v1985 = vpack.c.b16 %v1509, %v1502
      %v1986 = vpack.c.b16 %v1510, %v1503
      %v1987 = vpack.c.b16 %v1511, %v1504
      %v1988 = vpack.c.b16 %v1512, %v1505
      %v1989 = vpack.c.b16 %v1513, %v1506
      %v1990 = vpack.c.b16 %v1514, %v1507
      %v1991 = vpack.c.b16 %v1515, %v1508
      %v1992 = vpack.c.b16 %v1523, %v1516
      %v1993 = vpack.c.b16 %v1524, %v1517
      %v1994 = vpack.c.b16 %v1525, %v1518
      %v1995 = vpack.c.b16 %v1526, %v1519
      %v1996 = vpack.c.b16 %v1527, %v1520
      %v1997 = vpack.c.b16 %v1528, %v1521
      %v1998 = vpack.c.b16 %v1529, %v1522
      %v1999 = vpack.c.b16 %v1537, %v1530
      %v2000 = vpack.c.b16 %v1538, %v1531
      %v2001 = vpack.c.b16 %v1539, %v1532
      %v2002 = vpack.c.b16 %v1540, %v1533
      %v2003 = vpack.c.b16 %v1541, %v1534
      %v2004 = vpack.c.b16 %v1542, %v1535
      %v2005 = vpack.c.b16 %v1543, %v1536
      %v2006 = vpack.c.b16 %v1551, %v1544
      %v2007 = vpack.c.b16 %v1552, %v1545
      %v2008 = vpack.c.b16 %v1553, %v1546
      %v2009 = vpack.c.b16 %v1554, %v1547
      %v2010 = vpack.c.b16 %v1555, %v1548
      %v2011 = vpack.c.b16 %v1556, %v1549
      %v2012 = vpack.c.b16 %v1557, %v1550
      %v2013 = vpack.c.b16 %v1565, %v1558
      %v2014 = vpack.c.b16 %v1566, %v1559
      %v2015 = vpack.c.b16 %v1567, %v1560
      %v2016 = vpack.c.b16 %v1568, %v1561
      %v2017 = vpack.c.b16 %v1569, %v1562
      %v2018 = vpack.c.b16 %v1570, %v1563
      %v2019 = vpack.c.b16 %v1571, %v1564
      %v2020 = vpack.c.b16 %v1579, %v1572
      %v2021 = vpack.c.b16 %v1580, %v1573
      %v2022 = vpack.c.b16 %v1581, %v1574
      %v2023 = vpack.c.b16 %v1582, %v1575
      %v2024 = vpack.c.b16 %v1583, %v1576
      %v2025 = vpack.c.b16 %v1584, %v1577
      %v2026 = vpack.c.b16 %v1585, %v1578
      %v2027 = vpack.c.b16 %v1593, %v1586
      %v2028 = vpack.c.b16 %v1594, %v1587
      %v2029 = vpack.c.b16 %v1595, %v1588
      %v2030 = vpack.c.b16 %v1596, %v1589
      %v2031 = vpack.c.b16 %v1597, %v1590
      %v2032 = vpack.c.b16 %v1598, %v1591
      %v2033 = vpack.c.b16 %v1599, %v1592
      %v2034 = vpack.c.b16 %v1607, %v1600
      %v2035 = vpack.c.b16 %v1608, %v1601
      %v2036 = vpack.c.b16 %v1609, %v1602
      %v2037 = vpack.c.b16 %v1610, %v1603
      %v2038 = vpack.c.b16 %v1611, %v1604
      %v2039 = vpack.c.b16 %v1612, %v1605
      %v2040 = vpack.c.b16 %v1613, %v1606
      %v2041 = vpack.c.b16 %v1621, %v1614
      %v2042 = vpack.c.b16 %v1622, %v1615
      %v2043 = vpack.c.b16 %v1623, %v1616
      %v2044 = vpack.c.b16 %v1624, %v1617
      %v2045 = vpack.c.b16 %v1625, %v1618
      %v2046 = vpack.c.b16 %v1626, %v1619
      %v2047 = vpack.c.b16 %v1627, %v1620
      %v2048 = vpack.c.b16 %v1635, %v1628
      %v2049 = vpack.c.b16 %v1636, %v1629
      %v2050 = vpack.c.b16 %v1637, %v1630
      %v2051 = vpack.c.b16 %v1638, %v1631
      %v2052 = vpack.c.b16 %v1639, %v1632
      %v2053 = vpack.c.b16 %v1640, %v1633
      %v2054 = vpack.c.b16 %v1641, %v1634
      %v2055 = vpack.c.b16 %v1649, %v1642
      %v2056 = vpack.c.b16 %v1650, %v1643
      %v2057 = vpack.c.b16 %v1651, %v1644
      %v2058 = vpack.c.b16 %v1652, %v1645
      %v2059 = vpack.c.b16 %v1653, %v1646
      %v2060 = vpack.c.b16 %v1654, %v1647
      %v2061 = vpack.c.b16 %v1655, %v1648
      %v2062 = vpack.c.b16 %v1663, %v1656
      %v2063 = vpack.c.b16 %v1664, %v1657
      %v2064 = vpack.c.b16 %v1665, %v1658
      %v2065 = vpack.c.b16 %v1666, %v1659
      %v2066 = vpack.c.b16 %v1667, %v1660
      %v2067 = vpack.c.b16 %v1668, %v1661
      %v2068 = vpack.c.b16 %v1669, %v1662
      %v2069 = vpack.c.b16 %v1677, %v1670
      %v2070 = vpack.c.b16 %v1678, %v1671
      %v2071 = vpack.c.b16 %v1679, %v1672
      %v2072 = vpack.c.b16 %v1680, %v1673
      %v2073 = vpack.c.b16 %v1681, %v1674
      %v2074 = vpack.c.b16 %v1682, %v1675
      %v2075 = vpack.c.b16 %v1683, %v1676
      %v2076 = vpack.c.b16 %v1691, %v1684
      %v2077 = vpack.c.b16 %v1692, %v1685
      %v2078 = vpack.c.b16 %v1693, %v1686
      %v2079 = vpack.c.b16 %v1694, %v1687
      %v2080 = vpack.c.b16 %v1695, %v1688
      %v2081 = vpack.c.b16 %v1696, %v1689
      %v2082 = vpack.c.b16 %v1697, %v1690
      %v2083 = vpack.c.b16 %v1705, %v1698
      %v2084 = vpack.c.b16 %v1706, %v1699
      %v2085 = vpack.c.b16 %v1707, %v1700
      %v2086 = vpack.c.b16 %v1708, %v1701
      %v2087 = vpack.c.b16 %v1709, %v1702
      %v2088 = vpack.c.b16 %v1710, %v1703
      %v2089 = vpack.c.b16 %v1711, %v1704
      %v2090 = vpack.c.b16 %v1719, %v1712
      %v2091 = vpack.c.b16 %v1720, %v1713
      %v2092 = vpack.c.b16 %v1721, %v1714
      %v2093 = vpack.c.b16 %v1722, %v1715
      %v2094 = vpack.c.b16 %v1723, %v1716
      %v2095 = vpack.c.b16 %v1724, %v1717
      %v2096 = vpack.c.b16 %v1725, %v1718
      %v2097 = vpack.c.b16 %v1733, %v1726
      %v2098 = vpack.c.b16 %v1734, %v1727
      %v2099 = vpack.c.b16 %v1735, %v1728
      %v2100 = vpack.c.b16 %v1736, %v1729
      %v2101 = vpack.c.b16 %v1737, %v1730
      %v2102 = vpack.c.b16 %v1738, %v1731
      %v2103 = vpack.c.b16 %v1739, %v1732
      %v2104 = vpack.c.b16 %v1747, %v1740
      %v2105 = vpack.c.b16 %v1748, %v1741
      %v2106 = vpack.c.b16 %v1749, %v1742
      %v2107 = vpack.c.b16 %v1750, %v1743
      %v2108 = vpack.c.b16 %v1751, %v1744
      %v2109 = vpack.c.b16 %v1752, %v1745
      %v2110 = vpack.c.b16 %v1753, %v1746
      %v2111 = vpack.c.b16 %v1761, %v1754
      %v2112 = vpack.c.b16 %v1762, %v1755
      %v2113 = vpack.c.b16 %v1763, %v1756
      %v2114 = vpack.c.b16 %v1764, %v1757
      %v2115 = vpack.c.b16 %v1765, %v1758
      %v2116 = vpack.c.b16 %v1766, %v1759
      %v2117 = vpack.c.b16 %v1767, %v1760
      %v2118 = vpack.c.b16 %v1775, %v1768
      %v2119 = vpack.c.b16 %v1776, %v1769
      %v2120 = vpack.c.b16 %v1777, %v1770
      %v2121 = vpack.c.b16 %v1778, %v1771
      %v2122 = vpack.c.b16 %v1779, %v1772
      %v2123 = vpack.c.b16 %v1780, %v1773
      %v2124 = vpack.c.b16 %v1781, %v1774
      %v2125 = vpack.c.b16 %v1789, %v1782
      %v2126 = vpack.c.b16 %v1790, %v1783
      %v2127 = vpack.c.b16 %v1791, %v1784
      %v2128 = vpack.c.b16 %v1792, %v1785
      %v2129 = vpack.c.b16 %v1793, %v1786
      %v2130 = vpack.c.b16 %v1794, %v1787
      %v2131 = vpack.c.b16 %v1795, %v1788
      %2468 = vmatprep.subr.bf16.mxu0 %v1797
      %2469 = vmatpush1.bf16.msra.mxu0 %v1796
      %2470 = vmatprep.subr.bf16.mxu0 %v1804
      %2471 = vmatpush1.bf16.msra.mxu0 %v1803
      %2472 = vmatprep.subr.bf16.mxu0 %v1811
      %2473 = vmatpush1.bf16.msra.mxu0 %v1810
      %2474 = vmatprep.subr.bf16.mxu0 %v1818
      %2475 = vmatpush1.bf16.msra.mxu0 %v1817
      %2476 = vmatprep.subr.bf16.mxu0 %v1825
      %2477 = vmatpush1.bf16.msra.mxu0 %v1824
      %2478 = vmatprep.subr.bf16.mxu0 %v1832
      %2479 = vmatpush1.bf16.msra.mxu0 %v1831
      %2480 = vmatprep.subr.bf16.mxu0 %v1839
      %2481 = vmatpush1.bf16.msra.mxu0 %v1838
      %2482 = vmatprep.subr.bf16.mxu0 %v1846
      %2483 = vmatpush1.bf16.msra.mxu0 %v1845
      %2484 = vmatprep.subr.bf16.mxu0 %v1853
      %2485 = vmatpush1.bf16.msra.mxu0 %v1852
      %2486 = vmatprep.subr.bf16.mxu0 %v1860
      %2487 = vmatpush1.bf16.msra.mxu0 %v1859
      %2488 = vmatprep.subr.bf16.mxu0 %v1867
      %2489 = vmatpush1.bf16.msra.mxu0 %v1866
      %2490 = vmatprep.subr.bf16.mxu0 %v1874
      %2491 = vmatpush1.bf16.msra.mxu0 %v1873
      %2492 = vmatprep.subr.bf16.mxu0 %v1881
      %2493 = vmatpush1.bf16.msra.mxu0 %v1880
      %2494 = vmatprep.subr.bf16.mxu0 %v1888
      %2495 = vmatpush1.bf16.msra.mxu0 %v1887
      %2496 = vmatprep.subr.bf16.mxu0 %v1895
      %2497 = vmatpush1.bf16.msra.mxu0 %v1894
      %2498 = vmatprep.subr.bf16.mxu0 %v1902
      %2499 = vmatpush1.bf16.msra.mxu0 %v1901
      %2500 = vmatprep.mubr.bf16.mxu0 %v314
      %2501 = vmatmul.mubr.bf16.gmra.mrb[0].mxu0 %v313
      %v2502 = vpop.f32.mrb[0].mxu0
      %v2503 = vadd.f32 %v708, %v2502
      %v2504 = vpop.f32.mrb[0].mxu0
      %v2505 = vadd.f32 %v712, %v2504
      %v2506 = vpop.f32.mrb[0].mxu0
      %v2507 = vpop.f32.mrb[0].mxu0
      %2508 = vdwg.mxu0
      %2509 = vmatprep.subr.bf16.mxu0 %v1909
      %2510 = vmatpush1.bf16.msra.mxu0 %v1908
      %2511 = vmatprep.subr.bf16.mxu0 %v1916
      %2512 = vmatpush1.bf16.msra.mxu0 %v1915
      %2513 = vmatprep.subr.bf16.mxu0 %v1923
      %2514 = vmatpush1.bf16.msra.mxu0 %v1922
      %2515 = vmatprep.subr.bf16.mxu0 %v1930
      %2516 = vmatpush1.bf16.msra.mxu0 %v1929
      %2517 = vmatprep.subr.bf16.mxu0 %v1937
      %2518 = vmatpush1.bf16.msra.mxu0 %v1936
      %2519 = vmatprep.subr.bf16.mxu0 %v1944
      %2520 = vmatpush1.bf16.msra.mxu0 %v1943
      %2521 = vmatprep.subr.bf16.mxu0 %v1951
      %2522 = vmatpush1.bf16.msra.mxu0 %v1950
      %2523 = vmatprep.subr.bf16.mxu0 %v1958
      %2524 = vmatpush1.bf16.msra.mxu0 %v1957
      %2525 = vmatprep.subr.bf16.mxu0 %v1965
      %2526 = vmatpush1.bf16.msra.mxu0 %v1964
      %2527 = vmatprep.subr.bf16.mxu0 %v1972
      %2528 = vmatpush1.bf16.msra.mxu0 %v1971
      %2529 = vmatprep.subr.bf16.mxu0 %v1979
      %2530 = vmatpush1.bf16.msra.mxu0 %v1978
      %2531 = vmatprep.subr.bf16.mxu0 %v1986
      %2532 = vmatpush1.bf16.msra.mxu0 %v1985
      %2533 = vmatprep.subr.bf16.mxu0 %v1993
      %2534 = vmatpush1.bf16.msra.mxu0 %v1992
      %2535 = vmatprep.subr.bf16.mxu0 %v2000
      %2536 = vmatpush1.bf16.msra.mxu0 %v1999
      %2537 = vmatprep.subr.bf16.mxu0 %v2007
      %2538 = vmatpush1.bf16.msra.mxu0 %v2006
      %2539 = vmatprep.subr.bf16.mxu0 %v2014
      %2540 = vmatpush1.bf16.msra.mxu0 %v2013
      %2541 = vmatprep.mubr.bf16.mxu0 %v316
      %2542 = vmatmul.mubr.bf16.gmra.mrb[0].mxu0 %v315
      %v2543 = vpop.f32.mrb[0].mxu0
      %v2544 = vadd.f32 %v2503, %v2543
      %v2545 = vpop.f32.mrb[0].mxu0
      %v2546 = vadd.f32 %v2505, %v2545
      %v2547 = vpop.f32.mrb[0].mxu0
      %v2548 = vpop.f32.mrb[0].mxu0
      %2549 = vdwg.mxu0
      %2550 = vmatprep.subr.bf16.mxu0 %v2021
      %2551 = vmatpush1.bf16.msra.mxu0 %v2020
      %2552 = vmatprep.subr.bf16.mxu0 %v2028
      %2553 = vmatpush1.bf16.msra.mxu0 %v2027
      %2554 = vmatprep.subr.bf16.mxu0 %v2035
      %2555 = vmatpush1.bf16.msra.mxu0 %v2034
      %2556 = vmatprep.subr.bf16.mxu0 %v2042
      %2557 = vmatpush1.bf16.msra.mxu0 %v2041
      %2558 = vmatprep.subr.bf16.mxu0 %v2049
      %2559 = vmatpush1.bf16.msra.mxu0 %v2048
      %2560 = vmatprep.subr.bf16.mxu0 %v2056
      %2561 = vmatpush1.bf16.msra.mxu0 %v2055
      %2562 = vmatprep.subr.bf16.mxu0 %v2063
      %2563 = vmatpush1.bf16.msra.mxu0 %v2062
      %2564 = vmatprep.subr.bf16.mxu0 %v2070
      %2565 = vmatpush1.bf16.msra.mxu0 %v2069
      %2566 = vmatprep.subr.bf16.mxu0 %v2077
      %2567 = vmatpush1.bf16.msra.mxu0 %v2076
      %2568 = vmatprep.subr.bf16.mxu0 %v2084
      %2569 = vmatpush1.bf16.msra.mxu0 %v2083
      %2570 = vmatprep.subr.bf16.mxu0 %v2091
      %2571 = vmatpush1.bf16.msra.mxu0 %v2090
      %2572 = vmatprep.subr.bf16.mxu0 %v2098
      %2573 = vmatpush1.bf16.msra.mxu0 %v2097
      %2574 = vmatprep.subr.bf16.mxu0 %v2105
      %2575 = vmatpush1.bf16.msra.mxu0 %v2104
      %2576 = vmatprep.subr.bf16.mxu0 %v2112
      %2577 = vmatpush1.bf16.msra.mxu0 %v2111
      %2578 = vmatprep.subr.bf16.mxu0 %v2119
      %2579 = vmatpush1.bf16.msra.mxu0 %v2118
      %2580 = vmatprep.subr.bf16.mxu0 %v2126
      %2581 = vmatpush1.bf16.msra.mxu0 %v2125
      %2582 = vmatprep.mubr.bf16.mxu0 %v318
      %2583 = vmatmul.mubr.bf16.gmra.mrb[0].mxu0 %v317
      %v2584 = vpop.f32.mrb[0].mxu0
      %v2585 = vadd.f32 %v2544, %v2584
      %v2586 = vpop.f32.mrb[0].mxu0
      %v2587 = vadd.f32 %v2546, %v2586
      %v2588 = vpop.f32.mrb[0].mxu0
      %v2589 = vpop.f32.mrb[0].mxu0
      %2590 = vdwg.mxu0
      %2591 = vmatprep.subr.bf16.mxu0 %v1799
      %2592 = vmatpush1.bf16.msra.mxu0 %v1798
      %2593 = vmatprep.subr.bf16.mxu0 %v1806
      %2594 = vmatpush1.bf16.msra.mxu0 %v1805
      %2595 = vmatprep.subr.bf16.mxu0 %v1813
      %2596 = vmatpush1.bf16.msra.mxu0 %v1812
      %2597 = vmatprep.subr.bf16.mxu0 %v1820
      %2598 = vmatpush1.bf16.msra.mxu0 %v1819
      %2599 = vmatprep.subr.bf16.mxu0 %v1827
      %2600 = vmatpush1.bf16.msra.mxu0 %v1826
      %2601 = vmatprep.subr.bf16.mxu0 %v1834
      %2602 = vmatpush1.bf16.msra.mxu0 %v1833
      %2603 = vmatprep.subr.bf16.mxu0 %v1841
      %2604 = vmatpush1.bf16.msra.mxu0 %v1840
      %2605 = vmatprep.subr.bf16.mxu0 %v1848
      %2606 = vmatpush1.bf16.msra.mxu0 %v1847
      %2607 = vmatprep.subr.bf16.mxu0 %v1855
      %2608 = vmatpush1.bf16.msra.mxu0 %v1854
      %2609 = vmatprep.subr.bf16.mxu0 %v1862
      %2610 = vmatpush1.bf16.msra.mxu0 %v1861
      %2611 = vmatprep.subr.bf16.mxu0 %v1869
      %2612 = vmatpush1.bf16.msra.mxu0 %v1868
      %2613 = vmatprep.subr.bf16.mxu0 %v1876
      %2614 = vmatpush1.bf16.msra.mxu0 %v1875
      %2615 = vmatprep.subr.bf16.mxu0 %v1883
      %2616 = vmatpush1.bf16.msra.mxu0 %v1882
      %2617 = vmatprep.subr.bf16.mxu0 %v1890
      %2618 = vmatpush1.bf16.msra.mxu0 %v1889
      %2619 = vmatprep.subr.bf16.mxu0 %v1897
      %2620 = vmatpush1.bf16.msra.mxu0 %v1896
      %2621 = vmatprep.subr.bf16.mxu0 %v1904
      %2622 = vmatpush1.bf16.msra.mxu0 %v1903
      %2623 = vmatprep.mubr.bf16.mxu0 %v314
      %2624 = vmatmul.mubr.bf16.gmra.mrb[0].mxu0 %v313
      %v2625 = vpop.f32.mrb[0].mxu0
      %v2626 = vadd.f32 %v716, %v2625
      %v2627 = vpop.f32.mrb[0].mxu0
      %v2628 = vadd.f32 %v720, %v2627
      %v2629 = vpop.f32.mrb[0].mxu0
      %v2630 = vpop.f32.mrb[0].mxu0
      %2631 = vdwg.mxu0
      %2632 = vmatprep.subr.bf16.mxu0 %v1911
      %2633 = vmatpush1.bf16.msra.mxu0 %v1910
      %2634 = vmatprep.subr.bf16.mxu0 %v1918
      %2635 = vmatpush1.bf16.msra.mxu0 %v1917
      %2636 = vmatprep.subr.bf16.mxu0 %v1925
      %2637 = vmatpush1.bf16.msra.mxu0 %v1924
      %2638 = vmatprep.subr.bf16.mxu0 %v1932
      %2639 = vmatpush1.bf16.msra.mxu0 %v1931
      %2640 = vmatprep.subr.bf16.mxu0 %v1939
      %2641 = vmatpush1.bf16.msra.mxu0 %v1938
      %2642 = vmatprep.subr.bf16.mxu0 %v1946
      %2643 = vmatpush1.bf16.msra.mxu0 %v1945
      %2644 = vmatprep.subr.bf16.mxu0 %v1953
      %2645 = vmatpush1.bf16.msra.mxu0 %v1952
      %2646 = vmatprep.subr.bf16.mxu0 %v1960
      %2647 = vmatpush1.bf16.msra.mxu0 %v1959
      %2648 = vmatprep.subr.bf16.mxu0 %v1967
      %2649 = vmatpush1.bf16.msra.mxu0 %v1966
      %2650 = vmatprep.subr.bf16.mxu0 %v1974
      %2651 = vmatpush1.bf16.msra.mxu0 %v1973
      %2652 = vmatprep.subr.bf16.mxu0 %v1981
      %2653 = vmatpush1.bf16.msra.mxu0 %v1980
      %2654 = vmatprep.subr.bf16.mxu0 %v1988
      %2655 = vmatpush1.bf16.msra.mxu0 %v1987
      %2656 = vmatprep.subr.bf16.mxu0 %v1995
      %2657 = vmatpush1.bf16.msra.mxu0 %v1994
      %2658 = vmatprep.subr.bf16.mxu0 %v2002
      %2659 = vmatpush1.bf16.msra.mxu0 %v2001
      %2660 = vmatprep.subr.bf16.mxu0 %v2009
      %2661 = vmatpush1.bf16.msra.mxu0 %v2008
      %2662 = vmatprep.subr.bf16.mxu0 %v2016
      %2663 = vmatpush1.bf16.msra.mxu0 %v2015
      %2664 = vmatprep.mubr.bf16.mxu0 %v316
      %2665 = vmatmul.mubr.bf16.gmra.mrb[0].mxu0 %v315
      %v2666 = vpop.f32.mrb[0].mxu0
      %v2667 = vadd.f32 %v2626, %v2666
      %v2668 = vpop.f32.mrb[0].mxu0
      %v2669 = vadd.f32 %v2628, %v2668
      %v2670 = vpop.f32.mrb[0].mxu0
      %v2671 = vpop.f32.mrb[0].mxu0
      %2672 = vdwg.mxu0
      %2673 = vmatprep.subr.bf16.mxu0 %v2023
      %2674 = vmatpush1.bf16.msra.mxu0 %v2022
      %2675 = vmatprep.subr.bf16.mxu0 %v2030
      %2676 = vmatpush1.bf16.msra.mxu0 %v2029
      %2677 = vmatprep.subr.bf16.mxu0 %v2037
      %2678 = vmatpush1.bf16.msra.mxu0 %v2036
      %2679 = vmatprep.subr.bf16.mxu0 %v2044
      %2680 = vmatpush1.bf16.msra.mxu0 %v2043
      %2681 = vmatprep.subr.bf16.mxu0 %v2051
      %2682 = vmatpush1.bf16.msra.mxu0 %v2050
      %2683 = vmatprep.subr.bf16.mxu0 %v2058
      %2684 = vmatpush1.bf16.msra.mxu0 %v2057
      %2685 = vmatprep.subr.bf16.mxu0 %v2065
      %2686 = vmatpush1.bf16.msra.mxu0 %v2064
      %2687 = vmatprep.subr.bf16.mxu0 %v2072
      %2688 = vmatpush1.bf16.msra.mxu0 %v2071
      %2689 = vmatprep.subr.bf16.mxu0 %v2079
      %2690 = vmatpush1.bf16.msra.mxu0 %v2078
      %2691 = vmatprep.subr.bf16.mxu0 %v2086
      %2692 = vmatpush1.bf16.msra.mxu0 %v2085
      %2693 = vmatprep.subr.bf16.mxu0 %v2093
      %2694 = vmatpush1.bf16.msra.mxu0 %v2092
      %2695 = vmatprep.subr.bf16.mxu0 %v2100
      %2696 = vmatpush1.bf16.msra.mxu0 %v2099
      %2697 = vmatprep.subr.bf16.mxu0 %v2107
      %2698 = vmatpush1.bf16.msra.mxu0 %v2106
      %2699 = vmatprep.subr.bf16.mxu0 %v2114
      %2700 = vmatpush1.bf16.msra.mxu0 %v2113
      %2701 = vmatprep.subr.bf16.mxu0 %v2121
      %2702 = vmatpush1.bf16.msra.mxu0 %v2120
      %2703 = vmatprep.subr.bf16.mxu0 %v2128
      %2704 = vmatpush1.bf16.msra.mxu0 %v2127
      %2705 = vmatprep.mubr.bf16.mxu0 %v318
      %2706 = vmatmul.mubr.bf16.gmra.mrb[0].mxu0 %v317
      %v2707 = vpop.f32.mrb[0].mxu0
      %v2708 = vadd.f32 %v2667, %v2707
      %v2709 = vpop.f32.mrb[0].mxu0
      %v2710 = vadd.f32 %v2669, %v2709
      %v2711 = vpop.f32.mrb[0].mxu0
      %v2712 = vpop.f32.mrb[0].mxu0
      %2713 = vdwg.mxu0
      %2714 = vmatprep.subr.bf16.mxu0 %v1801
      %2715 = vmatpush1.bf16.msra.mxu0 %v1800
      %2716 = vmatprep.subr.bf16.mxu0 %v1808
      %2717 = vmatpush1.bf16.msra.mxu0 %v1807
      %2718 = vmatprep.subr.bf16.mxu0 %v1815
      %2719 = vmatpush1.bf16.msra.mxu0 %v1814
      %2720 = vmatprep.subr.bf16.mxu0 %v1822
      %2721 = vmatpush1.bf16.msra.mxu0 %v1821
      %2722 = vmatprep.subr.bf16.mxu0 %v1829
      %2723 = vmatpush1.bf16.msra.mxu0 %v1828
      %2724 = vmatprep.subr.bf16.mxu0 %v1836
      %2725 = vmatpush1.bf16.msra.mxu0 %v1835
      %2726 = vmatprep.subr.bf16.mxu0 %v1843
      %2727 = vmatpush1.bf16.msra.mxu0 %v1842
      %2728 = vmatprep.subr.bf16.mxu0 %v1850
      %2729 = vmatpush1.bf16.msra.mxu0 %v1849
      %2730 = vmatprep.subr.bf16.mxu0 %v1857
      %2731 = vmatpush1.bf16.msra.mxu0 %v1856
      %2732 = vmatprep.subr.bf16.mxu0 %v1864
      %2733 = vmatpush1.bf16.msra.mxu0 %v1863
      %2734 = vmatprep.subr.bf16.mxu0 %v1871
      %2735 = vmatpush1.bf16.msra.mxu0 %v1870
      %2736 = vmatprep.subr.bf16.mxu0 %v1878
      %2737 = vmatpush1.bf16.msra.mxu0 %v1877
      %2738 = vmatprep.subr.bf16.mxu0 %v1885
      %2739 = vmatpush1.bf16.msra.mxu0 %v1884
      %2740 = vmatprep.subr.bf16.mxu0 %v1892
      %2741 = vmatpush1.bf16.msra.mxu0 %v1891
      %2742 = vmatprep.subr.bf16.mxu0 %v1899
      %2743 = vmatpush1.bf16.msra.mxu0 %v1898
      %2744 = vmatprep.subr.bf16.mxu0 %v1906
      %2745 = vmatpush1.bf16.msra.mxu0 %v1905
      %2746 = vmatprep.mubr.bf16.mxu0 %v314
      %2747 = vmatmul.mubr.bf16.gmra.mrb[0].mxu0 %v313
      %v2748 = vpop.f32.mrb[0].mxu0
      %v2749 = vadd.f32 %v724, %v2748
      %v2750 = vpop.f32.mrb[0].mxu0
      %v2751 = vadd.f32 %v728, %v2750
      %v2752 = vpop.f32.mrb[0].mxu0
      %v2753 = vpop.f32.mrb[0].mxu0
      %2754 = vdwg.mxu0
      %2755 = vmatprep.subr.bf16.mxu0 %v1913
      %2756 = vmatpush1.bf16.msra.mxu0 %v1912
      %2757 = vmatprep.subr.bf16.mxu0 %v1920
      %2758 = vmatpush1.bf16.msra.mxu0 %v1919
      %2759 = vmatprep.subr.bf16.mxu0 %v1927
      %2760 = vmatpush1.bf16.msra.mxu0 %v1926
      %2761 = vmatprep.subr.bf16.mxu0 %v1934
      %2762 = vmatpush1.bf16.msra.mxu0 %v1933
      %2763 = vmatprep.subr.bf16.mxu0 %v1941
      %2764 = vmatpush1.bf16.msra.mxu0 %v1940
      %2765 = vmatprep.subr.bf16.mxu0 %v1948
      %2766 = vmatpush1.bf16.msra.mxu0 %v1947
      %2767 = vmatprep.subr.bf16.mxu0 %v1955
      %2768 = vmatpush1.bf16.msra.mxu0 %v1954
      %2769 = vmatprep.subr.bf16.mxu0 %v1962
      %2770 = vmatpush1.bf16.msra.mxu0 %v1961
      %2771 = vmatprep.subr.bf16.mxu0 %v1969
      %2772 = vmatpush1.bf16.msra.mxu0 %v1968
      %2773 = vmatprep.subr.bf16.mxu0 %v1976
      %2774 = vmatpush1.bf16.msra.mxu0 %v1975
      %2775 = vmatprep.subr.bf16.mxu0 %v1983
      %2776 = vmatpush1.bf16.msra.mxu0 %v1982
      %2777 = vmatprep.subr.bf16.mxu0 %v1990
      %2778 = vmatpush1.bf16.msra.mxu0 %v1989
      %2779 = vmatprep.subr.bf16.mxu0 %v1997
      %2780 = vmatpush1.bf16.msra.mxu0 %v1996
      %2781 = vmatprep.subr.bf16.mxu0 %v2004
      %2782 = vmatpush1.bf16.msra.mxu0 %v2003
      %2783 = vmatprep.subr.bf16.mxu0 %v2011
      %2784 = vmatpush1.bf16.msra.mxu0 %v2010
      %2785 = vmatprep.subr.bf16.mxu0 %v2018
      %2786 = vmatpush1.bf16.msra.mxu0 %v2017
      %2787 = vmatprep.mubr.bf16.mxu0 %v316
      %2788 = vmatmul.mubr.bf16.gmra.mrb[0].mxu0 %v315
      %v2789 = vpop.f32.mrb[0].mxu0
      %v2790 = vadd.f32 %v2749, %v2789
      %v2791 = vpop.f32.mrb[0].mxu0
      %v2792 = vadd.f32 %v2751, %v2791
      %v2793 = vpop.f32.mrb[0].mxu0
      %v2794 = vpop.f32.mrb[0].mxu0
      %2795 = vdwg.mxu0
      %2796 = vmatprep.subr.bf16.mxu0 %v2025
      %2797 = vmatpush1.bf16.msra.mxu0 %v2024
      %2798 = vmatprep.subr.bf16.mxu0 %v2032
      %2799 = vmatpush1.bf16.msra.mxu0 %v2031
      %2800 = vmatprep.subr.bf16.mxu0 %v2039
      %2801 = vmatpush1.bf16.msra.mxu0 %v2038
      %2802 = vmatprep.subr.bf16.mxu0 %v2046
      %2803 = vmatpush1.bf16.msra.mxu0 %v2045
      %2804 = vmatprep.subr.bf16.mxu0 %v2053
      %2805 = vmatpush1.bf16.msra.mxu0 %v2052
      %2806 = vmatprep.subr.bf16.mxu0 %v2060
      %2807 = vmatpush1.bf16.msra.mxu0 %v2059
      %2808 = vmatprep.subr.bf16.mxu0 %v2067
      %2809 = vmatpush1.bf16.msra.mxu0 %v2066
      %2810 = vmatprep.subr.bf16.mxu0 %v2074
      %2811 = vmatpush1.bf16.msra.mxu0 %v2073
      %2812 = vmatprep.subr.bf16.mxu0 %v2081
      %2813 = vmatpush1.bf16.msra.mxu0 %v2080
      %2814 = vmatprep.subr.bf16.mxu0 %v2088
      %2815 = vmatpush1.bf16.msra.mxu0 %v2087
      %2816 = vmatprep.subr.bf16.mxu0 %v2095
      %2817 = vmatpush1.bf16.msra.mxu0 %v2094
      %2818 = vmatprep.subr.bf16.mxu0 %v2102
      %2819 = vmatpush1.bf16.msra.mxu0 %v2101
      %2820 = vmatprep.subr.bf16.mxu0 %v2109
      %2821 = vmatpush1.bf16.msra.mxu0 %v2108
      %2822 = vmatprep.subr.bf16.mxu0 %v2116
      %2823 = vmatpush1.bf16.msra.mxu0 %v2115
      %2824 = vmatprep.subr.bf16.mxu0 %v2123
      %2825 = vmatpush1.bf16.msra.mxu0 %v2122
      %2826 = vmatprep.subr.bf16.mxu0 %v2130
      %2827 = vmatpush1.bf16.msra.mxu0 %v2129
      %2828 = vmatprep.mubr.bf16.mxu0 %v318
      %2829 = vmatmul.mubr.bf16.gmra.mrb[0].mxu0 %v317
      %v2830 = vpop.f32.mrb[0].mxu0
      %v2831 = vadd.f32 %v2790, %v2830
      %v2832 = vpop.f32.mrb[0].mxu0
      %v2833 = vadd.f32 %v2792, %v2832
      %v2834 = vpop.f32.mrb[0].mxu0
      %v2835 = vpop.f32.mrb[0].mxu0
      %2836 = vdwg.mxu0
      %2837 = vmatprep.subr.bf16.mxu0 0
      %2838 = vmatpush1.bf16.msra.mxu0 %v1802
      %2839 = vmatprep.subr.bf16.mxu0 0
      %2840 = vmatpush1.bf16.msra.mxu0 %v1809
      %2841 = vmatprep.subr.bf16.mxu0 0
      %2842 = vmatpush1.bf16.msra.mxu0 %v1816
      %2843 = vmatprep.subr.bf16.mxu0 0
      %2844 = vmatpush1.bf16.msra.mxu0 %v1823
      %2845 = vmatprep.subr.bf16.mxu0 0
      %2846 = vmatpush1.bf16.msra.mxu0 %v1830
      %2847 = vmatprep.subr.bf16.mxu0 0
      %2848 = vmatpush1.bf16.msra.mxu0 %v1837
      %2849 = vmatprep.subr.bf16.mxu0 0
      %2850 = vmatpush1.bf16.msra.mxu0 %v1844
      %2851 = vmatprep.subr.bf16.mxu0 0
      %2852 = vmatpush1.bf16.msra.mxu0 %v1851
      %2853 = vmatprep.subr.bf16.mxu0 0
      %2854 = vmatpush1.bf16.msra.mxu0 %v1858
      %2855 = vmatprep.subr.bf16.mxu0 0
      %2856 = vmatpush1.bf16.msra.mxu0 %v1865
      %2857 = vmatprep.subr.bf16.mxu0 0
      %2858 = vmatpush1.bf16.msra.mxu0 %v1872
      %2859 = vmatprep.subr.bf16.mxu0 0
      %2860 = vmatpush1.bf16.msra.mxu0 %v1879
      %2861 = vmatprep.subr.bf16.mxu0 0
      %2862 = vmatpush1.bf16.msra.mxu0 %v1886
      %2863 = vmatprep.subr.bf16.mxu0 0
      %2864 = vmatpush1.bf16.msra.mxu0 %v1893
      %2865 = vmatprep.subr.bf16.mxu0 0
      %2866 = vmatpush1.bf16.msra.mxu0 %v1900
      %2867 = vmatprep.subr.bf16.mxu0 0
      %2868 = vmatpush1.bf16.msra.mxu0 %v1907
      %2869 = vmatprep.mubr.bf16.mxu0 %v314
      %2870 = vmatmul.mubr.bf16.gmra.mrb[0].mxu0 %v313
      %v2871 = vpop.f32.mrb[0].mxu0
      %v2872 = vadd.f32 %v732, %v2871
      %v2873 = vpop.f32.mrb[0].mxu0
      %v2874 = vpop.f32.mrb[0].mxu0
      %v2875 = vpop.f32.mrb[0].mxu0
      %2876 = vdwg.mxu0
      %2877 = vmatprep.subr.bf16.mxu0 0
      %2878 = vmatpush1.bf16.msra.mxu0 %v1914
      %2879 = vmatprep.subr.bf16.mxu0 0
      %2880 = vmatpush1.bf16.msra.mxu0 %v1921
      %2881 = vmatprep.subr.bf16.mxu0 0
      %2882 = vmatpush1.bf16.msra.mxu0 %v1928
      %2883 = vmatprep.subr.bf16.mxu0 0
      %2884 = vmatpush1.bf16.msra.mxu0 %v1935
      %2885 = vmatprep.subr.bf16.mxu0 0
      %2886 = vmatpush1.bf16.msra.mxu0 %v1942
      %2887 = vmatprep.subr.bf16.mxu0 0
      %2888 = vmatpush1.bf16.msra.mxu0 %v1949
      %2889 = vmatprep.subr.bf16.mxu0 0
      %2890 = vmatpush1.bf16.msra.mxu0 %v1956
      %2891 = vmatprep.subr.bf16.mxu0 0
      %2892 = vmatpush1.bf16.msra.mxu0 %v1963
      %2893 = vmatprep.subr.bf16.mxu0 0
      %2894 = vmatpush1.bf16.msra.mxu0 %v1970
      %2895 = vmatprep.subr.bf16.mxu0 0
      %2896 = vmatpush1.bf16.msra.mxu0 %v1977
      %2897 = vmatprep.subr.bf16.mxu0 0
      %2898 = vmatpush1.bf16.msra.mxu0 %v1984
      %2899 = vmatprep.subr.bf16.mxu0 0
      %2900 = vmatpush1.bf16.msra.mxu0 %v1991
      %2901 = vmatprep.subr.bf16.mxu0 0
      %2902 = vmatpush1.bf16.msra.mxu0 %v1998
      %2903 = vmatprep.subr.bf16.mxu0 0
      %2904 = vmatpush1.bf16.msra.mxu0 %v2005
      %2905 = vmatprep.subr.bf16.mxu0 0
      %2906 = vmatpush1.bf16.msra.mxu0 %v2012
      %2907 = vmatprep.subr.bf16.mxu0 0
      %2908 = vmatpush1.bf16.msra.mxu0 %v2019
      %2909 = vmatprep.mubr.bf16.mxu0 %v316
      %2910 = vmatmul.mubr.bf16.gmra.mrb[0].mxu0 %v315
      %v2911 = vpop.f32.mrb[0].mxu0
      %v2912 = vadd.f32 %v2872, %v2911
      %v2913 = vpop.f32.mrb[0].mxu0
      %v2914 = vpop.f32.mrb[0].mxu0
      %v2915 = vpop.f32.mrb[0].mxu0
      %2916 = vdwg.mxu0
      %2917 = vmatprep.subr.bf16.mxu0 0
      %2918 = vmatpush1.bf16.msra.mxu0 %v2026
      %2919 = vmatprep.subr.bf16.mxu0 0
      %2920 = vmatpush1.bf16.msra.mxu0 %v2033
      %2921 = vmatprep.subr.bf16.mxu0 0
      %2922 = vmatpush1.bf16.msra.mxu0 %v2040
      %2923 = vmatprep.subr.bf16.mxu0 0
      %2924 = vmatpush1.bf16.msra.mxu0 %v2047
      %2925 = vmatprep.subr.bf16.mxu0 0
      %2926 = vmatpush1.bf16.msra.mxu0 %v2054
      %2927 = vmatprep.subr.bf16.mxu0 0
      %2928 = vmatpush1.bf16.msra.mxu0 %v2061
      %2929 = vmatprep.subr.bf16.mxu0 0
      %2930 = vmatpush1.bf16.msra.mxu0 %v2068
      %2931 = vmatprep.subr.bf16.mxu0 0
      %2932 = vmatpush1.bf16.msra.mxu0 %v2075
      %2933 = vmatprep.subr.bf16.mxu0 0
      %2934 = vmatpush1.bf16.msra.mxu0 %v2082
      %2935 = vmatprep.subr.bf16.mxu0 0
      %2936 = vmatpush1.bf16.msra.mxu0 %v2089
      %2937 = vmatprep.subr.bf16.mxu0 0
      %2938 = vmatpush1.bf16.msra.mxu0 %v2096
      %2939 = vmatprep.subr.bf16.mxu0 0
      %2940 = vmatpush1.bf16.msra.mxu0 %v2103
      %2941 = vmatprep.subr.bf16.mxu0 0
      %2942 = vmatpush1.bf16.msra.mxu0 %v2110
      %2943 = vmatprep.subr.bf16.mxu0 0
      %2944 = vmatpush1.bf16.msra.mxu0 %v2117
      %2945 = vmatprep.subr.bf16.mxu0 0
      %2946 = vmatpush1.bf16.msra.mxu0 %v2124
      %2947 = vmatprep.subr.bf16.mxu0 0
      %2948 = vmatpush1.bf16.msra.mxu0 %v2131
      %2949 = vmatprep.mubr.bf16.mxu0 %v318
      %2950 = vmatmul.mubr.bf16.gmra.mrb[0].mxu0 %v317
      %v2951 = vpop.f32.mrb[0].mxu0
      %v2952 = vadd.f32 %v2912, %v2951
      %v2953 = vpop.f32.mrb[0].mxu0
      %v2954 = vpop.f32.mrb[0].mxu0
      %v2955 = vpop.f32.mrb[0].mxu0
      %2956 = vdwg.mxu0
      %v2957 = vtanh.pop %v2585
      %v2958 = vtanh.pop %v2587
      %v2959 = vtanh.pop %v2708
      %v2960 = vtanh.pop %v2710
      %v2961 = vtanh.pop %v2831
      %v2962 = vtanh.pop %v2833
      %v2963 = vtanh.pop %v2952
      %v2967 = vrot.slane %v2958, 7
      %v2968 = vrot.slane %v2959, 7
      %v2969 = vrot.slane %v2960, 7
      %2970 = vrot.lane.b32.xlu0 %v2967, 48
      %v2971 = vpop.permute.xlu0 %2970
      %2972 = vrot.lane.b32.xlu0 %v2968, 48
      %v2973 = vpop.permute.xlu0 %2972
      %2974 = vrot.lane.b32.xlu0 %v2969, 48
      %v2975 = vpop.permute.xlu0 %2974
      %vm2976 = vcmask 392192
      %v2977 = vsel %vm2976, %v2971, %v2973
      %v2978 = vsel %vm2976, %v2973, %v2975
      %v2982 = vrot.slane %v2960, 6
      %v2983 = vrot.slane %v2961, 6
      %2984 = vrot.lane.b32.xlu0 %v2982, 96
      %v2985 = vpop.permute.xlu0 %2984
      %2986 = vrot.lane.b32.xlu0 %v2983, 96
      %v2987 = vpop.permute.xlu0 %2986
      %vm2988 = vcmask 785408
      %v2989 = vsel %vm2988, %v2985, %v2987
      %v2994 = vrot.slane %v2961, 5
      %v2995 = vrot.slane %v2962, 5
      %v2996 = vrot.slane %v2963, 5
      %2997 = vrot.lane.b32.xlu0 %v2994, 16
      %v2998 = vpop.permute.xlu0 %2997
      %2999 = vrot.lane.b32.xlu0 %v2995, 16
      %v3000 = vpop.permute.xlu0 %2999
      %3001 = vrot.lane.b32.xlu0 %v2996, 16
      %v3002 = vpop.permute.xlu0 %3001
      %vm3003 = vcmask 130048
      %v3004 = vsel %vm3003, %v2998, %v3000
      %v3005 = vsel %vm3003, %v3000, %v3002
      %v3009 = vrot.slane %v2957, 5
      %v3010 = vrot.slane %v2958, 5
      %v3013 = vrot.slane %v2958, 4
      %v3014 = vrot.slane %v2959, 4
      %v3015 = vrot.slane %v2960, 4
      %3016 = vrot.lane.b32.xlu0 %v3013, 48
      %v3017 = vpop.permute.xlu0 %3016
      %3018 = vrot.lane.b32.xlu0 %v3014, 48
      %v3019 = vpop.permute.xlu0 %3018
      %3020 = vrot.lane.b32.xlu0 %v3015, 48
      %v3021 = vpop.permute.xlu0 %3020
      %v3022 = vsel %vm2976, %v3017, %v3019
      %v3023 = vsel %vm2976, %v3019, %v3021
      %v3026 = vrot.slane %v2960, 3
      %v3027 = vrot.slane %v2961, 3
      %3028 = vrot.lane.b32.xlu0 %v3026, 96
      %v3029 = vpop.permute.xlu0 %3028
      %3030 = vrot.lane.b32.xlu0 %v3027, 96
      %v3031 = vpop.permute.xlu0 %3030
      %v3032 = vsel %vm2988, %v3029, %v3031
      %v3035 = vrot.slane %v2961, 2
      %v3036 = vrot.slane %v2962, 2
      %v3037 = vrot.slane %v2963, 2
      %3038 = vrot.lane.b32.xlu0 %v3035, 16
      %v3039 = vpop.permute.xlu0 %3038
      %3040 = vrot.lane.b32.xlu0 %v3036, 16
      %v3041 = vpop.permute.xlu0 %3040
      %3042 = vrot.lane.b32.xlu0 %v3037, 16
      %v3043 = vpop.permute.xlu0 %3042
      %v3044 = vsel %vm3003, %v3039, %v3041
      %v3045 = vsel %vm3003, %v3041, %v3043
      %vm3048 = vcmask 1040384
      %v3049 = vsel %vm3048, %v2957, %v2977
      %v3050 = vsel %vm3048, %v2958, %v2978
      %vm3051 = vcmask 1041408
      %v3052 = vsel %vm3051, %v3049, %v2989
      %v3053 = vsel %vm3051, %v3050, %v2987
      %vm3054 = vcmask 1042432
      %v3055 = vsel %vm3054, %v3052, %v3004
      %v3056 = vsel %vm3054, %v3053, %v3005
      %vm3057 = vcmask 1043456
      %v3058 = vsel %vm3057, %v3055, %v3009
      %v3059 = vsel %vm3057, %v3056, %v3010
      %vm3060 = vcmask 1044480
      %v3061 = vsel %vm3060, %v3058, %v3022
      %v3062 = vsel %vm3060, %v3059, %v3023
      %vm3063 = vcmask 1045504
      %v3064 = vsel %vm3063, %v3061, %v3032
      %v3065 = vsel %vm3063, %v3062, %v3031
      %vm3066 = vcmask 1046528
      %v3067 = vsel %vm3066, %v3064, %v3044
      %v3068 = vsel %vm3066, %v3065, %v3045
      %v3069 = vpack.c.bf16 %v3067, %v3067
      %v3070 = vpack.c.bf16 %v3068, %v3068
      %v3071 = vld [vmem:[%s3] sm:$0xf]
      %v3072 = vld [vmem:[%s3 + $0x4] sm:$0xf]
      %v3073 = vld [vmem:[%s3 + $0x8] sm:$0xf]
      %v3074 = vld [vmem:[%s3 + $0xc] sm:$0xf]
      %v3075 = vld [vmem:[%s3 + $0x10] sm:$0xf]
      %v3076 = vld [vmem:[%s3 + $0x14] sm:$0xf]
      %v3077 = vld [vmem:[%s3 + $0x18] sm:$0xf]
      %v3078 = vld [vmem:[%s3 + $0x1c] sm:$0xf]
      %v3079 = vld [vmem:[%s3 + $0x20] sm:$0xf]
      %v3080 = vld [vmem:[%s3 + $0x24] sm:$0xf]
      %v3081 = vld [vmem:[%s3 + $0x28] sm:$0xf]
      %v3082 = vld [vmem:[%s3 + $0x2c] sm:$0xf]
      %v3083 = vld [vmem:[%s3 + $0x30] sm:$0xf]
      %v3084 = vld [vmem:[%s3 + $0x34] sm:$0xf]
      %v3085 = vld [vmem:[%s3 + $0x38] sm:$0xf]
      %v3086 = vld [vmem:[%s3 + $0x3c] sm:$0xf]
      %v3087 = vld [vmem:[%s3 + $0x40] sm:$0xf]
      %v3088 = vld [vmem:[%s3 + $0x44] sm:$0xf]
      %v3089 = vld [vmem:[%s3 + $0x48] sm:$0xf]
      %v3090 = vld [vmem:[%s3 + $0x4c] sm:$0xf]
      %v3091 = vld [vmem:[%s3 + $0x50] sm:$0xf]
      %v3092 = vld [vmem:[%s3 + $0x54] sm:$0xf]
      %v3093 = vld [vmem:[%s3 + $0x58] sm:$0xf]
      %v3094 = vld [vmem:[%s3 + $0x5c] sm:$0xf]
      %v3095 = vld [vmem:[%s3 + $0x60] sm:$0xf]
      %v3096 = vld [vmem:[%s3 + $0x64] sm:$0xf]
      %v3097 = vld [vmem:[%s4] sm:$0x1]
      %v3099 = vlaneseq
      %v3100 = vshrl.u32 %v3099, 7
      %v3101 = vsub.s32 0, %v3100
      %v3102 = vrot.slane %v3097, %v3101
      %v3130 = vunpack.c.l.b16 %v3071
      %v3131 = vunpack.c.l.b16 %v3072
      %v3132 = vunpack.c.l.b16 %v3073
      %v3133 = vunpack.c.l.b16 %v3074
      %v3134 = vunpack.c.l.b16 %v3075
      %v3135 = vunpack.c.l.b16 %v3076
      %v3136 = vunpack.c.l.b16 %v3077
      %v3137 = vunpack.c.l.b16 %v3078
      %v3138 = vunpack.c.l.b16 %v3079
      %v3139 = vunpack.c.l.b16 %v3080
      %v3140 = vunpack.c.l.b16 %v3081
      %v3141 = vunpack.c.l.b16 %v3082
      %v3142 = vunpack.c.l.b16 %v3083
      %v3143 = vunpack.c.l.b16 %v3084
      %v3144 = vunpack.c.l.b16 %v3085
      %v3145 = vunpack.c.l.b16 %v3086
      %v3146 = vunpack.c.l.b16 %v3087
      %v3147 = vunpack.c.l.b16 %v3088
      %v3148 = vunpack.c.l.b16 %v3089
      %v3149 = vunpack.c.l.b16 %v3090
      %v3150 = vunpack.c.l.b16 %v3091
      %v3151 = vunpack.c.l.b16 %v3092
      %v3152 = vunpack.c.l.b16 %v3093
      %v3153 = vunpack.c.l.b16 %v3094
      %v3154 = vunpack.c.l.b16 %v3095
      %v3155 = vunpack.c.l.b16 %v3096
      %v3156 = vpack.c.b16 %v3131, %v3130
      %v3157 = vpack.c.b16 %v3133, %v3132
      %v3158 = vpack.c.b16 %v3135, %v3134
      %v3159 = vpack.c.b16 %v3137, %v3136
      %v3160 = vpack.c.b16 %v3139, %v3138
      %v3161 = vpack.c.b16 %v3141, %v3140
      %v3162 = vpack.c.b16 %v3143, %v3142
      %v3163 = vpack.c.b16 %v3145, %v3144
      %v3164 = vpack.c.b16 %v3147, %v3146
      %v3165 = vpack.c.b16 %v3149, %v3148
      %v3166 = vpack.c.b16 %v3151, %v3150
      %v3167 = vpack.c.b16 %v3153, %v3152
      %v3168 = vpack.c.b16 %v3155, %v3154
      %vm3182 = vcmask 654336
      %v3184 = vsel %vm3182, %v3070, 0
      %3186 = vmatprep.subr.bf16.mxu0 0
      %3187 = vmatpush1.bf16.msra.mxu0 %v3156
      %3188 = vmatprep.subr.bf16.mxu0 0
      %3189 = vmatpush1.bf16.msra.mxu0 %v3157
      %3190 = vmatprep.subr.bf16.mxu0 0
      %3191 = vmatpush1.bf16.msra.mxu0 %v3158
      %3192 = vmatprep.subr.bf16.mxu0 0
      %3193 = vmatpush1.bf16.msra.mxu0 %v3159
      %3194 = vmatprep.subr.bf16.mxu0 0
      %3195 = vmatpush1.bf16.msra.mxu0 %v3160
      %3196 = vmatprep.subr.bf16.mxu0 0
      %3197 = vmatpush1.bf16.msra.mxu0 %v3161
      %3198 = vmatprep.subr.bf16.mxu0 0
      %3199 = vmatpush1.bf16.msra.mxu0 %v3162
      %3200 = vmatprep.subr.bf16.mxu0 0
      %3201 = vmatpush1.bf16.msra.mxu0 %v3163
      %3202 = vmatprep.subr.bf16.mxu0 0
      %3203 = vmatpush1.bf16.msra.mxu0 %v3164
      %3204 = vmatprep.subr.bf16.mxu0 0
      %3205 = vmatpush1.bf16.msra.mxu0 %v3165
      %3206 = vmatprep.subr.bf16.mxu0 0
      %3207 = vmatpush1.bf16.msra.mxu0 %v3166
      %3208 = vmatprep.subr.bf16.mxu0 0
      %3209 = vmatpush1.bf16.msra.mxu0 %v3167
      %3210 = vmatprep.subr.bf16.mxu0 0
      %3211 = vmatpush1.bf16.msra.mxu0 %v3168
      %3212 = vmatprep.subr.bf16.mxu0 0
      %3213 = vmatpush1.bf16.msra.mxu0 0
      %3214 = vmatprep.subr.bf16.mxu0 0
      %3215 = vmatpush1.bf16.msra.mxu0 0
      %3216 = vmatprep.subr.bf16.mxu0 0
      %3217 = vmatpush1.bf16.msra.mxu0 0
      %3218 = vmatprep.mubr.bf16.mxu0 %v3184
      %3219 = vmatmul.mubr.bf16.gmra.mrb[0].mxu0 %v3069
      %v3220 = vpop.f32.mrb[0].mxu0
      %v3221 = vadd.f32 %v3102, %v3220
      %v3222 = vpop.f32.mrb[0].mxu0
      %v3223 = vpop.f32.mrb[0].mxu0
      %v3224 = vpop.f32.mrb[0].mxu0
      %3225 = vdwg.mxu0
      %v3226 = vtanh.pop %v3221
      %v3227 = vpack.c.bf16 %v3226, %v3226
      %v3228 = vld [vmem:[%s5] sm:$0xf]
      %v3229 = vld [vmem:[%s5 + $0x4] sm:$0xf]
      %v3230 = vld [vmem:[%s5 + $0x8] sm:$0xf]
      %v3231 = vld [vmem:[%s5 + $0xc] sm:$0xf]
      %v3232 = vld [vmem:[%s5 + $0x10] sm:$0xf]
      %v3233 = vld [vmem:[%s5 + $0x14] sm:$0xf]
      %v3234 = vld [vmem:[%s5 + $0x18] sm:$0xf]
      %v3235 = vld [vmem:[%s5 + $0x1c] sm:$0xf]
      %v3236 = vld [vmem:[%s6] sm:$0x1]
      %v3238 = vlaneseq
      %v3239 = vshrl.u32 %v3238, 7
      %v3240 = vsub.s32 0, %v3239
      %v3241 = vrot.slane %v3236, %v3240
      %v3251 = vunpack.c.l.b16 %v3228
      %v3252 = vunpack.c.l.b16 %v3229
      %v3253 = vunpack.c.l.b16 %v3230
      %v3254 = vunpack.c.l.b16 %v3231
      %v3255 = vunpack.c.l.b16 %v3232
      %v3256 = vunpack.c.l.b16 %v3233
      %v3257 = vunpack.c.l.b16 %v3234
      %v3258 = vunpack.c.l.b16 %v3235
      %v3259 = vpack.c.b16 %v3252, %v3251
      %v3260 = vpack.c.b16 %v3254, %v3253
      %v3261 = vpack.c.b16 %v3256, %v3255
      %v3262 = vpack.c.b16 %v3258, %v3257
      %vm3267 = vcmask 523264
      %v3269 = vsel %vm3267, %v3227, 0
      %3271 = vmatprep.subr.bf16.mxu0 0
      %3272 = vmatpush1.bf16.msra.mxu0 %v3259
      %3273 = vmatprep.subr.bf16.mxu0 0
      %3274 = vmatpush1.bf16.msra.mxu0 %v3260
      %3275 = vmatprep.subr.bf16.mxu0 0
      %3276 = vmatpush1.bf16.msra.mxu0 %v3261
      %3277 = vmatprep.subr.bf16.mxu0 0
      %3278 = vmatpush1.bf16.msra.mxu0 %v3262
      %3279 = vmatprep.subr.bf16.mxu0 0
      %3280 = vmatpush1.bf16.msra.mxu0 0
      %3281 = vmatprep.subr.bf16.mxu0 0
      %3282 = vmatpush1.bf16.msra.mxu0 0
      %3283 = vmatprep.subr.bf16.mxu0 0
      %3284 = vmatpush1.bf16.msra.mxu0 0
      %3285 = vmatprep.subr.bf16.mxu0 0
      %3286 = vmatpush1.bf16.msra.mxu0 0
      %3287 = vmatprep.subr.bf16.mxu0 0
      %3288 = vmatpush1.bf16.msra.mxu0 0
      %3289 = vmatprep.subr.bf16.mxu0 0
      %3290 = vmatpush1.bf16.msra.mxu0 0
      %3291 = vmatprep.subr.bf16.mxu0 0
      %3292 = vmatpush1.bf16.msra.mxu0 0
      %3293 = vmatprep.subr.bf16.mxu0 0
      %3294 = vmatpush1.bf16.msra.mxu0 0
      %3295 = vmatprep.subr.bf16.mxu0 0
      %3296 = vmatpush1.bf16.msra.mxu0 0
      %3297 = vmatprep.subr.bf16.mxu0 0
      %3298 = vmatpush1.bf16.msra.mxu0 0
      %3299 = vmatprep.subr.bf16.mxu0 0
      %3300 = vmatpush1.bf16.msra.mxu0 0
      %3301 = vmatprep.subr.bf16.mxu0 0
      %3302 = vmatpush1.bf16.msra.mxu0 0
      %3303 = vmatprep.mubr.bf16.mxu0 0
      %3304 = vmatmul.mubr.bf16.gmra.mrb[0].mxu0 %v3269
      %v3305 = vpop.f32.mrb[0].mxu0
      %v3306 = vadd.f32 %v3241, %v3305
      %v3307 = vpop.f32.mrb[0].mxu0
      %v3308 = vpop.f32.mrb[0].mxu0
      %v3309 = vpop.f32.mrb[0].mxu0
      %3310 = vdwg.mxu0
      %v3311 = vpack.c.bf16 %v3306, %v3306
      %3312 = vst [vmem:[%s276] sm:$0xf] %v3311
      %p3313 = scmp.lt.s32.totalorder %s18, 3
      %s3314 = scalar_select %p3313, %s18, 3
      %s3315 = smul.addr %s3314, 4
      %s3316 = scalar_lea.vmem %s7, %s3315
      // Predicated region
      $region49: #{forward.2} parent=47 // pred_check
        %p3317 = pneg %p188
      $region50: #{forward.2} parent=47 // pred_check_branch
        %3319 = sbr.rel (%p3317) target = $region52
      $region51: #{forward.2} parent=47 // pred_region
        _
      $region52: #{forward.2} parent=47 // pred_fallthru
        _
    $region48: #{forward.2} parent=5 // pred_fallthru
      _
    %p3320 = scmp.le.s32.totalorder 2, %s13
    // Predicated region
    $region53: #{forward.2} parent=5 // pred_check
      %p3321 = pneg %p3320
    $region54: #{forward.2} parent=5 // pred_check_branch
      %3323 = sbr.rel (%p3321) target = $region56
    $region55: #{forward.2} parent=5 // pred_region
      %s3324 = ssub.s32 %s13, 2
      // Predicated region
      $region57: #{forward.2} parent=55 // pred_check
        %p3325 = pneg %p194
      $region58: #{forward.2} parent=55 // pred_check_branch
        %3327 = sbr.rel (%p3325) target = $region60
      $region59: #{forward.2} parent=55 // pred_region
        %p3328 = scmp.lt.s32.totalorder %s19, 3
        %s3329 = scalar_select %p3328, %s19, 3
        %s3330 = smul.addr %s3329, 4
        %s3331 = scalar_lea.vmem %s7, %s3330
      $region60: #{forward.2} parent=55 // pred_fallthru
        _
    $region56: #{forward.2} parent=5 // pred_fallthru
      _
  $region6: #{forward.2} parent=0 // loop_footer
    %s17 = sadd.s32 1, %s13
  $region7: #{forward.2} parent=0 // loop_footer_branch
    %12 = sbr.rel target = $region3
  $region8: #{forward.2} parent=0 // loop_exit
    _

</llo_original>
